<compile_context>
chip_gen: v7x
topology: tpu7x:2x2x1
jax: 0.10.0
libtpu: 0.0.40
codegen_flags: <defaults>
</compile_context>

<pallas_src>
import functools

import jax
import jax.numpy as jnp
from jax import lax
from jax.experimental import pallas as pl
from jax.experimental.pallas import tpu as pltpu


def _round_up(x, m):
    return (x + m - 1) // m * m


# ---------------------------------------------------------------------------
# im2col (XLA wrapper side): kh*kw strided slices + stack, <= 0.5 MB / image.
# ---------------------------------------------------------------------------
def _im2col(x, kh, kw, stride, pad, c_real):
    """x: (N, H, W, C_arr) NHWC; only channels [0, c_real) are real.
    Returns patches (N, OH*OW, kh*kw*c_real) (tap-major, channel-minor), OH, OW."""
    n, h, w, _ = x.shape
    x = x[..., :c_real]
    oh = (h + 2 * pad - kh) // stride + 1
    ow = (w + 2 * pad - kw) // stride + 1
    xp = jnp.pad(x, ((0, 0), (pad, pad), (pad, pad), (0, 0)))
    taps = []
    for i in range(kh):
        for j in range(kw):
            taps.append(lax.slice(
                xp,
                (0, i, j, 0),
                (n, i + stride * (oh - 1) + 1, j + stride * (ow - 1) + 1, c_real),
                (1, stride, stride, 1)))
    patches = jnp.stack(taps, axis=3)                    # (N, OH, OW, taps, C)
    return patches.reshape(n, oh * ow, kh * kw * c_real), oh, ow


# ---------------------------------------------------------------------------
# Kernel 1: per-image im2col matmul + bias + ReLU (conv1 and conv2)
# ---------------------------------------------------------------------------
def _mm_bias_relu_kernel(x_ref, w_ref, b_ref, o_ref):
    """x_ref: (1, Mp, Kp) bf16 patches; w_ref: (Kp, Np) bf16; b_ref: (1, Np) f32;
       o_ref: (1, Mp, Np) bf16 = relu(x @ w + b) (f32 accumulation)."""
    acc = jnp.dot(x_ref[0], w_ref[...], preferred_element_type=jnp.float32)
    o_ref[0] = jnp.maximum(acc + b_ref[...], 0.0).astype(o_ref.dtype)


def conv2d_relu(x, w4d, bias, *, stride, pad):
    """Strided conv + bias + ReLU as one im2col MXU matmul per image.
    x: (N, H, W, C_arr) with real channels [0, Cin).
    Returns (N, OH, OW, OCp) bf16 with channels >= OC zeroed."""
    kh, kw, cin, oc = w4d.shape
    n = x.shape[0]
    patches, oh, ow = _im2col(x, kh, kw, stride, pad, cin)
    m, k = patches.shape[1], patches.shape[2]
    mp, kp = _round_up(m, 8), _round_up(k, 128)
    ocp = _round_up(oc, 128)
    patches = jnp.pad(patches, ((0, 0), (0, mp - m), (0, kp - k))).astype(jnp.bfloat16)
    w_mat = jnp.pad(w4d.reshape(k, oc),
                    ((0, kp - k), (0, ocp - oc))).astype(jnp.bfloat16)
    b_mat = jnp.pad(bias.reshape(1, -1), ((0, 0), (0, ocp - oc))).astype(jnp.float32)

    out = pl.pallas_call(
        _mm_bias_relu_kernel,
        grid=(n,),
        out_shape=jax.ShapeDtypeStruct((n, mp, ocp), jnp.bfloat16),
        in_specs=[
            pl.BlockSpec((1, mp, kp), lambda b: (b, 0, 0)),
            pl.BlockSpec((kp, ocp), lambda b: (0, 0)),
            pl.BlockSpec((1, ocp), lambda b: (0, 0)),
        ],
        out_specs=pl.BlockSpec((1, mp, ocp), lambda b: (b, 0, 0)),
        compiler_params=pltpu.CompilerParams(
            dimension_semantics=("parallel",)),         # one image per TC step
    )(patches, w_mat, b_mat)
    # rows >= m are junk (relu(bias)); drop before the spatial reshape.
    return out[:, :m, :].reshape(n, oh, ow, ocp)


# ---------------------------------------------------------------------------
# Kernel 2: per-image conv3(3x3) + conv4(1x1,pad=1) + conv5(1x1,pad=1)
#           + global-avg-pool + softmax, gridded over the batch
# ---------------------------------------------------------------------------
def _tail_kernel(p3_ref, w3_ref, b3_ref, w4_ref, b4_ref, w5_ref, b5_ref, o_ref,
                 *, m_real, n_ring1, n_ring2, inv_total, c_valid):
    """p3_ref: (1, Mp, K3p) bf16 conv3 im2col patches for one image.
    The 1x1 convs' spatial padding rings are handled analytically:
      ring1 = relu(conv5(relu(conv4(0))))  (conv4's padding, n_ring1 pixels)
      ring2 = relu(conv5's own zero padding) = relu(b5)  (n_ring2 pixels)."""
    w4 = w4_ref[...]
    w5 = w5_ref[...]
    b4 = b4_ref[...]
    b5 = b5_ref[...]
    y3 = jnp.maximum(
        jnp.dot(p3_ref[0], w3_ref[...], preferred_element_type=jnp.float32)
        + b3_ref[...], 0.0)                                        # (Mp, C4p)
    y4 = jnp.maximum(
        jnp.dot(y3.astype(jnp.bfloat16), w4,
                preferred_element_type=jnp.float32) + b4, 0.0)     # (Mp, C4p)
    z5 = jnp.maximum(
        jnp.dot(y4.astype(jnp.bfloat16), w5,
                preferred_element_type=jnp.float32) + b5, 0.0)     # (Mp, C5p)
    # Mask the Mp - m_real zero-padded patch rows out of the pooling sum.
    row = lax.broadcasted_iota(jnp.int32, (z5.shape[0], 1), 0)
    inner = jnp.sum(jnp.where(row < m_real, z5, 0.0), axis=0, keepdims=True)
    ring1 = jnp.maximum(
        jnp.dot(jnp.maximum(b4, 0.0).astype(jnp.bfloat16), w5,
                preferred_element_type=jnp.float32) + b5, 0.0)     # (1, C5p)
    ring2 = jnp.maximum(b5, 0.0)                                   # (1, C5p)
    mean = (inner + n_ring1 * ring1 + n_ring2 * ring2) * inv_total
    col = lax.broadcasted_iota(jnp.int32, mean.shape, 1)
    cmask = col < c_valid                                          # real classes
    logits = jnp.where(cmask, mean, -1e30)
    mx = jnp.max(logits, axis=-1, keepdims=True)
    e = jnp.where(cmask, jnp.exp(logits - mx), 0.0)
    ssum = jnp.sum(e, axis=-1, keepdims=True)
    probs = e * pl.reciprocal(ssum, approx=False)                  # (1, C5p)
    # Replicate over 8 sublanes so the output block stays (8, 128)-aligned.
    o_ref[0] = jnp.broadcast_to(probs, (o_ref.shape[1], o_ref.shape[2]))


def tail_conv345_gap_softmax(y2, w3, b3, w4, b4, w5, b5):
    """y2: (N, H, W, C_arr) bf16 conv2 output (real channels [0, w3.shape[2]))."""
    n = y2.shape[0]
    kh, kw, c3in, oc3 = w3.shape
    oc5 = w5.shape[3]
    patches, oh, ow = _im2col(y2, kh, kw, 1, 1, c3in)
    m, k = patches.shape[1], patches.shape[2]
    mp, kp = _round_up(m, 8), _round_up(k, 128)
    c4p = _round_up(oc3, 128)
    c5p = _round_up(oc5, 128)
    patches = jnp.pad(patches, ((0, 0), (0, mp - m), (0, kp - k))).astype(jnp.bfloat16)
    w3m = jnp.pad(w3.reshape(k, oc3),
                  ((0, kp - k), (0, c4p - oc3))).astype(jnp.bfloat16)
    b3m = jnp.pad(b3.reshape(1, -1), ((0, 0), (0, c4p - oc3))).astype(jnp.float32)
    w4m = jnp.pad(w4.reshape(w4.shape[2], w4.shape[3]),
                  ((0, c4p - w4.shape[2]), (0, c4p - w4.shape[3]))).astype(jnp.bfloat16)
    b4m = jnp.pad(b4.reshape(1, -1),
                  ((0, 0), (0, c4p - w4.shape[3]))).astype(jnp.float32)
    w5m = jnp.pad(w5.reshape(w5.shape[2], oc5),
                  ((0, c4p - w5.shape[2]), (0, c5p - oc5))).astype(jnp.bfloat16)
    b5m = jnp.pad(b5.reshape(1, -1), ((0, 0), (0, c5p - oc5))).astype(jnp.float32)

    # 1x1 convs with padding=1 each grow the spatial extent by 2 per side pair.
    h4, w4sp = oh + 2, ow + 2
    h5, w5sp = h4 + 2, w4sp + 2
    n_ring1 = float(h4 * w4sp - oh * ow)      # conv4 padding pixels
    n_ring2 = float(h5 * w5sp - h4 * w4sp)    # conv5 padding pixels
    inv_total = 1.0 / float(h5 * w5sp)

    kernel = functools.partial(_tail_kernel, m_real=m, n_ring1=n_ring1,
                               n_ring2=n_ring2, inv_total=inv_total,
                               c_valid=oc5)
    out = pl.pallas_call(
        kernel,
        grid=(n,),
        out_shape=jax.ShapeDtypeStruct((n, 8, c5p), jnp.float32),
        in_specs=[
            pl.BlockSpec((1, mp, kp), lambda b: (b, 0, 0)),
            pl.BlockSpec((kp, c4p), lambda b: (0, 0)),
            pl.BlockSpec((1, c4p), lambda b: (0, 0)),
            pl.BlockSpec((c4p, c4p), lambda b: (0, 0)),
            pl.BlockSpec((1, c4p), lambda b: (0, 0)),
            pl.BlockSpec((c4p, c5p), lambda b: (0, 0)),
            pl.BlockSpec((1, c5p), lambda b: (0, 0)),
        ],
        out_specs=pl.BlockSpec((1, 8, c5p), lambda b: (b, 0, 0)),
        compiler_params=pltpu.CompilerParams(
            dimension_semantics=("parallel",)),
    )(patches, w3m, b3m, w4m, b4m, w5m, b5m)
    return out[:, 0, :oc5]                    # (N, 10): only activation slice


# ---------------------------------------------------------------------------
# Model
# ---------------------------------------------------------------------------
def init_params(key):
    def conv_init(k, kh, kw, cin, cout):
        k1, k2 = jax.random.split(k)
        fan_in = kh * kw * cin
        w = jax.random.normal(k1, (kh, kw, cin, cout), jnp.float32) / jnp.sqrt(
            jnp.float32(fan_in))
        b = 0.01 * jax.random.normal(k2, (cout,), jnp.float32)
        return w, b

    ks = jax.random.split(key, 5)
    return {
        "conv1": conv_init(ks[0], 5, 5, 3, 96),
        "conv2": conv_init(ks[1], 5, 5, 96, 192),
        "conv3": conv_init(ks[2], 3, 3, 192, 192),
        "conv4": conv_init(ks[3], 1, 1, 192, 192),
        "conv5": conv_init(ks[4], 1, 1, 192, 10),
    }


def model_strided_a_forward(params, x_nchw):
    # drop_in / drop: identity in eval mode.
    x = jnp.transpose(x_nchw, (0, 2, 3, 1)).astype(jnp.float32)   # NCHW -> NHWC
    y1 = conv2d_relu(x, *params["conv1"], stride=2, pad=1)        # (N,15,15,128)
    y2 = conv2d_relu(y1, *params["conv2"], stride=2, pad=1)       # (N, 7, 7,256)
    # conv3 + conv4 + conv5 + global-avg-pool + softmax fused in one kernel.
    return tail_conv345_gap_softmax(y2, *params["conv3"],
                                    *params["conv4"], *params["conv5"])


def _reference_forward(params, x_nchw):
    """Pure-JAX (XLA) reference of the PyTorch forward, f32 everywhere."""
    x = jnp.transpose(x_nchw, (0, 2, 3, 1))

    def conv(x, wb, stride, pad):
        w, b = wb
        y = lax.conv_general_dilated(
            x, w, window_strides=(stride, stride),
            padding=((pad, pad), (pad, pad)),
            dimension_numbers=("NHWC", "HWIO", "NHWC"))
        return jax.nn.relu(y + b)

    x = conv(x, params["conv1"], 2, 1)
    x = conv(x, params["conv2"], 2, 1)
    x = conv(x, params["conv3"], 1, 1)
    x = conv(x, params["conv4"], 1, 1)
    x = conv(x, params["conv5"], 1, 1)
    logits = jnp.mean(x, axis=(1, 2))
    return jax.nn.softmax(logits, axis=-1)


if __name__ == "__main__":
    key = jax.random.PRNGKey(0)
    pkey, xkey = jax.random.split(key)
    params = init_params(pkey)
    x = jax.random.normal(xkey, (2, 3, 32, 32), jnp.float32)  # NCHW like PyTorch

    fwd = jax.jit(functools.partial(model_strided_a_forward, params))
    out = jax.block_until_ready(fwd(x))

    assert out.shape == (2, 10), out.shape
    assert bool(jnp.all(jnp.isfinite(out)))
    assert bool(jnp.allclose(jnp.sum(out, axis=1), 1.0, atol=1e-5))

    # bf16 MXU inputs vs. f32 reference => loose post-softmax tolerance.
    ref = jax.block_until_ready(
        jax.jit(functools.partial(_reference_forward, params))(x))
    assert bool(jnp.max(jnp.abs(out - ref)) < 2e-2), jnp.max(jnp.abs(out - ref))

    print("KERNEL_OK")
</pallas_src>

<mosaic_0001>
module attributes {stable_mosaic.version = 11 : i64} {
  func.func @_mm_bias_relu_kernel(%arg0: i32, %arg1: memref<1x232x128xbf16, #tpu.memory_space<vmem>>, %arg2: memref<128x128xbf16, #tpu.memory_space<vmem>>, %arg3: memref<1x128xf32, #tpu.memory_space<vmem>>, %arg4: memref<1x232x128xbf16, #tpu.memory_space<vmem>>) attributes {dimension_semantics = [#tpu.dimension_semantics<parallel>], iteration_bounds = array<i64: 2>, scalar_prefetch = 0 : i64, scratch_operands = 0 : i64, tpu.core_type = #tpu.core_type<tc>, window_params = [{transform_indices = @transform_0, window_bounds = array<i64: 1, 232, 128>}, {pipeline_mode = #tpu.pipeline_mode<synchronous>, transform_indices = @transform_1, window_bounds = array<i64: 128, 128>}, {pipeline_mode = #tpu.pipeline_mode<synchronous>, transform_indices = @transform_2, window_bounds = array<i64: 1, 128>}, {transform_indices = @transform_3, window_bounds = array<i64: 1, 232, 128>}]} {
    %c0 = arith.constant 0 : index
    %c0_0 = arith.constant 0 : index
    %c0_1 = arith.constant 0 : index
    %0 = vector.load %arg1[%c0, %c0_0, %c0_1] : memref<1x232x128xbf16, #tpu.memory_space<vmem>>, vector<1x232x128xbf16>
    %1 = vector.shape_cast %0 : vector<1x232x128xbf16> to vector<232x128xbf16>
    %c0_2 = arith.constant 0 : index
    %c0_3 = arith.constant 0 : index
    %2 = vector.load %arg2[%c0_2, %c0_3] : memref<128x128xbf16, #tpu.memory_space<vmem>>, vector<128x128xbf16>
    %cst = arith.constant dense<0.000000e+00> : vector<232x128xf32>
    %3 = tpu.matmul %1, %2, %cst {dimension_numbers = #tpu.dot_dimension_numbers<[1], [0], [0], [1], [0, 0, 1, 1], [], []>} : vector<232x128xbf16>, vector<128x128xbf16>, vector<232x128xf32> -> vector<232x128xf32>
    %c0_4 = arith.constant 0 : index
    %c0_5 = arith.constant 0 : index
    %4 = vector.load %arg3[%c0_4, %c0_5] : memref<1x128xf32, #tpu.memory_space<vmem>>, vector<1x128xf32>
    %5 = vector.broadcast %4 : vector<1x128xf32> to vector<232x128xf32>
    %6 = arith.addf %3, %5 : vector<232x128xf32>
    %cst_6 = arith.constant 0.000000e+00 : f32
    %7 = vector.broadcast %cst_6 : f32 to vector<232x128xf32>
    %8 = arith.maximumf %6, %7 : vector<232x128xf32>
    %9 = arith.truncf %8 : vector<232x128xf32> to vector<232x128xbf16>
    %c0_7 = arith.constant 0 : index
    %c0_8 = arith.constant 0 : index
    %c0_9 = arith.constant 0 : index
    %10 = vector.load %arg4[%c0_7, %c0_8, %c0_9] : memref<1x232x128xbf16, #tpu.memory_space<vmem>>, vector<1x232x128xbf16>
    %11 = vector.shape_cast %10 : vector<1x232x128xbf16> to vector<232x128xbf16>
    %12 = vector.shape_cast %9 : vector<232x128xbf16> to vector<1x232x128xbf16>
    tpu.vector_store %arg4[%c0_7, %c0_8, %c0_9], %12 {strides = array<i32>} : memref<1x232x128xbf16, #tpu.memory_space<vmem>>, vector<1x232x128xbf16>,
    return
  }
  func.func @transform_0(%arg0: i32) -> (i32, i32, i32) {
    %c0_i32 = arith.constant 0 : i32
    %c0_i32_0 = arith.constant 0 : i32
    %c0_i32_1 = arith.constant 0 : i32
    return %arg0, %c0_i32, %c0_i32_0 : i32, i32, i32
  }
  func.func @transform_1(%arg0: i32) -> (i32, i32) {
    %c0_i32 = arith.constant 0 : i32
    %c0_i32_0 = arith.constant 0 : i32
    %c0_i32_1 = arith.constant 0 : i32
    return %c0_i32, %c0_i32_0 : i32, i32
  }
  func.func @transform_2(%arg0: i32) -> (i32, i32) {
    %c0_i32 = arith.constant 0 : i32
    %c0_i32_0 = arith.constant 0 : i32
    %c0_i32_1 = arith.constant 0 : i32
    return %c0_i32, %c0_i32_0 : i32, i32
  }
  func.func @transform_3(%arg0: i32) -> (i32, i32, i32) {
    %c0_i32 = arith.constant 0 : i32
    %c0_i32_0 = arith.constant 0 : i32
    %c0_i32_1 = arith.constant 0 : i32
    return %arg0, %c0_i32, %c0_i32_0 : i32, i32, i32
  }
}

module attributes {stable_mosaic.version = 11 : i64} {
  func.func @_mm_bias_relu_kernel(%arg0: i32, %arg1: memref<1x56x2432xbf16, #tpu.memory_space<vmem>>, %arg2: memref<2432x256xbf16, #tpu.memory_space<vmem>>, %arg3: memref<1x256xf32, #tpu.memory_space<vmem>>, %arg4: memref<1x56x256xbf16, #tpu.memory_space<vmem>>) attributes {dimension_semantics = [#tpu.dimension_semantics<parallel>], iteration_bounds = array<i64: 2>, scalar_prefetch = 0 : i64, scratch_operands = 0 : i64, tpu.core_type = #tpu.core_type<tc>, window_params = [{transform_indices = @transform_0, window_bounds = array<i64: 1, 56, 2432>}, {pipeline_mode = #tpu.pipeline_mode<synchronous>, transform_indices = @transform_1, window_bounds = array<i64: 2432, 256>}, {pipeline_mode = #tpu.pipeline_mode<synchronous>, transform_indices = @transform_2, window_bounds = array<i64: 1, 256>}, {transform_indices = @transform_3, window_bounds = array<i64: 1, 56, 256>}]} {
    %c0 = arith.constant 0 : index
    %c0_0 = arith.constant 0 : index
    %c0_1 = arith.constant 0 : index
    %0 = vector.load %arg1[%c0, %c0_0, %c0_1] : memref<1x56x2432xbf16, #tpu.memory_space<vmem>>, vector<1x56x2432xbf16>
    %1 = vector.shape_cast %0 : vector<1x56x2432xbf16> to vector<56x2432xbf16>
    %c0_2 = arith.constant 0 : index
    %c0_3 = arith.constant 0 : index
    %2 = vector.load %arg2[%c0_2, %c0_3] : memref<2432x256xbf16, #tpu.memory_space<vmem>>, vector<2432x256xbf16>
    %cst = arith.constant dense<0.000000e+00> : vector<56x256xf32>
    %3 = tpu.matmul %1, %2, %cst {dimension_numbers = #tpu.dot_dimension_numbers<[1], [0], [0], [1], [0, 0, 1, 1], [], []>} : vector<56x2432xbf16>, vector<2432x256xbf16>, vector<56x256xf32> -> vector<56x256xf32>
    %c0_4 = arith.constant 0 : index
    %c0_5 = arith.constant 0 : index
    %4 = vector.load %arg3[%c0_4, %c0_5] : memref<1x256xf32, #tpu.memory_space<vmem>>, vector<1x256xf32>
    %5 = vector.broadcast %4 : vector<1x256xf32> to vector<56x256xf32>
    %6 = arith.addf %3, %5 : vector<56x256xf32>
    %cst_6 = arith.constant 0.000000e+00 : f32
    %7 = vector.broadcast %cst_6 : f32 to vector<56x256xf32>
    %8 = arith.maximumf %6, %7 : vector<56x256xf32>
    %9 = arith.truncf %8 : vector<56x256xf32> to vector<56x256xbf16>
    %c0_7 = arith.constant 0 : index
    %c0_8 = arith.constant 0 : index
    %c0_9 = arith.constant 0 : index
    %10 = vector.load %arg4[%c0_7, %c0_8, %c0_9] : memref<1x56x256xbf16, #tpu.memory_space<vmem>>, vector<1x56x256xbf16>
    %11 = vector.shape_cast %10 : vector<1x56x256xbf16> to vector<56x256xbf16>
    %12 = vector.shape_cast %9 : vector<56x256xbf16> to vector<1x56x256xbf16>
    tpu.vector_store %arg4[%c0_7, %c0_8, %c0_9], %12 {strides = array<i32>} : memref<1x56x256xbf16, #tpu.memory_space<vmem>>, vector<1x56x256xbf16>,
    return
  }
  func.func @transform_0(%arg0: i32) -> (i32, i32, i32) {
    %c0_i32 = arith.constant 0 : i32
    %c0_i32_0 = arith.constant 0 : i32
    %c0_i32_1 = arith.constant 0 : i32
    return %arg0, %c0_i32, %c0_i32_0 : i32, i32, i32
  }
  func.func @transform_1(%arg0: i32) -> (i32, i32) {
    %c0_i32 = arith.constant 0 : i32
    %c0_i32_0 = arith.constant 0 : i32
    %c0_i32_1 = arith.constant 0 : i32
    return %c0_i32, %c0_i32_0 : i32, i32
  }
  func.func @transform_2(%arg0: i32) -> (i32, i32) {
    %c0_i32 = arith.constant 0 : i32
    %c0_i32_0 = arith.constant 0 : i32
    %c0_i32_1 = arith.constant 0 : i32
    return %c0_i32, %c0_i32_0 : i32, i32
  }
  func.func @transform_3(%arg0: i32) -> (i32, i32, i32) {
    %c0_i32 = arith.constant 0 : i32
    %c0_i32_0 = arith.constant 0 : i32
    %c0_i32_1 = arith.constant 0 : i32
    return %arg0, %c0_i32, %c0_i32_0 : i32, i32, i32
  }
}

module attributes {stable_mosaic.version = 11 : i64} {
  func.func @_tail_kernel(%arg0: i32, %arg1: memref<1x56x1792xbf16, #tpu.memory_space<vmem>>, %arg2: memref<1792x256xbf16, #tpu.memory_space<vmem>>, %arg3: memref<1x256xf32, #tpu.memory_space<vmem>>, %arg4: memref<256x256xbf16, #tpu.memory_space<vmem>>, %arg5: memref<1x256xf32, #tpu.memory_space<vmem>>, %arg6: memref<256x128xbf16, #tpu.memory_space<vmem>>, %arg7: memref<1x128xf32, #tpu.memory_space<vmem>>, %arg8: memref<1x8x128xf32, #tpu.memory_space<vmem>>) attributes {dimension_semantics = [#tpu.dimension_semantics<parallel>], iteration_bounds = array<i64: 2>, scalar_prefetch = 0 : i64, scratch_operands = 0 : i64, tpu.core_type = #tpu.core_type<tc>, window_params = [{transform_indices = @transform_0, window_bounds = array<i64: 1, 56, 1792>}, {pipeline_mode = #tpu.pipeline_mode<synchronous>, transform_indices = @transform_1, window_bounds = array<i64: 1792, 256>}, {pipeline_mode = #tpu.pipeline_mode<synchronous>, transform_indices = @transform_2, window_bounds = array<i64: 1, 256>}, {pipeline_mode = #tpu.pipeline_mode<synchronous>, transform_indices = @transform_3, window_bounds = array<i64: 256, 256>}, {pipeline_mode = #tpu.pipeline_mode<synchronous>, transform_indices = @transform_4, window_bounds = array<i64: 1, 256>}, {pipeline_mode = #tpu.pipeline_mode<synchronous>, transform_indices = @transform_5, window_bounds = array<i64: 256, 128>}, {pipeline_mode = #tpu.pipeline_mode<synchronous>, transform_indices = @transform_6, window_bounds = array<i64: 1, 128>}, {transform_indices = @transform_7, window_bounds = array<i64: 1, 8, 128>}]} {
    %c0 = arith.constant 0 : index
    %c0_0 = arith.constant 0 : index
    %0 = vector.load %arg4[%c0, %c0_0] : memref<256x256xbf16, #tpu.memory_space<vmem>>, vector<256x256xbf16>
    %c0_1 = arith.constant 0 : index
    %c0_2 = arith.constant 0 : index
    %1 = vector.load %arg6[%c0_1, %c0_2] : memref<256x128xbf16, #tpu.memory_space<vmem>>, vector<256x128xbf16>
    %c0_3 = arith.constant 0 : index
    %c0_4 = arith.constant 0 : index
    %2 = vector.load %arg5[%c0_3, %c0_4] : memref<1x256xf32, #tpu.memory_space<vmem>>, vector<1x256xf32>
    %c0_5 = arith.constant 0 : index
    %c0_6 = arith.constant 0 : index
    %3 = vector.load %arg7[%c0_5, %c0_6] : memref<1x128xf32, #tpu.memory_space<vmem>>, vector<1x128xf32>
    %c0_7 = arith.constant 0 : index
    %c0_8 = arith.constant 0 : index
    %c0_9 = arith.constant 0 : index
    %4 = vector.load %arg1[%c0_7, %c0_8, %c0_9] : memref<1x56x1792xbf16, #tpu.memory_space<vmem>>, vector<1x56x1792xbf16>
    %5 = vector.shape_cast %4 : vector<1x56x1792xbf16> to vector<56x1792xbf16>
    %c0_10 = arith.constant 0 : index
    %c0_11 = arith.constant 0 : index
    %6 = vector.load %arg2[%c0_10, %c0_11] : memref<1792x256xbf16, #tpu.memory_space<vmem>>, vector<1792x256xbf16>
    %cst = arith.constant dense<0.000000e+00> : vector<56x256xf32>
    %7 = tpu.matmul %5, %6, %cst {dimension_numbers = #tpu.dot_dimension_numbers<[1], [0], [0], [1], [0, 0, 1, 1], [], []>} : vector<56x1792xbf16>, vector<1792x256xbf16>, vector<56x256xf32> -> vector<56x256xf32>
    %c0_12 = arith.constant 0 : index
    %c0_13 = arith.constant 0 : index
    %8 = vector.load %arg3[%c0_12, %c0_13] : memref<1x256xf32, #tpu.memory_space<vmem>>, vector<1x256xf32>
    %9 = vector.broadcast %8 : vector<1x256xf32> to vector<56x256xf32>
    %10 = arith.addf %7, %9 : vector<56x256xf32>
    %cst_14 = arith.constant 0.000000e+00 : f32
    %11 = vector.broadcast %cst_14 : f32 to vector<56x256xf32>
    %12 = arith.maximumf %10, %11 : vector<56x256xf32>
    %13 = arith.truncf %12 : vector<56x256xf32> to vector<56x256xbf16>
    %cst_15 = arith.constant dense<0.000000e+00> : vector<56x256xf32>
    %14 = tpu.matmul %13, %0, %cst_15 {dimension_numbers = #tpu.dot_dimension_numbers<[1], [0], [0], [1], [0, 0, 1, 1], [], []>} : vector<56x256xbf16>, vector<256x256xbf16>, vector<56x256xf32> -> vector<56x256xf32>
    %15 = vector.broadcast %2 : vector<1x256xf32> to vector<56x256xf32>
    %16 = arith.addf %14, %15 : vector<56x256xf32>
    %cst_16 = arith.constant 0.000000e+00 : f32
    %17 = vector.broadcast %cst_16 : f32 to vector<56x256xf32>
    %18 = arith.maximumf %16, %17 : vector<56x256xf32>
    %19 = arith.truncf %18 : vector<56x256xf32> to vector<56x256xbf16>
    %cst_17 = arith.constant dense<0.000000e+00> : vector<56x128xf32>
    %20 = tpu.matmul %19, %1, %cst_17 {dimension_numbers = #tpu.dot_dimension_numbers<[1], [0], [0], [1], [0, 0, 1, 1], [], []>} : vector<56x256xbf16>, vector<256x128xbf16>, vector<56x128xf32> -> vector<56x128xf32>
    %21 = vector.broadcast %3 : vector<1x128xf32> to vector<56x128xf32>
    %22 = arith.addf %20, %21 : vector<56x128xf32>
    %cst_18 = arith.constant 0.000000e+00 : f32
    %23 = vector.broadcast %cst_18 : f32 to vector<56x128xf32>
    %24 = arith.maximumf %22, %23 : vector<56x128xf32>
    %25 = tpu.iota {dimensions = array<i32: 0>} : vector<56x1xi32>
    %c49_i32 = arith.constant 49 : i32
    %26 = vector.broadcast %c49_i32 : i32 to vector<56x1xi32>
    %27 = arith.cmpi slt, %25, %26 : vector<56x1xi32>
    %cst_19 = arith.constant 0.000000e+00 : f32
    %28 = vector.shape_cast %27 : vector<56x1xi1> to vector<56x1xi1>
    %29 = vector.broadcast %28 : vector<56x1xi1> to vector<56x128xi1>
    %30 = vector.broadcast %cst_19 : f32 to vector<56x128xf32>
    %31 = arith.select %29, %24, %30 : vector<56x128xi1>, vector<56x128xf32>
    %cst_20 = arith.constant dense<0.000000e+00> : vector<128xf32>
    %32 = vector.multi_reduction <add>, %31, %cst_20 [0] : vector<56x128xf32> to vector<128xf32>
    %33 = vector.shape_cast %32 : vector<128xf32> to vector<1x128xf32>
    %cst_21 = arith.constant 0.000000e+00 : f32
    %34 = vector.broadcast %cst_21 : f32 to vector<1x256xf32>
    %35 = arith.maximumf %2, %34 : vector<1x256xf32>
    %36 = arith.truncf %35 : vector<1x256xf32> to vector<1x256xbf16>
    %cst_22 = arith.constant dense<0.000000e+00> : vector<1x128xf32>
    %37 = tpu.matmul %36, %1, %cst_22 {dimension_numbers = #tpu.dot_dimension_numbers<[1], [0], [0], [1], [0, 0, 1, 1], [], []>} : vector<1x256xbf16>, vector<256x128xbf16>, vector<1x128xf32> -> vector<1x128xf32>
    %38 = arith.addf %37, %3 : vector<1x128xf32>
    %cst_23 = arith.constant 0.000000e+00 : f32
    %39 = vector.broadcast %cst_23 : f32 to vector<1x128xf32>
    %40 = arith.maximumf %38, %39 : vector<1x128xf32>
    %cst_24 = arith.constant 0.000000e+00 : f32
    %41 = vector.broadcast %cst_24 : f32 to vector<1x128xf32>
    %42 = arith.maximumf %3, %41 : vector<1x128xf32>
    %cst_25 = arith.constant 3.200000e+01 : f32
    %43 = vector.broadcast %cst_25 : f32 to vector<1x128xf32>
    %44 = arith.mulf %43, %40 : vector<1x128xf32>
    %45 = arith.addf %33, %44 : vector<1x128xf32>
    %cst_26 = arith.constant 4.000000e+01 : f32
    %46 = vector.broadcast %cst_26 : f32 to vector<1x128xf32>
    %47 = arith.mulf %46, %42 : vector<1x128xf32>
    %48 = arith.addf %45, %47 : vector<1x128xf32>
    %cst_27 = arith.constant 0.00826446246 : f32
    %49 = vector.broadcast %cst_27 : f32 to vector<1x128xf32>
    %50 = arith.mulf %48, %49 : vector<1x128xf32>
    %51 = tpu.iota {dimensions = array<i32: 1>} : vector<1x128xi32>
    %c10_i32 = arith.constant 10 : i32
    %52 = vector.broadcast %c10_i32 : i32 to vector<1x128xi32>
    %53 = arith.cmpi slt, %51, %52 : vector<1x128xi32>
    %cst_28 = arith.constant -1.000000e+30 : f32
    %54 = vector.broadcast %cst_28 : f32 to vector<1x128xf32>
    %55 = arith.select %53, %50, %54 : vector<1x128xi1>, vector<1x128xf32>
    %cst_29 = arith.constant dense<0xFF800000> : vector<1xf32>
    %56 = vector.multi_reduction <maximumf>, %55, %cst_29 [1] : vector<1x128xf32> to vector<1xf32>
    %57 = vector.shape_cast %56 : vector<1xf32> to vector<1x1xf32>
    %58 = vector.broadcast %57 : vector<1x1xf32> to vector<1x128xf32>
    %59 = arith.subf %55, %58 : vector<1x128xf32>
    %60 = math.exp %59 : vector<1x128xf32>
    %cst_30 = arith.constant 0.000000e+00 : f32
    %61 = vector.broadcast %cst_30 : f32 to vector<1x128xf32>
    %62 = arith.select %53, %60, %61 : vector<1x128xi1>, vector<1x128xf32>
    %cst_31 = arith.constant dense<0.000000e+00> : vector<1xf32>
    %63 = vector.multi_reduction <add>, %62, %cst_31 [1] : vector<1x128xf32> to vector<1xf32>
    %64 = vector.shape_cast %63 : vector<1xf32> to vector<1x1xf32>
    %65 = tpu.reciprocal %64 : vector<1x1xf32> -> vector<1x1xf32>
    %66 = vector.broadcast %65 : vector<1x1xf32> to vector<1x128xf32>
    %67 = arith.mulf %62, %66 : vector<1x128xf32>
    %68 = vector.shape_cast %67 : vector<1x128xf32> to vector<1x128xf32>
    %69 = vector.broadcast %68 : vector<1x128xf32> to vector<8x128xf32>
    %c0_32 = arith.constant 0 : index
    %c0_33 = arith.constant 0 : index
    %c0_34 = arith.constant 0 : index
    %70 = vector.load %arg8[%c0_32, %c0_33, %c0_34] : memref<1x8x128xf32, #tpu.memory_space<vmem>>, vector<1x8x128xf32>
    %71 = vector.shape_cast %70 : vector<1x8x128xf32> to vector<8x128xf32>
    %72 = vector.shape_cast %69 : vector<8x128xf32> to vector<1x8x128xf32>
    tpu.vector_store %arg8[%c0_32, %c0_33, %c0_34], %72 {strides = array<i32>} : memref<1x8x128xf32, #tpu.memory_space<vmem>>, vector<1x8x128xf32>,
    return
  }
  func.func @transform_0(%arg0: i32) -> (i32, i32, i32) {
    %c0_i32 = arith.constant 0 : i32
    %c0_i32_0 = arith.constant 0 : i32
    %c0_i32_1 = arith.constant 0 : i32
    return %arg0, %c0_i32, %c0_i32_0 : i32, i32, i32
  }
  func.func @transform_1(%arg0: i32) -> (i32, i32) {
    %c0_i32 = arith.constant 0 : i32
    %c0_i32_0 = arith.constant 0 : i32
    %c0_i32_1 = arith.constant 0 : i32
    return %c0_i32, %c0_i32_0 : i32, i32
  }
  func.func @transform_2(%arg0: i32) -> (i32, i32) {
    %c0_i32 = arith.constant 0 : i32
    %c0_i32_0 = arith.constant 0 : i32
    %c0_i32_1 = arith.constant 0 : i32
    return %c0_i32, %c0_i32_0 : i32, i32
  }
  func.func @transform_3(%arg0: i32) -> (i32, i32) {
    %c0_i32 = arith.constant 0 : i32
    %c0_i32_0 = arith.constant 0 : i32
    %c0_i32_1 = arith.constant 0 : i32
    return %c0_i32, %c0_i32_0 : i32, i32
  }
  func.func @transform_4(%arg0: i32) -> (i32, i32) {
    %c0_i32 = arith.constant 0 : i32
    %c0_i32_0 = arith.constant 0 : i32
    %c0_i32_1 = arith.constant 0 : i32
    return %c0_i32, %c0_i32_0 : i32, i32
  }
  func.func @transform_5(%arg0: i32) -> (i32, i32) {
    %c0_i32 = arith.constant 0 : i32
    %c0_i32_0 = arith.constant 0 : i32
    %c0_i32_1 = arith.constant 0 : i32
    return %c0_i32, %c0_i32_0 : i32, i32
  }
  func.func @transform_6(%arg0: i32) -> (i32, i32) {
    %c0_i32 = arith.constant 0 : i32
    %c0_i32_0 = arith.constant 0 : i32
    %c0_i32_1 = arith.constant 0 : i32
    return %c0_i32, %c0_i32_0 : i32, i32
  }
  func.func @transform_7(%arg0: i32) -> (i32, i32, i32) {
    %c0_i32 = arith.constant 0 : i32
    %c0_i32_0 = arith.constant 0 : i32
    %c0_i32_1 = arith.constant 0 : i32
    return %arg0, %c0_i32, %c0_i32_0 : i32, i32, i32
  }
}

</mosaic_0001>

<llo_original>
// kernel: model_strided_a_forward.3
$region0: #{model_strided_a_forward.3}
  #allocation0 [shape = 'u32[]', space=smem, size = 0x4, offset = 0x4, fixed_abs, tag = 'smem constant byte address 0x4 - core index']
  #allocation1 [shape = 'u32[144,128]{1,0:T(1,128)}', space=vmem, size = 0x12000, scoped, tag = 'internal scratch']
  %s0 = inlined_call_operand.vmem [shape: bf16[2,232,128], index: 0, kind: input, shape index: {}]
  %s1 = inlined_call_operand.vmem [shape: bf16[128,128], index: 1, kind: input, shape index: {}]
  %s2 = inlined_call_operand.vmem [shape: f32[1,128], index: 2, kind: input, shape index: {}]
  %s3 = inlined_call_operand.vmem [shape: bf16[2,232,128], index: 3, kind: output, shape index: {}]
  %s4 = sld [smem:[#allocation0]]
  $region45: #{model_strided_a_forward.3} parent=0
    _
  %s6 = ssub.s32 1, %s4
  %s7 = scalar_select 0, %s6, %s4
  loop: start=0, step=1, limit=4
  $region2: #{model_strided_a_forward.3} parent=0 // loop_pre_header
    _
  $region3: #{model_strided_a_forward.3} parent=0 // loop_header
    %s9 = sphi 0, %s13
    %p10 = scmp.ge.s32.totalorder %s9, 4
    %s19 = sphi 0, %s21
    %s22 = sphi 0, %s19
    %s23 = sphi 0, %s22
    %s39 = sphi 0, %s23
    %s43 = sphi 0, %s43
    %s45 = sphi 0, %s43
    %s46 = sphi 0, %s45
    %s60 = sphi 0, %s46
    %s64 = sphi 0, %s64
    %s66 = sphi 0, %s64
    %s67 = sphi 0, %s66
    %s81 = sphi 0, %s67
    %s87 = sphi 0, %s89
    %s90 = sphi 0, %s87
    %s91 = sphi 0, %s90
    %s107 = sphi 0, %s91
  $region4: #{model_strided_a_forward.3} parent=0 // loop_header_branch
    %12 = sbr.rel (%p10) target = $region8
  $region5: #{model_strided_a_forward.3} parent=0 // loop_body
    %s14 = ssub.s32 %s9, 1
    %s15 = ssub.s32 %s9, 2
    %s16 = sadd.s32 %s9, 1
    %s17 = ssub.s32 %s9, %s16
    %p18 = scmp.eq.s32.totalorder %s17, 0
    %s20 = sadd.s32 %s19, 1
    %s21 = scalar_select %p18, %s19, %s20
    %p24 = pneg %p18
    %p25 = scmp.eq.s32.totalorder %s9, 1
    %p26 = por %p24, %p25
    %p27 = scmp.ne.s32.totalorder %s19, %s22
    %p28 = scmp.eq.s32.totalorder %s9, 0
    %p29 = por %p27, %p28
    %p30 = scmp.ne.s32.totalorder %s19, %s22
    %p31 = scmp.eq.s32.totalorder %s14, 1
    %p32 = por %p30, %p31
    %p33 = scmp.ne.s32.totalorder %s22, %s23
    %p34 = scmp.eq.s32.totalorder %s14, 0
    %p35 = por %p33, %p34
    %p36 = scmp.ne.s32.totalorder %s22, %s23
    %p37 = scmp.eq.s32.totalorder %s15, 1
    %p38 = por %p36, %p37
    %p40 = scmp.ne.s32.totalorder %s23, %s39
    %p41 = scmp.eq.s32.totalorder %s15, 0
    %p42 = por %p40, %p41
    %s44 = sadd.s32 %s43, 1
    %p47 = scmp.eq.s32.totalorder %s9, 1
    %p48 = scmp.ne.s32.totalorder %s43, %s45
    %p49 = scmp.eq.s32.totalorder %s9, 0
    %p50 = por %p48, %p49
    %p51 = scmp.ne.s32.totalorder %s43, %s45
    %p52 = scmp.eq.s32.totalorder %s14, 1
    %p53 = por %p51, %p52
    %p54 = scmp.ne.s32.totalorder %s45, %s46
    %p55 = scmp.eq.s32.totalorder %s14, 0
    %p56 = por %p54, %p55
    %p57 = scmp.ne.s32.totalorder %s45, %s46
    %p58 = scmp.eq.s32.totalorder %s15, 1
    %p59 = por %p57, %p58
    %p61 = scmp.ne.s32.totalorder %s46, %s60
    %p62 = scmp.eq.s32.totalorder %s15, 0
    %p63 = por %p61, %p62
    %s65 = sadd.s32 %s64, 1
    %p68 = scmp.eq.s32.totalorder %s9, 1
    %p69 = scmp.ne.s32.totalorder %s64, %s66
    %p70 = scmp.eq.s32.totalorder %s9, 0
    %p71 = por %p69, %p70
    %p72 = scmp.ne.s32.totalorder %s64, %s66
    %p73 = scmp.eq.s32.totalorder %s14, 1
    %p74 = por %p72, %p73
    %p75 = scmp.ne.s32.totalorder %s66, %s67
    %p76 = scmp.eq.s32.totalorder %s14, 0
    %p77 = por %p75, %p76
    %p78 = scmp.ne.s32.totalorder %s66, %s67
    %p79 = scmp.eq.s32.totalorder %s15, 1
    %p80 = por %p78, %p79
    %p82 = scmp.ne.s32.totalorder %s67, %s81
    %p83 = scmp.eq.s32.totalorder %s15, 0
    %p84 = por %p82, %p83
    %s85 = ssub.s32 %s9, %s16
    %p86 = scmp.eq.s32.totalorder %s85, 0
    %s88 = sadd.s32 %s87, 1
    %s89 = scalar_select %p86, %s87, %s88
    %p92 = pneg %p86
    %p93 = scmp.eq.s32.totalorder %s9, 1
    %p94 = por %p92, %p93
    %p95 = scmp.ne.s32.totalorder %s87, %s90
    %p96 = scmp.eq.s32.totalorder %s9, 0
    %p97 = por %p95, %p96
    %p98 = scmp.ne.s32.totalorder %s87, %s90
    %p99 = scmp.eq.s32.totalorder %s14, 1
    %p100 = por %p98, %p99
    %p101 = scmp.ne.s32.totalorder %s90, %s91
    %p102 = scmp.eq.s32.totalorder %s14, 0
    %p103 = por %p101, %p102
    %p104 = scmp.ne.s32.totalorder %s90, %s91
    %p105 = scmp.eq.s32.totalorder %s15, 1
    %p106 = por %p104, %p105
    %p108 = scmp.ne.s32.totalorder %s91, %s107
    %p109 = scmp.eq.s32.totalorder %s15, 0
    %p110 = por %p108, %p109
    %p111 = scmp.le.s32.totalorder 1, %s9
    %p112 = scmp.lt.s32.totalorder %s9, 3
    %p113 = pnand %p111, %p112
    %p114 = pneg %p113
    // Predicated region
    $region9: #{model_strided_a_forward.3} parent=5 // pred_check
      _
    $region10: #{model_strided_a_forward.3} parent=5 // pred_check_branch
      %116 = sbr.rel (%p113) target = $region12
    $region11: #{model_strided_a_forward.3} parent=5 // pred_region
      %s117 = ssub.s32 %s9, 1
      // Predicated region
      $region13: #{model_strided_a_forward.3} parent=11 // pred_check
        %p118 = pneg %p56
      $region14: #{model_strided_a_forward.3} parent=11 // pred_check_branch
        %120 = sbr.rel (%p118) target = $region16
      $region15: #{model_strided_a_forward.3} parent=11 // pred_region
        _
      $region16: #{model_strided_a_forward.3} parent=11 // pred_fallthru
        _
      // Predicated region
      $region17: #{model_strided_a_forward.3} parent=11 // pred_check
        %p121 = pneg %p77
      $region18: #{model_strided_a_forward.3} parent=11 // pred_check_branch
        %123 = sbr.rel (%p121) target = $region20
      $region19: #{model_strided_a_forward.3} parent=11 // pred_region
        _
      $region20: #{model_strided_a_forward.3} parent=11 // pred_fallthru
        _
    $region12: #{model_strided_a_forward.3} parent=5 // pred_fallthru
      _
    %p124 = scmp.lt.s32.totalorder %s9, 2
    // Predicated region
    $region21: #{model_strided_a_forward.3} parent=5 // pred_check
      %p125 = pneg %p124
    $region22: #{model_strided_a_forward.3} parent=5 // pred_check_branch
      %127 = sbr.rel (%p125) target = $region24
    $region23: #{model_strided_a_forward.3} parent=5 // pred_region
      // Predicated region
      $region25: #{model_strided_a_forward.3} parent=23 // pred_check
        %p128 = pneg %p29
      $region26: #{model_strided_a_forward.3} parent=23 // pred_check_branch
        %130 = sbr.rel (%p128) target = $region28
      $region27: #{model_strided_a_forward.3} parent=23 // pred_region
        %p131 = scmp.lt.s32.totalorder %s9, 1
        %s132 = scalar_select %p131, %s9, 1
        %s133 = smul.addr %s132, 29
        %s134 = smul.addr %s133, 4
        %s135 = scalar_lea.vmem %s0, %s134
      $region28: #{model_strided_a_forward.3} parent=23 // pred_fallthru
        _
    $region24: #{model_strided_a_forward.3} parent=5 // pred_fallthru
      _
    %p136 = scmp.le.s32.totalorder 1, %s9
    %p137 = scmp.lt.s32.totalorder %s9, 3
    %p138 = pnand %p136, %p137
    %p139 = pneg %p138
    // Predicated region
    $region29: #{model_strided_a_forward.3} parent=5 // pred_check
      _
    $region30: #{model_strided_a_forward.3} parent=5 // pred_check_branch
      %141 = sbr.rel (%p138) target = $region32
    $region31: #{model_strided_a_forward.3} parent=5 // pred_region
      %s142 = ssub.s32 %s9, 1
      %p143 = scmp.lt.s32.totalorder %s14, 1
      %s144 = scalar_select %p143, %s14, 1
      %s145 = smul.addr %s144, 29
      %s146 = smul.addr %s145, 4
      %s147 = scalar_lea.vmem %s0, %s146
      %p148 = pneg %p35
      %p149 = pneg %p32
      %p150 = pneg %p56
      %p151 = pneg %p53
      %p152 = pneg %p77
      %p153 = pneg %p74
      %p154 = pneg %p103
      %p155 = pneg %p100
      %p156 = scmp.lt.s32.totalorder %s14, 1
      %s157 = scalar_select %p156, %s14, 1
      %s158 = smul.addr %s157, 29
      %s159 = smul.addr %s158, 4
      %s160 = scalar_lea.vmem %s3, %s159
      %p161 = scmp.lt.s32.totalorder %s14, 1
      %s162 = scalar_select %p161, %s14, 1
      %s163 = smul.addr %s162, 29
      %s164 = smul.addr %s163, 4
      %s165 = scalar_lea.vmem %s0, %s164
      %p166 = scmp.lt.s32.totalorder %s14, 1
      %s167 = scalar_select %p166, %s14, 1
      %s168 = smul.addr %s167, 29
      %s169 = smul.addr %s168, 4
      %s170 = scalar_lea.vmem %s3, %s169
      %v172 = vld [vmem:[%s165] sm:$0xf]
      %v173 = vld [vmem:[%s165 + $0x4] sm:$0xf]
      %v174 = vld [vmem:[%s165 + $0x8] sm:$0xf]
      %v175 = vld [vmem:[%s165 + $0xc] sm:$0xf]
      %v176 = vld [vmem:[%s165 + $0x10] sm:$0xf]
      %v177 = vld [vmem:[%s165 + $0x14] sm:$0xf]
      %v178 = vld [vmem:[%s165 + $0x18] sm:$0xf]
      %v179 = vld [vmem:[%s165 + $0x1c] sm:$0xf]
      %v180 = vld [vmem:[%s165 + $0x20] sm:$0xf]
      %v181 = vld [vmem:[%s165 + $0x24] sm:$0xf]
      %v182 = vld [vmem:[%s165 + $0x28] sm:$0xf]
      %v183 = vld [vmem:[%s165 + $0x2c] sm:$0xf]
      %v184 = vld [vmem:[%s165 + $0x30] sm:$0xf]
      %v185 = vld [vmem:[%s165 + $0x34] sm:$0xf]
      %v186 = vld [vmem:[%s165 + $0x38] sm:$0xf]
      %v187 = vld [vmem:[%s165 + $0x3c] sm:$0xf]
      %v188 = vld [vmem:[%s165 + $0x40] sm:$0xf]
      %v189 = vld [vmem:[%s165 + $0x44] sm:$0xf]
      %v190 = vld [vmem:[%s165 + $0x48] sm:$0xf]
      %v191 = vld [vmem:[%s165 + $0x4c] sm:$0xf]
      %v192 = vld [vmem:[%s165 + $0x50] sm:$0xf]
      %v193 = vld [vmem:[%s165 + $0x54] sm:$0xf]
      %v194 = vld [vmem:[%s165 + $0x58] sm:$0xf]
      %v195 = vld [vmem:[%s165 + $0x5c] sm:$0xf]
      %v196 = vld [vmem:[%s165 + $0x60] sm:$0xf]
      %v197 = vld [vmem:[%s165 + $0x64] sm:$0xf]
      %v198 = vld [vmem:[%s165 + $0x68] sm:$0xf]
      %v199 = vld [vmem:[%s165 + $0x6c] sm:$0xf]
      %v200 = vld [vmem:[%s165 + $0x70] sm:$0xf]
      %v201 = vld [vmem:[%s1] sm:$0xf]
      %v202 = vld [vmem:[%s1 + $0x4] sm:$0xf]
      %v203 = vld [vmem:[%s1 + $0x8] sm:$0xf]
      %v204 = vld [vmem:[%s1 + $0xc] sm:$0xf]
      %v205 = vld [vmem:[%s1 + $0x10] sm:$0xf]
      %v206 = vld [vmem:[%s1 + $0x14] sm:$0xf]
      %v207 = vld [vmem:[%s1 + $0x18] sm:$0xf]
      %v208 = vld [vmem:[%s1 + $0x1c] sm:$0xf]
      %v209 = vld [vmem:[%s1 + $0x20] sm:$0xf]
      %v210 = vld [vmem:[%s1 + $0x24] sm:$0xf]
      %v211 = vld [vmem:[%s1 + $0x28] sm:$0xf]
      %v212 = vld [vmem:[%s1 + $0x2c] sm:$0xf]
      %v213 = vld [vmem:[%s1 + $0x30] sm:$0xf]
      %v214 = vld [vmem:[%s1 + $0x34] sm:$0xf]
      %v215 = vld [vmem:[%s1 + $0x38] sm:$0xf]
      %v216 = vld [vmem:[%s1 + $0x3c] sm:$0xf]
      %v217 = vld [vmem:[%s2] sm:$0x1]
      %v219 = vlaneseq
      %v220 = vshrl.u32 %v219, 7
      %v221 = vsub.s32 0, %v220
      %v222 = vrot.slane %v217, %v221
      %v253 = vunpack.c.l.b16 %v172
      %v254 = vunpack.c.l.b16 %v173
      %v255 = vunpack.c.l.b16 %v174
      %v256 = vunpack.c.l.b16 %v175
      %v257 = vunpack.c.l.b16 %v176
      %v258 = vunpack.c.l.b16 %v177
      %v259 = vunpack.c.l.b16 %v178
      %v260 = vunpack.c.l.b16 %v179
      %v261 = vunpack.c.l.b16 %v180
      %v262 = vunpack.c.l.b16 %v181
      %v263 = vunpack.c.l.b16 %v182
      %v264 = vunpack.c.l.b16 %v183
      %v265 = vunpack.c.l.b16 %v184
      %v266 = vunpack.c.l.b16 %v185
      %v267 = vunpack.c.l.b16 %v186
      %v268 = vunpack.c.l.b16 %v187
      %v269 = vunpack.c.l.b16 %v188
      %v270 = vunpack.c.l.b16 %v189
      %v271 = vunpack.c.l.b16 %v190
      %v272 = vunpack.c.l.b16 %v191
      %v273 = vunpack.c.l.b16 %v192
      %v274 = vunpack.c.l.b16 %v193
      %v275 = vunpack.c.l.b16 %v194
      %v276 = vunpack.c.l.b16 %v195
      %v277 = vunpack.c.l.b16 %v196
      %v278 = vunpack.c.l.b16 %v197
      %v279 = vunpack.c.l.b16 %v198
      %v280 = vunpack.c.l.b16 %v199
      %v281 = vunpack.c.l.b16 %v200
      %v282 = vpack.c.b16 %v254, %v253
      %v283 = vpack.c.b16 %v256, %v255
      %v284 = vpack.c.b16 %v258, %v257
      %v285 = vpack.c.b16 %v260, %v259
      %v286 = vpack.c.b16 %v262, %v261
      %v287 = vpack.c.b16 %v264, %v263
      %v288 = vpack.c.b16 %v266, %v265
      %v289 = vpack.c.b16 %v268, %v267
      %v290 = vpack.c.b16 %v270, %v269
      %v291 = vpack.c.b16 %v272, %v271
      %v292 = vpack.c.b16 %v274, %v273
      %v293 = vpack.c.b16 %v276, %v275
      %v294 = vpack.c.b16 %v278, %v277
      %v295 = vpack.c.b16 %v280, %v279
      %v296 = vpack.c.b16 %v281, %v281
      %v328 = vunpack.c.l.b16 %v201
      %v329 = vunpack.c.l.b16 %v202
      %v330 = vunpack.c.l.b16 %v203
      %v331 = vunpack.c.l.b16 %v204
      %v332 = vunpack.c.l.b16 %v205
      %v333 = vunpack.c.l.b16 %v206
      %v334 = vunpack.c.l.b16 %v207
      %v335 = vunpack.c.l.b16 %v208
      %v336 = vunpack.c.l.b16 %v209
      %v337 = vunpack.c.l.b16 %v210
      %v338 = vunpack.c.l.b16 %v211
      %v339 = vunpack.c.l.b16 %v212
      %v340 = vunpack.c.l.b16 %v213
      %v341 = vunpack.c.l.b16 %v214
      %v342 = vunpack.c.l.b16 %v215
      %v343 = vunpack.c.l.b16 %v216
      %v344 = vpack.c.b16 %v329, %v328
      %v345 = vpack.c.b16 %v331, %v330
      %v346 = vpack.c.b16 %v333, %v332
      %v347 = vpack.c.b16 %v335, %v334
      %v348 = vpack.c.b16 %v337, %v336
      %v349 = vpack.c.b16 %v339, %v338
      %v350 = vpack.c.b16 %v341, %v340
      %v351 = vpack.c.b16 %v343, %v342
      %360 = vmatprep.subr.bf16.mxu0 0
      %361 = vmatpush1.bf16.msra.mxu0 %v344
      %362 = vmatprep.subr.bf16.mxu0 0
      %363 = vmatpush1.bf16.msra.mxu0 %v345
      %364 = vmatprep.subr.bf16.mxu0 0
      %365 = vmatpush1.bf16.msra.mxu0 %v346
      %366 = vmatprep.subr.bf16.mxu0 0
      %367 = vmatpush1.bf16.msra.mxu0 %v347
      %368 = vmatprep.subr.bf16.mxu0 0
      %369 = vmatpush1.bf16.msra.mxu0 %v348
      %370 = vmatprep.subr.bf16.mxu0 0
      %371 = vmatpush1.bf16.msra.mxu0 %v349
      %372 = vmatprep.subr.bf16.mxu0 0
      %373 = vmatpush1.bf16.msra.mxu0 %v350
      %374 = vmatprep.subr.bf16.mxu0 0
      %375 = vmatpush1.bf16.msra.mxu0 %v351
      %376 = vmatprep.subr.bf16.mxu0 0
      %377 = vmatpush1.bf16.msra.mxu0 0
      %378 = vmatprep.subr.bf16.mxu0 0
      %379 = vmatpush1.bf16.msra.mxu0 0
      %380 = vmatprep.subr.bf16.mxu0 0
      %381 = vmatpush1.bf16.msra.mxu0 0
      %382 = vmatprep.subr.bf16.mxu0 0
      %383 = vmatpush1.bf16.msra.mxu0 0
      %384 = vmatprep.subr.bf16.mxu0 0
      %385 = vmatpush1.bf16.msra.mxu0 0
      %386 = vmatprep.subr.bf16.mxu0 0
      %387 = vmatpush1.bf16.msra.mxu0 0
      %388 = vmatprep.subr.bf16.mxu0 0
      %389 = vmatpush1.bf16.msra.mxu0 0
      %390 = vmatprep.subr.bf16.mxu0 0
      %391 = vmatpush1.bf16.msra.mxu0 0
      %392 = vmatprep.mubr.bf16.mxu0 0
      %393 = vmatmul.mubr.bf16.gmra.mrb[0].mxu0 %v282
      %v394 = vpop.f32.mrb[0].mxu0
      %v395 = vadd.f32 %v222, %v394
      %v396 = vpop.f32.mrb[0].mxu0
      %v397 = vpop.f32.mrb[0].mxu0
      %v398 = vadd.f32 %v222, %v397
      %v399 = vpop.f32.mrb[0].mxu0
      %400 = vmatprep.mubr.bf16.mxu0 0
      %401 = vmatmul.mubr.bf16.gmra.mrb[0].mxu0 %v283
      %v402 = vpop.f32.mrb[0].mxu0
      %v403 = vadd.f32 %v222, %v402
      %v404 = vpop.f32.mrb[0].mxu0
      %v405 = vpop.f32.mrb[0].mxu0
      %v406 = vadd.f32 %v222, %v405
      %v407 = vpop.f32.mrb[0].mxu0
      %408 = vmatprep.mubr.bf16.mxu0 0
      %409 = vmatmul.mubr.bf16.gmra.mrb[0].mxu0 %v284
      %v410 = vpop.f32.mrb[0].mxu0
      %v411 = vadd.f32 %v222, %v410
      %v412 = vpop.f32.mrb[0].mxu0
      %v413 = vpop.f32.mrb[0].mxu0
      %v414 = vadd.f32 %v222, %v413
      %v415 = vpop.f32.mrb[0].mxu0
      %416 = vmatprep.mubr.bf16.mxu0 0
      %417 = vmatmul.mubr.bf16.gmra.mrb[0].mxu0 %v285
      %v418 = vpop.f32.mrb[0].mxu0
      %v419 = vadd.f32 %v222, %v418
      %v420 = vpop.f32.mrb[0].mxu0
      %v421 = vpop.f32.mrb[0].mxu0
      %v422 = vadd.f32 %v222, %v421
      %v423 = vpop.f32.mrb[0].mxu0
      %424 = vmatprep.mubr.bf16.mxu0 0
      %425 = vmatmul.mubr.bf16.gmra.mrb[0].mxu0 %v286
      %v426 = vpop.f32.mrb[0].mxu0
      %v427 = vadd.f32 %v222, %v426
      %v428 = vpop.f32.mrb[0].mxu0
      %v429 = vpop.f32.mrb[0].mxu0
      %v430 = vadd.f32 %v222, %v429
      %v431 = vpop.f32.mrb[0].mxu0
      %432 = vmatprep.mubr.bf16.mxu0 0
      %433 = vmatmul.mubr.bf16.gmra.mrb[0].mxu0 %v287
      %v434 = vpop.f32.mrb[0].mxu0
      %v435 = vadd.f32 %v222, %v434
      %v436 = vpop.f32.mrb[0].mxu0
      %v437 = vpop.f32.mrb[0].mxu0
      %v438 = vadd.f32 %v222, %v437
      %v439 = vpop.f32.mrb[0].mxu0
      %440 = vmatprep.mubr.bf16.mxu0 0
      %441 = vmatmul.mubr.bf16.gmra.mrb[0].mxu0 %v288
      %v442 = vpop.f32.mrb[0].mxu0
      %v443 = vadd.f32 %v222, %v442
      %v444 = vpop.f32.mrb[0].mxu0
      %v445 = vpop.f32.mrb[0].mxu0
      %v446 = vadd.f32 %v222, %v445
      %v447 = vpop.f32.mrb[0].mxu0
      %448 = vmatprep.mubr.bf16.mxu0 0
      %449 = vmatmul.mubr.bf16.gmra.mrb[0].mxu0 %v289
      %v450 = vpop.f32.mrb[0].mxu0
      %v451 = vadd.f32 %v222, %v450
      %v452 = vpop.f32.mrb[0].mxu0
      %v453 = vpop.f32.mrb[0].mxu0
      %v454 = vadd.f32 %v222, %v453
      %v455 = vpop.f32.mrb[0].mxu0
      %456 = vmatprep.mubr.bf16.mxu0 0
      %457 = vmatmul.mubr.bf16.gmra.mrb[0].mxu0 %v290
      %v458 = vpop.f32.mrb[0].mxu0
      %v459 = vadd.f32 %v222, %v458
      %v460 = vpop.f32.mrb[0].mxu0
      %v461 = vpop.f32.mrb[0].mxu0
      %v462 = vadd.f32 %v222, %v461
      %v463 = vpop.f32.mrb[0].mxu0
      %464 = vmatprep.mubr.bf16.mxu0 0
      %465 = vmatmul.mubr.bf16.gmra.mrb[0].mxu0 %v291
      %v466 = vpop.f32.mrb[0].mxu0
      %v467 = vadd.f32 %v222, %v466
      %v468 = vpop.f32.mrb[0].mxu0
      %v469 = vpop.f32.mrb[0].mxu0
      %v470 = vadd.f32 %v222, %v469
      %v471 = vpop.f32.mrb[0].mxu0
      %472 = vmatprep.mubr.bf16.mxu0 0
      %473 = vmatmul.mubr.bf16.gmra.mrb[0].mxu0 %v292
      %v474 = vpop.f32.mrb[0].mxu0
      %v475 = vadd.f32 %v222, %v474
      %v476 = vpop.f32.mrb[0].mxu0
      %v477 = vpop.f32.mrb[0].mxu0
      %v478 = vadd.f32 %v222, %v477
      %v479 = vpop.f32.mrb[0].mxu0
      %480 = vmatprep.mubr.bf16.mxu0 0
      %481 = vmatmul.mubr.bf16.gmra.mrb[0].mxu0 %v293
      %v482 = vpop.f32.mrb[0].mxu0
      %v483 = vadd.f32 %v222, %v482
      %v484 = vpop.f32.mrb[0].mxu0
      %v485 = vpop.f32.mrb[0].mxu0
      %v486 = vadd.f32 %v222, %v485
      %v487 = vpop.f32.mrb[0].mxu0
      %488 = vmatprep.mubr.bf16.mxu0 0
      %489 = vmatmul.mubr.bf16.gmra.mrb[0].mxu0 %v294
      %v490 = vpop.f32.mrb[0].mxu0
      %v491 = vadd.f32 %v222, %v490
      %v492 = vpop.f32.mrb[0].mxu0
      %v493 = vpop.f32.mrb[0].mxu0
      %v494 = vadd.f32 %v222, %v493
      %v495 = vpop.f32.mrb[0].mxu0
      %496 = vmatprep.mubr.bf16.mxu0 0
      %497 = vmatmul.mubr.bf16.gmra.mrb[0].mxu0 %v295
      %v498 = vpop.f32.mrb[0].mxu0
      %v499 = vadd.f32 %v222, %v498
      %v500 = vpop.f32.mrb[0].mxu0
      %v501 = vpop.f32.mrb[0].mxu0
      %v502 = vadd.f32 %v222, %v501
      %v503 = vpop.f32.mrb[0].mxu0
      %504 = vmatprep.mubr.bf16.mxu0 0
      %505 = vmatmul.mubr.bf16.gmra.mrb[0].mxu0 %v296
      %v506 = vpop.f32.mrb[0].mxu0
      %v507 = vadd.f32 %v222, %v506
      %v508 = vpop.f32.mrb[0].mxu0
      %v509 = vpop.f32.mrb[0].mxu0
      %v510 = vpop.f32.mrb[0].mxu0
      %511 = vdwg.mxu0
      %v512 = vmax.f32 %v395, 0.0
      %v513 = vmax.f32 %v398, 0.0
      %v514 = vmax.f32 %v403, 0.0
      %v515 = vmax.f32 %v406, 0.0
      %v516 = vmax.f32 %v411, 0.0
      %v517 = vmax.f32 %v414, 0.0
      %v518 = vmax.f32 %v419, 0.0
      %v519 = vmax.f32 %v422, 0.0
      %v520 = vmax.f32 %v427, 0.0
      %v521 = vmax.f32 %v430, 0.0
      %v522 = vmax.f32 %v435, 0.0
      %v523 = vmax.f32 %v438, 0.0
      %v524 = vmax.f32 %v443, 0.0
      %v525 = vmax.f32 %v446, 0.0
      %v526 = vmax.f32 %v451, 0.0
      %v527 = vmax.f32 %v454, 0.0
      %v528 = vmax.f32 %v459, 0.0
      %v529 = vmax.f32 %v462, 0.0
      %v530 = vmax.f32 %v467, 0.0
      %v531 = vmax.f32 %v470, 0.0
      %v532 = vmax.f32 %v475, 0.0
      %v533 = vmax.f32 %v478, 0.0
      %v534 = vmax.f32 %v483, 0.0
      %v535 = vmax.f32 %v486, 0.0
      %v536 = vmax.f32 %v491, 0.0
      %v537 = vmax.f32 %v494, 0.0
      %v538 = vmax.f32 %v499, 0.0
      %v539 = vmax.f32 %v502, 0.0
      %v540 = vmax.f32 %v507, 0.0
      %v541 = vpack.c.bf16 %v513, %v512
      %v542 = vpack.c.bf16 %v515, %v514
      %v543 = vpack.c.bf16 %v517, %v516
      %v544 = vpack.c.bf16 %v519, %v518
      %v545 = vpack.c.bf16 %v521, %v520
      %v546 = vpack.c.bf16 %v523, %v522
      %v547 = vpack.c.bf16 %v525, %v524
      %v548 = vpack.c.bf16 %v527, %v526
      %v549 = vpack.c.bf16 %v529, %v528
      %v550 = vpack.c.bf16 %v531, %v530
      %v551 = vpack.c.bf16 %v533, %v532
      %v552 = vpack.c.bf16 %v535, %v534
      %v553 = vpack.c.bf16 %v537, %v536
      %v554 = vpack.c.bf16 %v539, %v538
      %v555 = vpack.c.bf16 %v540, %v540
      %v571 = vunpack.c.l.b16 %v541
      %v572 = vunpack.c.h.b16 %v541
      %v573 = vunpack.c.l.b16 %v542
      %v574 = vunpack.c.h.b16 %v542
      %v575 = vunpack.c.l.b16 %v543
      %v576 = vunpack.c.h.b16 %v543
      %v577 = vunpack.c.l.b16 %v544
      %v578 = vunpack.c.h.b16 %v544
      %v579 = vunpack.c.l.b16 %v545
      %v580 = vunpack.c.h.b16 %v545
      %v581 = vunpack.c.l.b16 %v546
      %v582 = vunpack.c.h.b16 %v546
      %v583 = vunpack.c.l.b16 %v547
      %v584 = vunpack.c.h.b16 %v547
      %v585 = vunpack.c.l.b16 %v548
      %v586 = vunpack.c.h.b16 %v548
      %v587 = vunpack.c.l.b16 %v549
      %v588 = vunpack.c.h.b16 %v549
      %v589 = vunpack.c.l.b16 %v550
      %v590 = vunpack.c.h.b16 %v550
      %v591 = vunpack.c.l.b16 %v551
      %v592 = vunpack.c.h.b16 %v551
      %v593 = vunpack.c.l.b16 %v552
      %v594 = vunpack.c.h.b16 %v552
      %v595 = vunpack.c.l.b16 %v553
      %v596 = vunpack.c.h.b16 %v553
      %v597 = vunpack.c.l.b16 %v554
      %v598 = vunpack.c.h.b16 %v554
      %v599 = vunpack.c.l.b16 %v555
      %v600 = vpack.c.b16 %v571, %v571
      %v601 = vpack.c.b16 %v572, %v572
      %v602 = vpack.c.b16 %v573, %v573
      %v603 = vpack.c.b16 %v574, %v574
      %v604 = vpack.c.b16 %v575, %v575
      %v605 = vpack.c.b16 %v576, %v576
      %v606 = vpack.c.b16 %v577, %v577
      %v607 = vpack.c.b16 %v578, %v578
      %v608 = vpack.c.b16 %v579, %v579
      %v609 = vpack.c.b16 %v580, %v580
      %v610 = vpack.c.b16 %v581, %v581
      %v611 = vpack.c.b16 %v582, %v582
      %v612 = vpack.c.b16 %v583, %v583
      %v613 = vpack.c.b16 %v584, %v584
      %v614 = vpack.c.b16 %v585, %v585
      %v615 = vpack.c.b16 %v586, %v586
      %v616 = vpack.c.b16 %v587, %v587
      %v617 = vpack.c.b16 %v588, %v588
      %v618 = vpack.c.b16 %v589, %v589
      %v619 = vpack.c.b16 %v590, %v590
      %v620 = vpack.c.b16 %v591, %v591
      %v621 = vpack.c.b16 %v592, %v592
      %v622 = vpack.c.b16 %v593, %v593
      %v623 = vpack.c.b16 %v594, %v594
      %v624 = vpack.c.b16 %v595, %v595
      %v625 = vpack.c.b16 %v596, %v596
      %v626 = vpack.c.b16 %v597, %v597
      %v627 = vpack.c.b16 %v598, %v598
      %v628 = vpack.c.b16 %v599, %v599
      %658 = vst [vmem:[%s170] sm:$0xf] %v600
      %659 = vst [vmem:[%s170 + $0x4] sm:$0xf] %v601
      %660 = vst [vmem:[%s170 + $0x8] sm:$0xf] %v602
      %661 = vst [vmem:[%s170 + $0xc] sm:$0xf] %v603
      %662 = vst [vmem:[%s170 + $0x10] sm:$0xf] %v604
      %663 = vst [vmem:[%s170 + $0x14] sm:$0xf] %v605
      %664 = vst [vmem:[%s170 + $0x18] sm:$0xf] %v606
      %665 = vst [vmem:[%s170 + $0x1c] sm:$0xf] %v607
      %666 = vst [vmem:[%s170 + $0x20] sm:$0xf] %v608
      %667 = vst [vmem:[%s170 + $0x24] sm:$0xf] %v609
      %668 = vst [vmem:[%s170 + $0x28] sm:$0xf] %v610
      %669 = vst [vmem:[%s170 + $0x2c] sm:$0xf] %v611
      %670 = vst [vmem:[%s170 + $0x30] sm:$0xf] %v612
      %671 = vst [vmem:[%s170 + $0x34] sm:$0xf] %v613
      %672 = vst [vmem:[%s170 + $0x38] sm:$0xf] %v614
      %673 = vst [vmem:[%s170 + $0x3c] sm:$0xf] %v615
      %674 = vst [vmem:[%s170 + $0x40] sm:$0xf] %v616
      %675 = vst [vmem:[%s170 + $0x44] sm:$0xf] %v617
      %676 = vst [vmem:[%s170 + $0x48] sm:$0xf] %v618
      %677 = vst [vmem:[%s170 + $0x4c] sm:$0xf] %v619
      %678 = vst [vmem:[%s170 + $0x50] sm:$0xf] %v620
      %679 = vst [vmem:[%s170 + $0x54] sm:$0xf] %v621
      %680 = vst [vmem:[%s170 + $0x58] sm:$0xf] %v622
      %681 = vst [vmem:[%s170 + $0x5c] sm:$0xf] %v623
      %682 = vst [vmem:[%s170 + $0x60] sm:$0xf] %v624
      %683 = vst [vmem:[%s170 + $0x64] sm:$0xf] %v625
      %684 = vst [vmem:[%s170 + $0x68] sm:$0xf] %v626
      %685 = vst [vmem:[%s170 + $0x6c] sm:$0xf] %v627
      %686 = vst [vmem:[%s170 + $0x70] sm:$0xf] %v628
      %p687 = scmp.lt.s32.totalorder %s14, 1
      %s688 = scalar_select %p687, %s14, 1
      %s689 = smul.addr %s688, 29
      %s690 = smul.addr %s689, 4
      %s691 = scalar_lea.vmem %s3, %s690
      // Predicated region
      $region33: #{model_strided_a_forward.3} parent=31 // pred_check
        %p692 = pneg %p100
      $region34: #{model_strided_a_forward.3} parent=31 // pred_check_branch
        %694 = sbr.rel (%p692) target = $region36
      $region35: #{model_strided_a_forward.3} parent=31 // pred_region
        _
      $region36: #{model_strided_a_forward.3} parent=31 // pred_fallthru
        _
    $region32: #{model_strided_a_forward.3} parent=5 // pred_fallthru
      _
    %p695 = scmp.le.s32.totalorder 2, %s9
    // Predicated region
    $region37: #{model_strided_a_forward.3} parent=5 // pred_check
      %p696 = pneg %p695
    $region38: #{model_strided_a_forward.3} parent=5 // pred_check_branch
      %698 = sbr.rel (%p696) target = $region40
    $region39: #{model_strided_a_forward.3} parent=5 // pred_region
      %s699 = ssub.s32 %s9, 2
      // Predicated region
      $region41: #{model_strided_a_forward.3} parent=39 // pred_check
        %p700 = pneg %p106
      $region42: #{model_strided_a_forward.3} parent=39 // pred_check_branch
        %702 = sbr.rel (%p700) target = $region44
      $region43: #{model_strided_a_forward.3} parent=39 // pred_region
        %p703 = scmp.lt.s32.totalorder %s15, 1
        %s704 = scalar_select %p703, %s15, 1
        %s705 = smul.addr %s704, 29
        %s706 = smul.addr %s705, 4
        %s707 = scalar_lea.vmem %s3, %s706
      $region44: #{model_strided_a_forward.3} parent=39 // pred_fallthru
        _
    $region40: #{model_strided_a_forward.3} parent=5 // pred_fallthru
      _
  $region6: #{model_strided_a_forward.3} parent=0 // loop_footer
    %s13 = sadd.s32 1, %s9
  $region7: #{model_strided_a_forward.3} parent=0 // loop_footer_branch
    %8 = sbr.rel target = $region3
  $region8: #{model_strided_a_forward.3} parent=0 // loop_exit
    _

// kernel: model_strided_a_forward.4
$region0: #{model_strided_a_forward.4}
  #allocation0 [shape = 'u32[]', space=smem, size = 0x4, offset = 0x4, fixed_abs, tag = 'smem constant byte address 0x4 - core index']
  #allocation1 [shape = 'u32[144,128]{1,0:T(1,128)}', space=vmem, size = 0x12000, scoped, tag = 'internal scratch']
  %s0 = inlined_call_operand.vmem [shape: bf16[2,56,2432], index: 0, kind: input, shape index: {}]
  %s1 = inlined_call_operand.vmem [shape: bf16[2432,256], index: 1, kind: input, shape index: {}]
  %s2 = inlined_call_operand.vmem [shape: f32[1,256], index: 2, kind: input, shape index: {}]
  %s3 = inlined_call_operand.vmem [shape: bf16[2,56,256], index: 3, kind: output, shape index: {}]
  %s4 = sld [smem:[#allocation0]]
  $region45: #{model_strided_a_forward.4} parent=0
    _
  %s6 = ssub.s32 1, %s4
  %s7 = scalar_select 0, %s6, %s4
  loop: start=0, step=1, limit=4
  $region2: #{model_strided_a_forward.4} parent=0 // loop_pre_header
    _
  $region3: #{model_strided_a_forward.4} parent=0 // loop_header
    %s9 = sphi 0, %s13
    %p10 = scmp.ge.s32.totalorder %s9, 4
    %s19 = sphi 0, %s21
    %s22 = sphi 0, %s19
    %s23 = sphi 0, %s22
    %s39 = sphi 0, %s23
    %s43 = sphi 0, %s43
    %s45 = sphi 0, %s43
    %s46 = sphi 0, %s45
    %s60 = sphi 0, %s46
    %s64 = sphi 0, %s64
    %s66 = sphi 0, %s64
    %s67 = sphi 0, %s66
    %s81 = sphi 0, %s67
    %s87 = sphi 0, %s89
    %s90 = sphi 0, %s87
    %s91 = sphi 0, %s90
    %s107 = sphi 0, %s91
  $region4: #{model_strided_a_forward.4} parent=0 // loop_header_branch
    %12 = sbr.rel (%p10) target = $region8
  $region5: #{model_strided_a_forward.4} parent=0 // loop_body
    %s14 = ssub.s32 %s9, 1
    %s15 = ssub.s32 %s9, 2
    %s16 = sadd.s32 %s9, 1
    %s17 = ssub.s32 %s9, %s16
    %p18 = scmp.eq.s32.totalorder %s17, 0
    %s20 = sadd.s32 %s19, 1
    %s21 = scalar_select %p18, %s19, %s20
    %p24 = pneg %p18
    %p25 = scmp.eq.s32.totalorder %s9, 1
    %p26 = por %p24, %p25
    %p27 = scmp.ne.s32.totalorder %s19, %s22
    %p28 = scmp.eq.s32.totalorder %s9, 0
    %p29 = por %p27, %p28
    %p30 = scmp.ne.s32.totalorder %s19, %s22
    %p31 = scmp.eq.s32.totalorder %s14, 1
    %p32 = por %p30, %p31
    %p33 = scmp.ne.s32.totalorder %s22, %s23
    %p34 = scmp.eq.s32.totalorder %s14, 0
    %p35 = por %p33, %p34
    %p36 = scmp.ne.s32.totalorder %s22, %s23
    %p37 = scmp.eq.s32.totalorder %s15, 1
    %p38 = por %p36, %p37
    %p40 = scmp.ne.s32.totalorder %s23, %s39
    %p41 = scmp.eq.s32.totalorder %s15, 0
    %p42 = por %p40, %p41
    %s44 = sadd.s32 %s43, 1
    %p47 = scmp.eq.s32.totalorder %s9, 1
    %p48 = scmp.ne.s32.totalorder %s43, %s45
    %p49 = scmp.eq.s32.totalorder %s9, 0
    %p50 = por %p48, %p49
    %p51 = scmp.ne.s32.totalorder %s43, %s45
    %p52 = scmp.eq.s32.totalorder %s14, 1
    %p53 = por %p51, %p52
    %p54 = scmp.ne.s32.totalorder %s45, %s46
    %p55 = scmp.eq.s32.totalorder %s14, 0
    %p56 = por %p54, %p55
    %p57 = scmp.ne.s32.totalorder %s45, %s46
    %p58 = scmp.eq.s32.totalorder %s15, 1
    %p59 = por %p57, %p58
    %p61 = scmp.ne.s32.totalorder %s46, %s60
    %p62 = scmp.eq.s32.totalorder %s15, 0
    %p63 = por %p61, %p62
    %s65 = sadd.s32 %s64, 1
    %p68 = scmp.eq.s32.totalorder %s9, 1
    %p69 = scmp.ne.s32.totalorder %s64, %s66
    %p70 = scmp.eq.s32.totalorder %s9, 0
    %p71 = por %p69, %p70
    %p72 = scmp.ne.s32.totalorder %s64, %s66
    %p73 = scmp.eq.s32.totalorder %s14, 1
    %p74 = por %p72, %p73
    %p75 = scmp.ne.s32.totalorder %s66, %s67
    %p76 = scmp.eq.s32.totalorder %s14, 0
    %p77 = por %p75, %p76
    %p78 = scmp.ne.s32.totalorder %s66, %s67
    %p79 = scmp.eq.s32.totalorder %s15, 1
    %p80 = por %p78, %p79
    %p82 = scmp.ne.s32.totalorder %s67, %s81
    %p83 = scmp.eq.s32.totalorder %s15, 0
    %p84 = por %p82, %p83
    %s85 = ssub.s32 %s9, %s16
    %p86 = scmp.eq.s32.totalorder %s85, 0
    %s88 = sadd.s32 %s87, 1
    %s89 = scalar_select %p86, %s87, %s88
    %p92 = pneg %p86
    %p93 = scmp.eq.s32.totalorder %s9, 1
    %p94 = por %p92, %p93
    %p95 = scmp.ne.s32.totalorder %s87, %s90
    %p96 = scmp.eq.s32.totalorder %s9, 0
    %p97 = por %p95, %p96
    %p98 = scmp.ne.s32.totalorder %s87, %s90
    %p99 = scmp.eq.s32.totalorder %s14, 1
    %p100 = por %p98, %p99
    %p101 = scmp.ne.s32.totalorder %s90, %s91
    %p102 = scmp.eq.s32.totalorder %s14, 0
    %p103 = por %p101, %p102
    %p104 = scmp.ne.s32.totalorder %s90, %s91
    %p105 = scmp.eq.s32.totalorder %s15, 1
    %p106 = por %p104, %p105
    %p108 = scmp.ne.s32.totalorder %s91, %s107
    %p109 = scmp.eq.s32.totalorder %s15, 0
    %p110 = por %p108, %p109
    %p111 = scmp.le.s32.totalorder 1, %s9
    %p112 = scmp.lt.s32.totalorder %s9, 3
    %p113 = pnand %p111, %p112
    %p114 = pneg %p113
    // Predicated region
    $region9: #{model_strided_a_forward.4} parent=5 // pred_check
      _
    $region10: #{model_strided_a_forward.4} parent=5 // pred_check_branch
      %116 = sbr.rel (%p113) target = $region12
    $region11: #{model_strided_a_forward.4} parent=5 // pred_region
      %s117 = ssub.s32 %s9, 1
      // Predicated region
      $region13: #{model_strided_a_forward.4} parent=11 // pred_check
        %p118 = pneg %p56
      $region14: #{model_strided_a_forward.4} parent=11 // pred_check_branch
        %120 = sbr.rel (%p118) target = $region16
      $region15: #{model_strided_a_forward.4} parent=11 // pred_region
        _
      $region16: #{model_strided_a_forward.4} parent=11 // pred_fallthru
        _
      // Predicated region
      $region17: #{model_strided_a_forward.4} parent=11 // pred_check
        %p121 = pneg %p77
      $region18: #{model_strided_a_forward.4} parent=11 // pred_check_branch
        %123 = sbr.rel (%p121) target = $region20
      $region19: #{model_strided_a_forward.4} parent=11 // pred_region
        _
      $region20: #{model_strided_a_forward.4} parent=11 // pred_fallthru
        _
    $region12: #{model_strided_a_forward.4} parent=5 // pred_fallthru
      _
    %p124 = scmp.lt.s32.totalorder %s9, 2
    // Predicated region
    $region21: #{model_strided_a_forward.4} parent=5 // pred_check
      %p125 = pneg %p124
    $region22: #{model_strided_a_forward.4} parent=5 // pred_check_branch
      %127 = sbr.rel (%p125) target = $region24
    $region23: #{model_strided_a_forward.4} parent=5 // pred_region
      // Predicated region
      $region25: #{model_strided_a_forward.4} parent=23 // pred_check
        %p128 = pneg %p29
      $region26: #{model_strided_a_forward.4} parent=23 // pred_check_branch
        %130 = sbr.rel (%p128) target = $region28
      $region27: #{model_strided_a_forward.4} parent=23 // pred_region
        %p131 = scmp.lt.s32.totalorder %s9, 1
        %s132 = scalar_select %p131, %s9, 1
        %s133 = smul.addr %s132, 133
        %s134 = smul.addr %s133, 4
        %s135 = scalar_lea.vmem %s0, %s134
      $region28: #{model_strided_a_forward.4} parent=23 // pred_fallthru
        _
    $region24: #{model_strided_a_forward.4} parent=5 // pred_fallthru
      _
    %p136 = scmp.le.s32.totalorder 1, %s9
    %p137 = scmp.lt.s32.totalorder %s9, 3
    %p138 = pnand %p136, %p137
    %p139 = pneg %p138
    // Predicated region
    $region29: #{model_strided_a_forward.4} parent=5 // pred_check
      _
    $region30: #{model_strided_a_forward.4} parent=5 // pred_check_branch
      %141 = sbr.rel (%p138) target = $region32
    $region31: #{model_strided_a_forward.4} parent=5 // pred_region
      %s142 = ssub.s32 %s9, 1
      %p143 = scmp.lt.s32.totalorder %s14, 1
      %s144 = scalar_select %p143, %s14, 1
      %s145 = smul.addr %s144, 133
      %s146 = smul.addr %s145, 4
      %s147 = scalar_lea.vmem %s0, %s146
      %p148 = pneg %p35
      %p149 = pneg %p32
      %p150 = pneg %p56
      %p151 = pneg %p53
      %p152 = pneg %p77
      %p153 = pneg %p74
      %p154 = pneg %p103
      %p155 = pneg %p100
      %p156 = scmp.lt.s32.totalorder %s14, 1
      %s157 = scalar_select %p156, %s14, 1
      %s158 = smul.addr %s157, 14
      %s159 = smul.addr %s158, 4
      %s160 = scalar_lea.vmem %s3, %s159
      %p161 = scmp.lt.s32.totalorder %s14, 1
      %s162 = scalar_select %p161, %s14, 1
      %s163 = smul.addr %s162, 133
      %s164 = smul.addr %s163, 4
      %s165 = scalar_lea.vmem %s0, %s164
      %p166 = scmp.lt.s32.totalorder %s14, 1
      %s167 = scalar_select %p166, %s14, 1
      %s168 = smul.addr %s167, 14
      %s169 = smul.addr %s168, 4
      %s170 = scalar_lea.vmem %s3, %s169
      %v172 = vld [vmem:[%s165] sm:$0xff]
      %v173 = vld [vmem:[%s165 + $0x8] sm:$0xff]
      %v174 = vld [vmem:[%s165 + $0x10] sm:$0xff]
      %v175 = vld [vmem:[%s165 + $0x18] sm:$0xff]
      %v176 = vld [vmem:[%s165 + $0x20] sm:$0xff]
      %v177 = vld [vmem:[%s165 + $0x28] sm:$0xff]
      %v178 = vld [vmem:[%s165 + $0x30] sm:$0xff]
      %v179 = vld [vmem:[%s165 + $0x38] sm:$0xff]
      %v180 = vld [vmem:[%s165 + $0x40] sm:$0xff]
      %v181 = vld [vmem:[%s165 + $0x48] sm:$0xf]
      %v182 = vld [vmem:[%s165 + $0x4c] sm:$0xff]
      %v183 = vld [vmem:[%s165 + $0x54] sm:$0xff]
      %v184 = vld [vmem:[%s165 + $0x5c] sm:$0xff]
      %v185 = vld [vmem:[%s165 + $0x64] sm:$0xff]
      %v186 = vld [vmem:[%s165 + $0x6c] sm:$0xff]
      %v187 = vld [vmem:[%s165 + $0x74] sm:$0xff]
      %v188 = vld [vmem:[%s165 + $0x7c] sm:$0xff]
      %v189 = vld [vmem:[%s165 + $0x84] sm:$0xff]
      %v190 = vld [vmem:[%s165 + $0x8c] sm:$0xff]
      %v191 = vld [vmem:[%s165 + $0x94] sm:$0xf]
      %v192 = vld [vmem:[%s165 + $0x98] sm:$0xff]
      %v193 = vld [vmem:[%s165 + $0xa0] sm:$0xff]
      %v194 = vld [vmem:[%s165 + $0xa8] sm:$0xff]
      %v195 = vld [vmem:[%s165 + $0xb0] sm:$0xff]
      %v196 = vld [vmem:[%s165 + $0xb8] sm:$0xff]
      %v197 = vld [vmem:[%s165 + $0xc0] sm:$0xff]
      %v198 = vld [vmem:[%s165 + $0xc8] sm:$0xff]
      %v199 = vld [vmem:[%s165 + $0xd0] sm:$0xff]
      %v200 = vld [vmem:[%s165 + $0xd8] sm:$0xff]
      %v201 = vld [vmem:[%s165 + $0xe0] sm:$0xf]
      %v202 = vld [vmem:[%s165 + $0xe4] sm:$0xff]
      %v203 = vld [vmem:[%s165 + $0xec] sm:$0xff]
      %v204 = vld [vmem:[%s165 + $0xf4] sm:$0xff]
      %v205 = vld [vmem:[%s165 + $0xfc] sm:$0xff]
      %v206 = vld [vmem:[%s165 + $0x104] sm:$0xff]
      %v207 = vld [vmem:[%s165 + $0x10c] sm:$0xff]
      %v208 = vld [vmem:[%s165 + $0x114] sm:$0xff]
      %v209 = vld [vmem:[%s165 + $0x11c] sm:$0xff]
      %v210 = vld [vmem:[%s165 + $0x124] sm:$0xff]
      %v211 = vld [vmem:[%s165 + $0x12c] sm:$0xf]
      %v212 = vld [vmem:[%s165 + $0x130] sm:$0xff]
      %v213 = vld [vmem:[%s165 + $0x138] sm:$0xff]
      %v214 = vld [vmem:[%s165 + $0x140] sm:$0xff]
      %v215 = vld [vmem:[%s165 + $0x148] sm:$0xff]
      %v216 = vld [vmem:[%s165 + $0x150] sm:$0xff]
      %v217 = vld [vmem:[%s165 + $0x158] sm:$0xff]
      %v218 = vld [vmem:[%s165 + $0x160] sm:$0xff]
      %v219 = vld [vmem:[%s165 + $0x168] sm:$0xff]
      %v220 = vld [vmem:[%s165 + $0x170] sm:$0xff]
      %v221 = vld [vmem:[%s165 + $0x178] sm:$0xf]
      %v222 = vld [vmem:[%s165 + $0x17c] sm:$0xff]
      %v223 = vld [vmem:[%s165 + $0x184] sm:$0xff]
      %v224 = vld [vmem:[%s165 + $0x18c] sm:$0xff]
      %v225 = vld [vmem:[%s165 + $0x194] sm:$0xff]
      %v226 = vld [vmem:[%s165 + $0x19c] sm:$0xff]
      %v227 = vld [vmem:[%s165 + $0x1a4] sm:$0xff]
      %v228 = vld [vmem:[%s165 + $0x1ac] sm:$0xff]
      %v229 = vld [vmem:[%s165 + $0x1b4] sm:$0xff]
      %v230 = vld [vmem:[%s165 + $0x1bc] sm:$0xff]
      %v231 = vld [vmem:[%s165 + $0x1c4] sm:$0xf]
      %v232 = vld [vmem:[%s165 + $0x1c8] sm:$0xff]
      %v233 = vld [vmem:[%s165 + $0x1d0] sm:$0xff]
      %v234 = vld [vmem:[%s165 + $0x1d8] sm:$0xff]
      %v235 = vld [vmem:[%s165 + $0x1e0] sm:$0xff]
      %v236 = vld [vmem:[%s165 + $0x1e8] sm:$0xff]
      %v237 = vld [vmem:[%s165 + $0x1f0] sm:$0xff]
      %v238 = vld [vmem:[%s165 + $0x1f8] sm:$0xff]
      %v239 = vld [vmem:[%s165 + $0x200] sm:$0xff]
      %v240 = vld [vmem:[%s165 + $0x208] sm:$0xff]
      %v241 = vld [vmem:[%s165 + $0x210] sm:$0xf]
      %v242 = vld [vmem:[%s1] sm:$0xff]
      %v243 = vld [vmem:[%s1 + $0x8] sm:$0xff]
      %v244 = vld [vmem:[%s1 + $0x10] sm:$0xff]
      %v245 = vld [vmem:[%s1 + $0x18] sm:$0xff]
      %v246 = vld [vmem:[%s1 + $0x20] sm:$0xff]
      %v247 = vld [vmem:[%s1 + $0x28] sm:$0xff]
      %v248 = vld [vmem:[%s1 + $0x30] sm:$0xff]
      %v249 = vld [vmem:[%s1 + $0x38] sm:$0xff]
      %v250 = vld [vmem:[%s1 + $0x40] sm:$0xff]
      %v251 = vld [vmem:[%s1 + $0x48] sm:$0xff]
      %v252 = vld [vmem:[%s1 + $0x50] sm:$0xff]
      %v253 = vld [vmem:[%s1 + $0x58] sm:$0xff]
      %v254 = vld [vmem:[%s1 + $0x60] sm:$0xff]
      %v255 = vld [vmem:[%s1 + $0x68] sm:$0xff]
      %v256 = vld [vmem:[%s1 + $0x70] sm:$0xff]
      %v257 = vld [vmem:[%s1 + $0x78] sm:$0xff]
      %v258 = vld [vmem:[%s1 + $0x80] sm:$0xff]
      %v259 = vld [vmem:[%s1 + $0x88] sm:$0xff]
      %v260 = vld [vmem:[%s1 + $0x90] sm:$0xff]
      %v261 = vld [vmem:[%s1 + $0x98] sm:$0xff]
      %v262 = vld [vmem:[%s1 + $0xa0] sm:$0xff]
      %v263 = vld [vmem:[%s1 + $0xa8] sm:$0xff]
      %v264 = vld [vmem:[%s1 + $0xb0] sm:$0xff]
      %v265 = vld [vmem:[%s1 + $0xb8] sm:$0xff]
      %v266 = vld [vmem:[%s1 + $0xc0] sm:$0xff]
      %v267 = vld [vmem:[%s1 + $0xc8] sm:$0xff]
      %v268 = vld [vmem:[%s1 + $0xd0] sm:$0xff]
      %v269 = vld [vmem:[%s1 + $0xd8] sm:$0xff]
      %v270 = vld [vmem:[%s1 + $0xe0] sm:$0xff]
      %v271 = vld [vmem:[%s1 + $0xe8] sm:$0xff]
      %v272 = vld [vmem:[%s1 + $0xf0] sm:$0xff]
      %v273 = vld [vmem:[%s1 + $0xf8] sm:$0xff]
      %v274 = vld [vmem:[%s1 + $0x100] sm:$0xff]
      %v275 = vld [vmem:[%s1 + $0x108] sm:$0xff]
      %v276 = vld [vmem:[%s1 + $0x110] sm:$0xff]
      %v277 = vld [vmem:[%s1 + $0x118] sm:$0xff]
      %v278 = vld [vmem:[%s1 + $0x120] sm:$0xff]
      %v279 = vld [vmem:[%s1 + $0x128] sm:$0xff]
      %v280 = vld [vmem:[%s1 + $0x130] sm:$0xff]
      %v281 = vld [vmem:[%s1 + $0x138] sm:$0xff]
      %v282 = vld [vmem:[%s1 + $0x140] sm:$0xff]
      %v283 = vld [vmem:[%s1 + $0x148] sm:$0xff]
      %v284 = vld [vmem:[%s1 + $0x150] sm:$0xff]
      %v285 = vld [vmem:[%s1 + $0x158] sm:$0xff]
      %v286 = vld [vmem:[%s1 + $0x160] sm:$0xff]
      %v287 = vld [vmem:[%s1 + $0x168] sm:$0xff]
      %v288 = vld [vmem:[%s1 + $0x170] sm:$0xff]
      %v289 = vld [vmem:[%s1 + $0x178] sm:$0xff]
      %v290 = vld [vmem:[%s1 + $0x180] sm:$0xff]
      %v291 = vld [vmem:[%s1 + $0x188] sm:$0xff]
      %v292 = vld [vmem:[%s1 + $0x190] sm:$0xff]
      %v293 = vld [vmem:[%s1 + $0x198] sm:$0xff]
      %v294 = vld [vmem:[%s1 + $0x1a0] sm:$0xff]
      %v295 = vld [vmem:[%s1 + $0x1a8] sm:$0xff]
      %v296 = vld [vmem:[%s1 + $0x1b0] sm:$0xff]
      %v297 = vld [vmem:[%s1 + $0x1b8] sm:$0xff]
      %v298 = vld [vmem:[%s1 + $0x1c0] sm:$0xff]
      %v299 = vld [vmem:[%s1 + $0x1c8] sm:$0xff]
      %v300 = vld [vmem:[%s1 + $0x1d0] sm:$0xff]
      %v301 = vld [vmem:[%s1 + $0x1d8] sm:$0xff]
      %v302 = vld [vmem:[%s1 + $0x1e0] sm:$0xff]
      %v303 = vld [vmem:[%s1 + $0x1e8] sm:$0xff]
      %v304 = vld [vmem:[%s1 + $0x1f0] sm:$0xff]
      %v305 = vld [vmem:[%s1 + $0x1f8] sm:$0xff]
      %v306 = vld [vmem:[%s1 + $0x200] sm:$0xff]
      %v307 = vld [vmem:[%s1 + $0x208] sm:$0xff]
      %v308 = vld [vmem:[%s1 + $0x210] sm:$0xff]
      %v309 = vld [vmem:[%s1 + $0x218] sm:$0xff]
      %v310 = vld [vmem:[%s1 + $0x220] sm:$0xff]
      %v311 = vld [vmem:[%s1 + $0x228] sm:$0xff]
      %v312 = vld [vmem:[%s1 + $0x230] sm:$0xff]
      %v313 = vld [vmem:[%s1 + $0x238] sm:$0xff]
      %v314 = vld [vmem:[%s1 + $0x240] sm:$0xff]
      %v315 = vld [vmem:[%s1 + $0x248] sm:$0xff]
      %v316 = vld [vmem:[%s1 + $0x250] sm:$0xff]
      %v317 = vld [vmem:[%s1 + $0x258] sm:$0xff]
      %v318 = vld [vmem:[%s1 + $0x260] sm:$0xff]
      %v319 = vld [vmem:[%s1 + $0x268] sm:$0xff]
      %v320 = vld [vmem:[%s1 + $0x270] sm:$0xff]
      %v321 = vld [vmem:[%s1 + $0x278] sm:$0xff]
      %v322 = vld [vmem:[%s1 + $0x280] sm:$0xff]
      %v323 = vld [vmem:[%s1 + $0x288] sm:$0xff]
      %v324 = vld [vmem:[%s1 + $0x290] sm:$0xff]
      %v325 = vld [vmem:[%s1 + $0x298] sm:$0xff]
      %v326 = vld [vmem:[%s1 + $0x2a0] sm:$0xff]
      %v327 = vld [vmem:[%s1 + $0x2a8] sm:$0xff]
      %v328 = vld [vmem:[%s1 + $0x2b0] sm:$0xff]
      %v329 = vld [vmem:[%s1 + $0x2b8] sm:$0xff]
      %v330 = vld [vmem:[%s1 + $0x2c0] sm:$0xff]
      %v331 = vld [vmem:[%s1 + $0x2c8] sm:$0xff]
      %v332 = vld [vmem:[%s1 + $0x2d0] sm:$0xff]
      %v333 = vld [vmem:[%s1 + $0x2d8] sm:$0xff]
      %v334 = vld [vmem:[%s1 + $0x2e0] sm:$0xff]
      %v335 = vld [vmem:[%s1 + $0x2e8] sm:$0xff]
      %v336 = vld [vmem:[%s1 + $0x2f0] sm:$0xff]
      %v337 = vld [vmem:[%s1 + $0x2f8] sm:$0xff]
      %v338 = vld [vmem:[%s1 + $0x300] sm:$0xff]
      %v339 = vld [vmem:[%s1 + $0x308] sm:$0xff]
      %v340 = vld [vmem:[%s1 + $0x310] sm:$0xff]
      %v341 = vld [vmem:[%s1 + $0x318] sm:$0xff]
      %v342 = vld [vmem:[%s1 + $0x320] sm:$0xff]
      %v343 = vld [vmem:[%s1 + $0x328] sm:$0xff]
      %v344 = vld [vmem:[%s1 + $0x330] sm:$0xff]
      %v345 = vld [vmem:[%s1 + $0x338] sm:$0xff]
      %v346 = vld [vmem:[%s1 + $0x340] sm:$0xff]
      %v347 = vld [vmem:[%s1 + $0x348] sm:$0xff]
      %v348 = vld [vmem:[%s1 + $0x350] sm:$0xff]
      %v349 = vld [vmem:[%s1 + $0x358] sm:$0xff]
      %v350 = vld [vmem:[%s1 + $0x360] sm:$0xff]
      %v351 = vld [vmem:[%s1 + $0x368] sm:$0xff]
      %v352 = vld [vmem:[%s1 + $0x370] sm:$0xff]
      %v353 = vld [vmem:[%s1 + $0x378] sm:$0xff]
      %v354 = vld [vmem:[%s1 + $0x380] sm:$0xff]
      %v355 = vld [vmem:[%s1 + $0x388] sm:$0xff]
      %v356 = vld [vmem:[%s1 + $0x390] sm:$0xff]
      %v357 = vld [vmem:[%s1 + $0x398] sm:$0xff]
      %v358 = vld [vmem:[%s1 + $0x3a0] sm:$0xff]
      %v359 = vld [vmem:[%s1 + $0x3a8] sm:$0xff]
      %v360 = vld [vmem:[%s1 + $0x3b0] sm:$0xff]
      %v361 = vld [vmem:[%s1 + $0x3b8] sm:$0xff]
      %v362 = vld [vmem:[%s1 + $0x3c0] sm:$0xff]
      %v363 = vld [vmem:[%s1 + $0x3c8] sm:$0xff]
      %v364 = vld [vmem:[%s1 + $0x3d0] sm:$0xff]
      %v365 = vld [vmem:[%s1 + $0x3d8] sm:$0xff]
      %v366 = vld [vmem:[%s1 + $0x3e0] sm:$0xff]
      %v367 = vld [vmem:[%s1 + $0x3e8] sm:$0xff]
      %v368 = vld [vmem:[%s1 + $0x3f0] sm:$0xff]
      %v369 = vld [vmem:[%s1 + $0x3f8] sm:$0xff]
      %v370 = vld [vmem:[%s1 + $0x400] sm:$0xff]
      %v371 = vld [vmem:[%s1 + $0x408] sm:$0xff]
      %v372 = vld [vmem:[%s1 + $0x410] sm:$0xff]
      %v373 = vld [vmem:[%s1 + $0x418] sm:$0xff]
      %v374 = vld [vmem:[%s1 + $0x420] sm:$0xff]
      %v375 = vld [vmem:[%s1 + $0x428] sm:$0xff]
      %v376 = vld [vmem:[%s1 + $0x430] sm:$0xff]
      %v377 = vld [vmem:[%s1 + $0x438] sm:$0xff]
      %v378 = vld [vmem:[%s1 + $0x440] sm:$0xff]
      %v379 = vld [vmem:[%s1 + $0x448] sm:$0xff]
      %v380 = vld [vmem:[%s1 + $0x450] sm:$0xff]
      %v381 = vld [vmem:[%s1 + $0x458] sm:$0xff]
      %v382 = vld [vmem:[%s1 + $0x460] sm:$0xff]
      %v383 = vld [vmem:[%s1 + $0x468] sm:$0xff]
      %v384 = vld [vmem:[%s1 + $0x470] sm:$0xff]
      %v385 = vld [vmem:[%s1 + $0x478] sm:$0xff]
      %v386 = vld [vmem:[%s1 + $0x480] sm:$0xff]
      %v387 = vld [vmem:[%s1 + $0x488] sm:$0xff]
      %v388 = vld [vmem:[%s1 + $0x490] sm:$0xff]
      %v389 = vld [vmem:[%s1 + $0x498] sm:$0xff]
      %v390 = vld [vmem:[%s1 + $0x4a0] sm:$0xff]
      %v391 = vld [vmem:[%s1 + $0x4a8] sm:$0xff]
      %v392 = vld [vmem:[%s1 + $0x4b0] sm:$0xff]
      %v393 = vld [vmem:[%s1 + $0x4b8] sm:$0xff]
      %v394 = vld [vmem:[%s1 + $0x4c0] sm:$0xff]
      %v395 = vld [vmem:[%s1 + $0x4c8] sm:$0xff]
      %v396 = vld [vmem:[%s1 + $0x4d0] sm:$0xff]
      %v397 = vld [vmem:[%s1 + $0x4d8] sm:$0xff]
      %v398 = vld [vmem:[%s1 + $0x4e0] sm:$0xff]
      %v399 = vld [vmem:[%s1 + $0x4e8] sm:$0xff]
      %v400 = vld [vmem:[%s1 + $0x4f0] sm:$0xff]
      %v401 = vld [vmem:[%s1 + $0x4f8] sm:$0xff]
      %v402 = vld [vmem:[%s1 + $0x500] sm:$0xff]
      %v403 = vld [vmem:[%s1 + $0x508] sm:$0xff]
      %v404 = vld [vmem:[%s1 + $0x510] sm:$0xff]
      %v405 = vld [vmem:[%s1 + $0x518] sm:$0xff]
      %v406 = vld [vmem:[%s1 + $0x520] sm:$0xff]
      %v407 = vld [vmem:[%s1 + $0x528] sm:$0xff]
      %v408 = vld [vmem:[%s1 + $0x530] sm:$0xff]
      %v409 = vld [vmem:[%s1 + $0x538] sm:$0xff]
      %v410 = vld [vmem:[%s1 + $0x540] sm:$0xff]
      %v411 = vld [vmem:[%s1 + $0x548] sm:$0xff]
      %v412 = vld [vmem:[%s1 + $0x550] sm:$0xff]
      %v413 = vld [vmem:[%s1 + $0x558] sm:$0xff]
      %v414 = vld [vmem:[%s1 + $0x560] sm:$0xff]
      %v415 = vld [vmem:[%s1 + $0x568] sm:$0xff]
      %v416 = vld [vmem:[%s1 + $0x570] sm:$0xff]
      %v417 = vld [vmem:[%s1 + $0x578] sm:$0xff]
      %v418 = vld [vmem:[%s1 + $0x580] sm:$0xff]
      %v419 = vld [vmem:[%s1 + $0x588] sm:$0xff]
      %v420 = vld [vmem:[%s1 + $0x590] sm:$0xff]
      %v421 = vld [vmem:[%s1 + $0x598] sm:$0xff]
      %v422 = vld [vmem:[%s1 + $0x5a0] sm:$0xff]
      %v423 = vld [vmem:[%s1 + $0x5a8] sm:$0xff]
      %v424 = vld [vmem:[%s1 + $0x5b0] sm:$0xff]
      %v425 = vld [vmem:[%s1 + $0x5b8] sm:$0xff]
      %v426 = vld [vmem:[%s1 + $0x5c0] sm:$0xff]
      %v427 = vld [vmem:[%s1 + $0x5c8] sm:$0xff]
      %v428 = vld [vmem:[%s1 + $0x5d0] sm:$0xff]
      %v429 = vld [vmem:[%s1 + $0x5d8] sm:$0xff]
      %v430 = vld [vmem:[%s1 + $0x5e0] sm:$0xff]
      %v431 = vld [vmem:[%s1 + $0x5e8] sm:$0xff]
      %v432 = vld [vmem:[%s1 + $0x5f0] sm:$0xff]
      %v433 = vld [vmem:[%s1 + $0x5f8] sm:$0xff]
      %v434 = vld [vmem:[%s1 + $0x600] sm:$0xff]
      %v435 = vld [vmem:[%s1 + $0x608] sm:$0xff]
      %v436 = vld [vmem:[%s1 + $0x610] sm:$0xff]
      %v437 = vld [vmem:[%s1 + $0x618] sm:$0xff]
      %v438 = vld [vmem:[%s1 + $0x620] sm:$0xff]
      %v439 = vld [vmem:[%s1 + $0x628] sm:$0xff]
      %v440 = vld [vmem:[%s1 + $0x630] sm:$0xff]
      %v441 = vld [vmem:[%s1 + $0x638] sm:$0xff]
      %v442 = vld [vmem:[%s1 + $0x640] sm:$0xff]
      %v443 = vld [vmem:[%s1 + $0x648] sm:$0xff]
      %v444 = vld [vmem:[%s1 + $0x650] sm:$0xff]
      %v445 = vld [vmem:[%s1 + $0x658] sm:$0xff]
      %v446 = vld [vmem:[%s1 + $0x660] sm:$0xff]
      %v447 = vld [vmem:[%s1 + $0x668] sm:$0xff]
      %v448 = vld [vmem:[%s1 + $0x670] sm:$0xff]
      %v449 = vld [vmem:[%s1 + $0x678] sm:$0xff]
      %v450 = vld [vmem:[%s1 + $0x680] sm:$0xff]
      %v451 = vld [vmem:[%s1 + $0x688] sm:$0xff]
      %v452 = vld [vmem:[%s1 + $0x690] sm:$0xff]
      %v453 = vld [vmem:[%s1 + $0x698] sm:$0xff]
      %v454 = vld [vmem:[%s1 + $0x6a0] sm:$0xff]
      %v455 = vld [vmem:[%s1 + $0x6a8] sm:$0xff]
      %v456 = vld [vmem:[%s1 + $0x6b0] sm:$0xff]
      %v457 = vld [vmem:[%s1 + $0x6b8] sm:$0xff]
      %v458 = vld [vmem:[%s1 + $0x6c0] sm:$0xff]
      %v459 = vld [vmem:[%s1 + $0x6c8] sm:$0xff]
      %v460 = vld [vmem:[%s1 + $0x6d0] sm:$0xff]
      %v461 = vld [vmem:[%s1 + $0x6d8] sm:$0xff]
      %v462 = vld [vmem:[%s1 + $0x6e0] sm:$0xff]
      %v463 = vld [vmem:[%s1 + $0x6e8] sm:$0xff]
      %v464 = vld [vmem:[%s1 + $0x6f0] sm:$0xff]
      %v465 = vld [vmem:[%s1 + $0x6f8] sm:$0xff]
      %v466 = vld [vmem:[%s1 + $0x700] sm:$0xff]
      %v467 = vld [vmem:[%s1 + $0x708] sm:$0xff]
      %v468 = vld [vmem:[%s1 + $0x710] sm:$0xff]
      %v469 = vld [vmem:[%s1 + $0x718] sm:$0xff]
      %v470 = vld [vmem:[%s1 + $0x720] sm:$0xff]
      %v471 = vld [vmem:[%s1 + $0x728] sm:$0xff]
      %v472 = vld [vmem:[%s1 + $0x730] sm:$0xff]
      %v473 = vld [vmem:[%s1 + $0x738] sm:$0xff]
      %v474 = vld [vmem:[%s1 + $0x740] sm:$0xff]
      %v475 = vld [vmem:[%s1 + $0x748] sm:$0xff]
      %v476 = vld [vmem:[%s1 + $0x750] sm:$0xff]
      %v477 = vld [vmem:[%s1 + $0x758] sm:$0xff]
      %v478 = vld [vmem:[%s1 + $0x760] sm:$0xff]
      %v479 = vld [vmem:[%s1 + $0x768] sm:$0xff]
      %v480 = vld [vmem:[%s1 + $0x770] sm:$0xff]
      %v481 = vld [vmem:[%s1 + $0x778] sm:$0xff]
      %v482 = vld [vmem:[%s1 + $0x780] sm:$0xff]
      %v483 = vld [vmem:[%s1 + $0x788] sm:$0xff]
      %v484 = vld [vmem:[%s1 + $0x790] sm:$0xff]
      %v485 = vld [vmem:[%s1 + $0x798] sm:$0xff]
      %v486 = vld [vmem:[%s1 + $0x7a0] sm:$0xff]
      %v487 = vld [vmem:[%s1 + $0x7a8] sm:$0xff]
      %v488 = vld [vmem:[%s1 + $0x7b0] sm:$0xff]
      %v489 = vld [vmem:[%s1 + $0x7b8] sm:$0xff]
      %v490 = vld [vmem:[%s1 + $0x7c0] sm:$0xff]
      %v491 = vld [vmem:[%s1 + $0x7c8] sm:$0xff]
      %v492 = vld [vmem:[%s1 + $0x7d0] sm:$0xff]
      %v493 = vld [vmem:[%s1 + $0x7d8] sm:$0xff]
      %v494 = vld [vmem:[%s1 + $0x7e0] sm:$0xff]
      %v495 = vld [vmem:[%s1 + $0x7e8] sm:$0xff]
      %v496 = vld [vmem:[%s1 + $0x7f0] sm:$0xff]
      %v497 = vld [vmem:[%s1 + $0x7f8] sm:$0xff]
      %v498 = vld [vmem:[%s1 + $0x800] sm:$0xff]
      %v499 = vld [vmem:[%s1 + $0x808] sm:$0xff]
      %v500 = vld [vmem:[%s1 + $0x810] sm:$0xff]
      %v501 = vld [vmem:[%s1 + $0x818] sm:$0xff]
      %v502 = vld [vmem:[%s1 + $0x820] sm:$0xff]
      %v503 = vld [vmem:[%s1 + $0x828] sm:$0xff]
      %v504 = vld [vmem:[%s1 + $0x830] sm:$0xff]
      %v505 = vld [vmem:[%s1 + $0x838] sm:$0xff]
      %v506 = vld [vmem:[%s1 + $0x840] sm:$0xff]
      %v507 = vld [vmem:[%s1 + $0x848] sm:$0xff]
      %v508 = vld [vmem:[%s1 + $0x850] sm:$0xff]
      %v509 = vld [vmem:[%s1 + $0x858] sm:$0xff]
      %v510 = vld [vmem:[%s1 + $0x860] sm:$0xff]
      %v511 = vld [vmem:[%s1 + $0x868] sm:$0xff]
      %v512 = vld [vmem:[%s1 + $0x870] sm:$0xff]
      %v513 = vld [vmem:[%s1 + $0x878] sm:$0xff]
      %v514 = vld [vmem:[%s1 + $0x880] sm:$0xff]
      %v515 = vld [vmem:[%s1 + $0x888] sm:$0xff]
      %v516 = vld [vmem:[%s1 + $0x890] sm:$0xff]
      %v517 = vld [vmem:[%s1 + $0x898] sm:$0xff]
      %v518 = vld [vmem:[%s1 + $0x8a0] sm:$0xff]
      %v519 = vld [vmem:[%s1 + $0x8a8] sm:$0xff]
      %v520 = vld [vmem:[%s1 + $0x8b0] sm:$0xff]
      %v521 = vld [vmem:[%s1 + $0x8b8] sm:$0xff]
      %v522 = vld [vmem:[%s1 + $0x8c0] sm:$0xff]
      %v523 = vld [vmem:[%s1 + $0x8c8] sm:$0xff]
      %v524 = vld [vmem:[%s1 + $0x8d0] sm:$0xff]
      %v525 = vld [vmem:[%s1 + $0x8d8] sm:$0xff]
      %v526 = vld [vmem:[%s1 + $0x8e0] sm:$0xff]
      %v527 = vld [vmem:[%s1 + $0x8e8] sm:$0xff]
      %v528 = vld [vmem:[%s1 + $0x8f0] sm:$0xff]
      %v529 = vld [vmem:[%s1 + $0x8f8] sm:$0xff]
      %v530 = vld [vmem:[%s1 + $0x900] sm:$0xff]
      %v531 = vld [vmem:[%s1 + $0x908] sm:$0xff]
      %v532 = vld [vmem:[%s1 + $0x910] sm:$0xff]
      %v533 = vld [vmem:[%s1 + $0x918] sm:$0xff]
      %v534 = vld [vmem:[%s1 + $0x920] sm:$0xff]
      %v535 = vld [vmem:[%s1 + $0x928] sm:$0xff]
      %v536 = vld [vmem:[%s1 + $0x930] sm:$0xff]
      %v537 = vld [vmem:[%s1 + $0x938] sm:$0xff]
      %v538 = vld [vmem:[%s1 + $0x940] sm:$0xff]
      %v539 = vld [vmem:[%s1 + $0x948] sm:$0xff]
      %v540 = vld [vmem:[%s1 + $0x950] sm:$0xff]
      %v541 = vld [vmem:[%s1 + $0x958] sm:$0xff]
      %v542 = vld [vmem:[%s1 + $0x960] sm:$0xff]
      %v543 = vld [vmem:[%s1 + $0x968] sm:$0xff]
      %v544 = vld [vmem:[%s1 + $0x970] sm:$0xff]
      %v545 = vld [vmem:[%s1 + $0x978] sm:$0xff]
      %v546 = vld [vmem:[%s2] sm:$0x3]
      %v548 = vlaneseq
      %v549 = vshrl.u32 %v548, 7
      %v550 = vsub.s32 0, %v549
      %v551 = vrot.slane %v546, %v550
      %v552 = vlaneseq
      %v553 = vshrl.u32 %v552, 7
      %v554 = vsub.s32 1, %v553
      %v555 = vrot.slane %v546, %v554
      %v628 = vunpack.c.l.b16 %v172
      %v629 = vunpack.c.h.b16 %v172
      %v630 = vunpack.c.l.b16 %v173
      %v631 = vunpack.c.h.b16 %v173
      %v632 = vunpack.c.l.b16 %v174
      %v633 = vunpack.c.h.b16 %v174
      %v634 = vunpack.c.l.b16 %v175
      %v635 = vunpack.c.h.b16 %v175
      %v636 = vunpack.c.l.b16 %v176
      %v637 = vunpack.c.h.b16 %v176
      %v638 = vunpack.c.l.b16 %v177
      %v639 = vunpack.c.h.b16 %v177
      %v640 = vunpack.c.l.b16 %v178
      %v641 = vunpack.c.h.b16 %v178
      %v642 = vunpack.c.l.b16 %v179
      %v643 = vunpack.c.h.b16 %v179
      %v644 = vunpack.c.l.b16 %v180
      %v645 = vunpack.c.h.b16 %v180
      %v646 = vunpack.c.l.b16 %v181
      %v647 = vunpack.c.l.b16 %v182
      %v648 = vunpack.c.h.b16 %v182
      %v649 = vunpack.c.l.b16 %v183
      %v650 = vunpack.c.h.b16 %v183
      %v651 = vunpack.c.l.b16 %v184
      %v652 = vunpack.c.h.b16 %v184
      %v653 = vunpack.c.l.b16 %v185
      %v654 = vunpack.c.h.b16 %v185
      %v655 = vunpack.c.l.b16 %v186
      %v656 = vunpack.c.h.b16 %v186
      %v657 = vunpack.c.l.b16 %v187
      %v658 = vunpack.c.h.b16 %v187
      %v659 = vunpack.c.l.b16 %v188
      %v660 = vunpack.c.h.b16 %v188
      %v661 = vunpack.c.l.b16 %v189
      %v662 = vunpack.c.h.b16 %v189
      %v663 = vunpack.c.l.b16 %v190
      %v664 = vunpack.c.h.b16 %v190
      %v665 = vunpack.c.l.b16 %v191
      %v666 = vunpack.c.l.b16 %v192
      %v667 = vunpack.c.h.b16 %v192
      %v668 = vunpack.c.l.b16 %v193
      %v669 = vunpack.c.h.b16 %v193
      %v670 = vunpack.c.l.b16 %v194
      %v671 = vunpack.c.h.b16 %v194
      %v672 = vunpack.c.l.b16 %v195
      %v673 = vunpack.c.h.b16 %v195
      %v674 = vunpack.c.l.b16 %v196
      %v675 = vunpack.c.h.b16 %v196
      %v676 = vunpack.c.l.b16 %v197
      %v677 = vunpack.c.h.b16 %v197
      %v678 = vunpack.c.l.b16 %v198
      %v679 = vunpack.c.h.b16 %v198
      %v680 = vunpack.c.l.b16 %v199
      %v681 = vunpack.c.h.b16 %v199
      %v682 = vunpack.c.l.b16 %v200
      %v683 = vunpack.c.h.b16 %v200
      %v684 = vunpack.c.l.b16 %v201
      %v685 = vunpack.c.l.b16 %v202
      %v686 = vunpack.c.h.b16 %v202
      %v687 = vunpack.c.l.b16 %v203
      %v688 = vunpack.c.h.b16 %v203
      %v689 = vunpack.c.l.b16 %v204
      %v690 = vunpack.c.h.b16 %v204
      %v691 = vunpack.c.l.b16 %v205
      %v692 = vunpack.c.h.b16 %v205
      %v693 = vunpack.c.l.b16 %v206
      %v694 = vunpack.c.h.b16 %v206
      %v695 = vunpack.c.l.b16 %v207
      %v696 = vunpack.c.h.b16 %v207
      %v697 = vunpack.c.l.b16 %v208
      %v698 = vunpack.c.h.b16 %v208
      %v699 = vunpack.c.l.b16 %v209
      %v700 = vunpack.c.h.b16 %v209
      %v701 = vunpack.c.l.b16 %v210
      %v702 = vunpack.c.h.b16 %v210
      %v703 = vunpack.c.l.b16 %v211
      %v704 = vunpack.c.l.b16 %v212
      %v705 = vunpack.c.h.b16 %v212
      %v706 = vunpack.c.l.b16 %v213
      %v707 = vunpack.c.h.b16 %v213
      %v708 = vunpack.c.l.b16 %v214
      %v709 = vunpack.c.h.b16 %v214
      %v710 = vunpack.c.l.b16 %v215
      %v711 = vunpack.c.h.b16 %v215
      %v712 = vunpack.c.l.b16 %v216
      %v713 = vunpack.c.h.b16 %v216
      %v714 = vunpack.c.l.b16 %v217
      %v715 = vunpack.c.h.b16 %v217
      %v716 = vunpack.c.l.b16 %v218
      %v717 = vunpack.c.h.b16 %v218
      %v718 = vunpack.c.l.b16 %v219
      %v719 = vunpack.c.h.b16 %v219
      %v720 = vunpack.c.l.b16 %v220
      %v721 = vunpack.c.h.b16 %v220
      %v722 = vunpack.c.l.b16 %v221
      %v723 = vunpack.c.l.b16 %v222
      %v724 = vunpack.c.h.b16 %v222
      %v725 = vunpack.c.l.b16 %v223
      %v726 = vunpack.c.h.b16 %v223
      %v727 = vunpack.c.l.b16 %v224
      %v728 = vunpack.c.h.b16 %v224
      %v729 = vunpack.c.l.b16 %v225
      %v730 = vunpack.c.h.b16 %v225
      %v731 = vunpack.c.l.b16 %v226
      %v732 = vunpack.c.h.b16 %v226
      %v733 = vunpack.c.l.b16 %v227
      %v734 = vunpack.c.h.b16 %v227
      %v735 = vunpack.c.l.b16 %v228
      %v736 = vunpack.c.h.b16 %v228
      %v737 = vunpack.c.l.b16 %v229
      %v738 = vunpack.c.h.b16 %v229
      %v739 = vunpack.c.l.b16 %v230
      %v740 = vunpack.c.h.b16 %v230
      %v741 = vunpack.c.l.b16 %v231
      %v742 = vunpack.c.l.b16 %v232
      %v743 = vunpack.c.h.b16 %v232
      %v744 = vunpack.c.l.b16 %v233
      %v745 = vunpack.c.h.b16 %v233
      %v746 = vunpack.c.l.b16 %v234
      %v747 = vunpack.c.h.b16 %v234
      %v748 = vunpack.c.l.b16 %v235
      %v749 = vunpack.c.h.b16 %v235
      %v750 = vunpack.c.l.b16 %v236
      %v751 = vunpack.c.h.b16 %v236
      %v752 = vunpack.c.l.b16 %v237
      %v753 = vunpack.c.h.b16 %v237
      %v754 = vunpack.c.l.b16 %v238
      %v755 = vunpack.c.h.b16 %v238
      %v756 = vunpack.c.l.b16 %v239
      %v757 = vunpack.c.h.b16 %v239
      %v758 = vunpack.c.l.b16 %v240
      %v759 = vunpack.c.h.b16 %v240
      %v760 = vunpack.c.l.b16 %v241
      %v761 = vpack.c.b16 %v647, %v628
      %v762 = vpack.c.b16 %v648, %v629
      %v763 = vpack.c.b16 %v649, %v630
      %v764 = vpack.c.b16 %v650, %v631
      %v765 = vpack.c.b16 %v651, %v632
      %v766 = vpack.c.b16 %v652, %v633
      %v767 = vpack.c.b16 %v653, %v634
      %v768 = vpack.c.b16 %v654, %v635
      %v769 = vpack.c.b16 %v655, %v636
      %v770 = vpack.c.b16 %v656, %v637
      %v771 = vpack.c.b16 %v657, %v638
      %v772 = vpack.c.b16 %v658, %v639
      %v773 = vpack.c.b16 %v659, %v640
      %v774 = vpack.c.b16 %v660, %v641
      %v775 = vpack.c.b16 %v661, %v642
      %v776 = vpack.c.b16 %v662, %v643
      %v777 = vpack.c.b16 %v663, %v644
      %v778 = vpack.c.b16 %v664, %v645
      %v779 = vpack.c.b16 %v665, %v646
      %v780 = vpack.c.b16 %v685, %v666
      %v781 = vpack.c.b16 %v686, %v667
      %v782 = vpack.c.b16 %v687, %v668
      %v783 = vpack.c.b16 %v688, %v669
      %v784 = vpack.c.b16 %v689, %v670
      %v785 = vpack.c.b16 %v690, %v671
      %v786 = vpack.c.b16 %v691, %v672
      %v787 = vpack.c.b16 %v692, %v673
      %v788 = vpack.c.b16 %v693, %v674
      %v789 = vpack.c.b16 %v694, %v675
      %v790 = vpack.c.b16 %v695, %v676
      %v791 = vpack.c.b16 %v696, %v677
      %v792 = vpack.c.b16 %v697, %v678
      %v793 = vpack.c.b16 %v698, %v679
      %v794 = vpack.c.b16 %v699, %v680
      %v795 = vpack.c.b16 %v700, %v681
      %v796 = vpack.c.b16 %v701, %v682
      %v797 = vpack.c.b16 %v702, %v683
      %v798 = vpack.c.b16 %v703, %v684
      %v799 = vpack.c.b16 %v723, %v704
      %v800 = vpack.c.b16 %v724, %v705
      %v801 = vpack.c.b16 %v725, %v706
      %v802 = vpack.c.b16 %v726, %v707
      %v803 = vpack.c.b16 %v727, %v708
      %v804 = vpack.c.b16 %v728, %v709
      %v805 = vpack.c.b16 %v729, %v710
      %v806 = vpack.c.b16 %v730, %v711
      %v807 = vpack.c.b16 %v731, %v712
      %v808 = vpack.c.b16 %v732, %v713
      %v809 = vpack.c.b16 %v733, %v714
      %v810 = vpack.c.b16 %v734, %v715
      %v811 = vpack.c.b16 %v735, %v716
      %v812 = vpack.c.b16 %v736, %v717
      %v813 = vpack.c.b16 %v737, %v718
      %v814 = vpack.c.b16 %v738, %v719
      %v815 = vpack.c.b16 %v739, %v720
      %v816 = vpack.c.b16 %v740, %v721
      %v817 = vpack.c.b16 %v741, %v722
      %v818 = vpack.c.b16 %v742, %v742
      %v819 = vpack.c.b16 %v743, %v743
      %v820 = vpack.c.b16 %v744, %v744
      %v821 = vpack.c.b16 %v745, %v745
      %v822 = vpack.c.b16 %v746, %v746
      %v823 = vpack.c.b16 %v747, %v747
      %v824 = vpack.c.b16 %v748, %v748
      %v825 = vpack.c.b16 %v749, %v749
      %v826 = vpack.c.b16 %v750, %v750
      %v827 = vpack.c.b16 %v751, %v751
      %v828 = vpack.c.b16 %v752, %v752
      %v829 = vpack.c.b16 %v753, %v753
      %v830 = vpack.c.b16 %v754, %v754
      %v831 = vpack.c.b16 %v755, %v755
      %v832 = vpack.c.b16 %v756, %v756
      %v833 = vpack.c.b16 %v757, %v757
      %v834 = vpack.c.b16 %v758, %v758
      %v835 = vpack.c.b16 %v759, %v759
      %v836 = vpack.c.b16 %v760, %v760
      %v1217 = vunpack.c.l.b16 %v242
      %v1218 = vunpack.c.h.b16 %v242
      %v1219 = vunpack.c.l.b16 %v243
      %v1220 = vunpack.c.h.b16 %v243
      %v1221 = vunpack.c.l.b16 %v244
      %v1222 = vunpack.c.h.b16 %v244
      %v1223 = vunpack.c.l.b16 %v245
      %v1224 = vunpack.c.h.b16 %v245
      %v1225 = vunpack.c.l.b16 %v246
      %v1226 = vunpack.c.h.b16 %v246
      %v1227 = vunpack.c.l.b16 %v247
      %v1228 = vunpack.c.h.b16 %v247
      %v1229 = vunpack.c.l.b16 %v248
      %v1230 = vunpack.c.h.b16 %v248
      %v1231 = vunpack.c.l.b16 %v249
      %v1232 = vunpack.c.h.b16 %v249
      %v1233 = vunpack.c.l.b16 %v250
      %v1234 = vunpack.c.h.b16 %v250
      %v1235 = vunpack.c.l.b16 %v251
      %v1236 = vunpack.c.h.b16 %v251
      %v1237 = vunpack.c.l.b16 %v252
      %v1238 = vunpack.c.h.b16 %v252
      %v1239 = vunpack.c.l.b16 %v253
      %v1240 = vunpack.c.h.b16 %v253
      %v1241 = vunpack.c.l.b16 %v254
      %v1242 = vunpack.c.h.b16 %v254
      %v1243 = vunpack.c.l.b16 %v255
      %v1244 = vunpack.c.h.b16 %v255
      %v1245 = vunpack.c.l.b16 %v256
      %v1246 = vunpack.c.h.b16 %v256
      %v1247 = vunpack.c.l.b16 %v257
      %v1248 = vunpack.c.h.b16 %v257
      %v1249 = vunpack.c.l.b16 %v258
      %v1250 = vunpack.c.h.b16 %v258
      %v1251 = vunpack.c.l.b16 %v259
      %v1252 = vunpack.c.h.b16 %v259
      %v1253 = vunpack.c.l.b16 %v260
      %v1254 = vunpack.c.h.b16 %v260
      %v1255 = vunpack.c.l.b16 %v261
      %v1256 = vunpack.c.h.b16 %v261
      %v1257 = vunpack.c.l.b16 %v262
      %v1258 = vunpack.c.h.b16 %v262
      %v1259 = vunpack.c.l.b16 %v263
      %v1260 = vunpack.c.h.b16 %v263
      %v1261 = vunpack.c.l.b16 %v264
      %v1262 = vunpack.c.h.b16 %v264
      %v1263 = vunpack.c.l.b16 %v265
      %v1264 = vunpack.c.h.b16 %v265
      %v1265 = vunpack.c.l.b16 %v266
      %v1266 = vunpack.c.h.b16 %v266
      %v1267 = vunpack.c.l.b16 %v267
      %v1268 = vunpack.c.h.b16 %v267
      %v1269 = vunpack.c.l.b16 %v268
      %v1270 = vunpack.c.h.b16 %v268
      %v1271 = vunpack.c.l.b16 %v269
      %v1272 = vunpack.c.h.b16 %v269
      %v1273 = vunpack.c.l.b16 %v270
      %v1274 = vunpack.c.h.b16 %v270
      %v1275 = vunpack.c.l.b16 %v271
      %v1276 = vunpack.c.h.b16 %v271
      %v1277 = vunpack.c.l.b16 %v272
      %v1278 = vunpack.c.h.b16 %v272
      %v1279 = vunpack.c.l.b16 %v273
      %v1280 = vunpack.c.h.b16 %v273
      %v1281 = vunpack.c.l.b16 %v274
      %v1282 = vunpack.c.h.b16 %v274
      %v1283 = vunpack.c.l.b16 %v275
      %v1284 = vunpack.c.h.b16 %v275
      %v1285 = vunpack.c.l.b16 %v276
      %v1286 = vunpack.c.h.b16 %v276
      %v1287 = vunpack.c.l.b16 %v277
      %v1288 = vunpack.c.h.b16 %v277
      %v1289 = vunpack.c.l.b16 %v278
      %v1290 = vunpack.c.h.b16 %v278
      %v1291 = vunpack.c.l.b16 %v279
      %v1292 = vunpack.c.h.b16 %v279
      %v1293 = vunpack.c.l.b16 %v280
      %v1294 = vunpack.c.h.b16 %v280
      %v1295 = vunpack.c.l.b16 %v281
      %v1296 = vunpack.c.h.b16 %v281
      %v1297 = vunpack.c.l.b16 %v282
      %v1298 = vunpack.c.h.b16 %v282
      %v1299 = vunpack.c.l.b16 %v283
      %v1300 = vunpack.c.h.b16 %v283
      %v1301 = vunpack.c.l.b16 %v284
      %v1302 = vunpack.c.h.b16 %v284
      %v1303 = vunpack.c.l.b16 %v285
      %v1304 = vunpack.c.h.b16 %v285
      %v1305 = vunpack.c.l.b16 %v286
      %v1306 = vunpack.c.h.b16 %v286
      %v1307 = vunpack.c.l.b16 %v287
      %v1308 = vunpack.c.h.b16 %v287
      %v1309 = vunpack.c.l.b16 %v288
      %v1310 = vunpack.c.h.b16 %v288
      %v1311 = vunpack.c.l.b16 %v289
      %v1312 = vunpack.c.h.b16 %v289
      %v1313 = vunpack.c.l.b16 %v290
      %v1314 = vunpack.c.h.b16 %v290
      %v1315 = vunpack.c.l.b16 %v291
      %v1316 = vunpack.c.h.b16 %v291
      %v1317 = vunpack.c.l.b16 %v292
      %v1318 = vunpack.c.h.b16 %v292
      %v1319 = vunpack.c.l.b16 %v293
      %v1320 = vunpack.c.h.b16 %v293
      %v1321 = vunpack.c.l.b16 %v294
      %v1322 = vunpack.c.h.b16 %v294
      %v1323 = vunpack.c.l.b16 %v295
      %v1324 = vunpack.c.h.b16 %v295
      %v1325 = vunpack.c.l.b16 %v296
      %v1326 = vunpack.c.h.b16 %v296
      %v1327 = vunpack.c.l.b16 %v297
      %v1328 = vunpack.c.h.b16 %v297
      %v1329 = vunpack.c.l.b16 %v298
      %v1330 = vunpack.c.h.b16 %v298
      %v1331 = vunpack.c.l.b16 %v299
      %v1332 = vunpack.c.h.b16 %v299
      %v1333 = vunpack.c.l.b16 %v300
      %v1334 = vunpack.c.h.b16 %v300
      %v1335 = vunpack.c.l.b16 %v301
      %v1336 = vunpack.c.h.b16 %v301
      %v1337 = vunpack.c.l.b16 %v302
      %v1338 = vunpack.c.h.b16 %v302
      %v1339 = vunpack.c.l.b16 %v303
      %v1340 = vunpack.c.h.b16 %v303
      %v1341 = vunpack.c.l.b16 %v304
      %v1342 = vunpack.c.h.b16 %v304
      %v1343 = vunpack.c.l.b16 %v305
      %v1344 = vunpack.c.h.b16 %v305
      %v1345 = vunpack.c.l.b16 %v306
      %v1346 = vunpack.c.h.b16 %v306
      %v1347 = vunpack.c.l.b16 %v307
      %v1348 = vunpack.c.h.b16 %v307
      %v1349 = vunpack.c.l.b16 %v308
      %v1350 = vunpack.c.h.b16 %v308
      %v1351 = vunpack.c.l.b16 %v309
      %v1352 = vunpack.c.h.b16 %v309
      %v1353 = vunpack.c.l.b16 %v310
      %v1354 = vunpack.c.h.b16 %v310
      %v1355 = vunpack.c.l.b16 %v311
      %v1356 = vunpack.c.h.b16 %v311
      %v1357 = vunpack.c.l.b16 %v312
      %v1358 = vunpack.c.h.b16 %v312
      %v1359 = vunpack.c.l.b16 %v313
      %v1360 = vunpack.c.h.b16 %v313
      %v1361 = vunpack.c.l.b16 %v314
      %v1362 = vunpack.c.h.b16 %v314
      %v1363 = vunpack.c.l.b16 %v315
      %v1364 = vunpack.c.h.b16 %v315
      %v1365 = vunpack.c.l.b16 %v316
      %v1366 = vunpack.c.h.b16 %v316
      %v1367 = vunpack.c.l.b16 %v317
      %v1368 = vunpack.c.h.b16 %v317
      %v1369 = vunpack.c.l.b16 %v318
      %v1370 = vunpack.c.h.b16 %v318
      %v1371 = vunpack.c.l.b16 %v319
      %v1372 = vunpack.c.h.b16 %v319
      %v1373 = vunpack.c.l.b16 %v320
      %v1374 = vunpack.c.h.b16 %v320
      %v1375 = vunpack.c.l.b16 %v321
      %v1376 = vunpack.c.h.b16 %v321
      %v1377 = vunpack.c.l.b16 %v322
      %v1378 = vunpack.c.h.b16 %v322
      %v1379 = vunpack.c.l.b16 %v323
      %v1380 = vunpack.c.h.b16 %v323
      %v1381 = vunpack.c.l.b16 %v324
      %v1382 = vunpack.c.h.b16 %v324
      %v1383 = vunpack.c.l.b16 %v325
      %v1384 = vunpack.c.h.b16 %v325
      %v1385 = vunpack.c.l.b16 %v326
      %v1386 = vunpack.c.h.b16 %v326
      %v1387 = vunpack.c.l.b16 %v327
      %v1388 = vunpack.c.h.b16 %v327
      %v1389 = vunpack.c.l.b16 %v328
      %v1390 = vunpack.c.h.b16 %v328
      %v1391 = vunpack.c.l.b16 %v329
      %v1392 = vunpack.c.h.b16 %v329
      %v1393 = vunpack.c.l.b16 %v330
      %v1394 = vunpack.c.h.b16 %v330
      %v1395 = vunpack.c.l.b16 %v331
      %v1396 = vunpack.c.h.b16 %v331
      %v1397 = vunpack.c.l.b16 %v332
      %v1398 = vunpack.c.h.b16 %v332
      %v1399 = vunpack.c.l.b16 %v333
      %v1400 = vunpack.c.h.b16 %v333
      %v1401 = vunpack.c.l.b16 %v334
      %v1402 = vunpack.c.h.b16 %v334
      %v1403 = vunpack.c.l.b16 %v335
      %v1404 = vunpack.c.h.b16 %v335
      %v1405 = vunpack.c.l.b16 %v336
      %v1406 = vunpack.c.h.b16 %v336
      %v1407 = vunpack.c.l.b16 %v337
      %v1408 = vunpack.c.h.b16 %v337
      %v1409 = vunpack.c.l.b16 %v338
      %v1410 = vunpack.c.h.b16 %v338
      %v1411 = vunpack.c.l.b16 %v339
      %v1412 = vunpack.c.h.b16 %v339
      %v1413 = vunpack.c.l.b16 %v340
      %v1414 = vunpack.c.h.b16 %v340
      %v1415 = vunpack.c.l.b16 %v341
      %v1416 = vunpack.c.h.b16 %v341
      %v1417 = vunpack.c.l.b16 %v342
      %v1418 = vunpack.c.h.b16 %v342
      %v1419 = vunpack.c.l.b16 %v343
      %v1420 = vunpack.c.h.b16 %v343
      %v1421 = vunpack.c.l.b16 %v344
      %v1422 = vunpack.c.h.b16 %v344
      %v1423 = vunpack.c.l.b16 %v345
      %v1424 = vunpack.c.h.b16 %v345
      %v1425 = vunpack.c.l.b16 %v346
      %v1426 = vunpack.c.h.b16 %v346
      %v1427 = vunpack.c.l.b16 %v347
      %v1428 = vunpack.c.h.b16 %v347
      %v1429 = vunpack.c.l.b16 %v348
      %v1430 = vunpack.c.h.b16 %v348
      %v1431 = vunpack.c.l.b16 %v349
      %v1432 = vunpack.c.h.b16 %v349
      %v1433 = vunpack.c.l.b16 %v350
      %v1434 = vunpack.c.h.b16 %v350
      %v1435 = vunpack.c.l.b16 %v351
      %v1436 = vunpack.c.h.b16 %v351
      %v1437 = vunpack.c.l.b16 %v352
      %v1438 = vunpack.c.h.b16 %v352
      %v1439 = vunpack.c.l.b16 %v353
      %v1440 = vunpack.c.h.b16 %v353
      %v1441 = vunpack.c.l.b16 %v354
      %v1442 = vunpack.c.h.b16 %v354
      %v1443 = vunpack.c.l.b16 %v355
      %v1444 = vunpack.c.h.b16 %v355
      %v1445 = vunpack.c.l.b16 %v356
      %v1446 = vunpack.c.h.b16 %v356
      %v1447 = vunpack.c.l.b16 %v357
      %v1448 = vunpack.c.h.b16 %v357
      %v1449 = vunpack.c.l.b16 %v358
      %v1450 = vunpack.c.h.b16 %v358
      %v1451 = vunpack.c.l.b16 %v359
      %v1452 = vunpack.c.h.b16 %v359
      %v1453 = vunpack.c.l.b16 %v360
      %v1454 = vunpack.c.h.b16 %v360
      %v1455 = vunpack.c.l.b16 %v361
      %v1456 = vunpack.c.h.b16 %v361
      %v1457 = vunpack.c.l.b16 %v362
      %v1458 = vunpack.c.h.b16 %v362
      %v1459 = vunpack.c.l.b16 %v363
      %v1460 = vunpack.c.h.b16 %v363
      %v1461 = vunpack.c.l.b16 %v364
      %v1462 = vunpack.c.h.b16 %v364
      %v1463 = vunpack.c.l.b16 %v365
      %v1464 = vunpack.c.h.b16 %v365
      %v1465 = vunpack.c.l.b16 %v366
      %v1466 = vunpack.c.h.b16 %v366
      %v1467 = vunpack.c.l.b16 %v367
      %v1468 = vunpack.c.h.b16 %v367
      %v1469 = vunpack.c.l.b16 %v368
      %v1470 = vunpack.c.h.b16 %v368
      %v1471 = vunpack.c.l.b16 %v369
      %v1472 = vunpack.c.h.b16 %v369
      %v1473 = vunpack.c.l.b16 %v370
      %v1474 = vunpack.c.h.b16 %v370
      %v1475 = vunpack.c.l.b16 %v371
      %v1476 = vunpack.c.h.b16 %v371
      %v1477 = vunpack.c.l.b16 %v372
      %v1478 = vunpack.c.h.b16 %v372
      %v1479 = vunpack.c.l.b16 %v373
      %v1480 = vunpack.c.h.b16 %v373
      %v1481 = vunpack.c.l.b16 %v374
      %v1482 = vunpack.c.h.b16 %v374
      %v1483 = vunpack.c.l.b16 %v375
      %v1484 = vunpack.c.h.b16 %v375
      %v1485 = vunpack.c.l.b16 %v376
      %v1486 = vunpack.c.h.b16 %v376
      %v1487 = vunpack.c.l.b16 %v377
      %v1488 = vunpack.c.h.b16 %v377
      %v1489 = vunpack.c.l.b16 %v378
      %v1490 = vunpack.c.h.b16 %v378
      %v1491 = vunpack.c.l.b16 %v379
      %v1492 = vunpack.c.h.b16 %v379
      %v1493 = vunpack.c.l.b16 %v380
      %v1494 = vunpack.c.h.b16 %v380
      %v1495 = vunpack.c.l.b16 %v381
      %v1496 = vunpack.c.h.b16 %v381
      %v1497 = vunpack.c.l.b16 %v382
      %v1498 = vunpack.c.h.b16 %v382
      %v1499 = vunpack.c.l.b16 %v383
      %v1500 = vunpack.c.h.b16 %v383
      %v1501 = vunpack.c.l.b16 %v384
      %v1502 = vunpack.c.h.b16 %v384
      %v1503 = vunpack.c.l.b16 %v385
      %v1504 = vunpack.c.h.b16 %v385
      %v1505 = vunpack.c.l.b16 %v386
      %v1506 = vunpack.c.h.b16 %v386
      %v1507 = vunpack.c.l.b16 %v387
      %v1508 = vunpack.c.h.b16 %v387
      %v1509 = vunpack.c.l.b16 %v388
      %v1510 = vunpack.c.h.b16 %v388
      %v1511 = vunpack.c.l.b16 %v389
      %v1512 = vunpack.c.h.b16 %v389
      %v1513 = vunpack.c.l.b16 %v390
      %v1514 = vunpack.c.h.b16 %v390
      %v1515 = vunpack.c.l.b16 %v391
      %v1516 = vunpack.c.h.b16 %v391
      %v1517 = vunpack.c.l.b16 %v392
      %v1518 = vunpack.c.h.b16 %v392
      %v1519 = vunpack.c.l.b16 %v393
      %v1520 = vunpack.c.h.b16 %v393
      %v1521 = vunpack.c.l.b16 %v394
      %v1522 = vunpack.c.h.b16 %v394
      %v1523 = vunpack.c.l.b16 %v395
      %v1524 = vunpack.c.h.b16 %v395
      %v1525 = vunpack.c.l.b16 %v396
      %v1526 = vunpack.c.h.b16 %v396
      %v1527 = vunpack.c.l.b16 %v397
      %v1528 = vunpack.c.h.b16 %v397
      %v1529 = vunpack.c.l.b16 %v398
      %v1530 = vunpack.c.h.b16 %v398
      %v1531 = vunpack.c.l.b16 %v399
      %v1532 = vunpack.c.h.b16 %v399
      %v1533 = vunpack.c.l.b16 %v400
      %v1534 = vunpack.c.h.b16 %v400
      %v1535 = vunpack.c.l.b16 %v401
      %v1536 = vunpack.c.h.b16 %v401
      %v1537 = vunpack.c.l.b16 %v402
      %v1538 = vunpack.c.h.b16 %v402
      %v1539 = vunpack.c.l.b16 %v403
      %v1540 = vunpack.c.h.b16 %v403
      %v1541 = vunpack.c.l.b16 %v404
      %v1542 = vunpack.c.h.b16 %v404
      %v1543 = vunpack.c.l.b16 %v405
      %v1544 = vunpack.c.h.b16 %v405
      %v1545 = vunpack.c.l.b16 %v406
      %v1546 = vunpack.c.h.b16 %v406
      %v1547 = vunpack.c.l.b16 %v407
      %v1548 = vunpack.c.h.b16 %v407
      %v1549 = vunpack.c.l.b16 %v408
      %v1550 = vunpack.c.h.b16 %v408
      %v1551 = vunpack.c.l.b16 %v409
      %v1552 = vunpack.c.h.b16 %v409
      %v1553 = vunpack.c.l.b16 %v410
      %v1554 = vunpack.c.h.b16 %v410
      %v1555 = vunpack.c.l.b16 %v411
      %v1556 = vunpack.c.h.b16 %v411
      %v1557 = vunpack.c.l.b16 %v412
      %v1558 = vunpack.c.h.b16 %v412
      %v1559 = vunpack.c.l.b16 %v413
      %v1560 = vunpack.c.h.b16 %v413
      %v1561 = vunpack.c.l.b16 %v414
      %v1562 = vunpack.c.h.b16 %v414
      %v1563 = vunpack.c.l.b16 %v415
      %v1564 = vunpack.c.h.b16 %v415
      %v1565 = vunpack.c.l.b16 %v416
      %v1566 = vunpack.c.h.b16 %v416
      %v1567 = vunpack.c.l.b16 %v417
      %v1568 = vunpack.c.h.b16 %v417
      %v1569 = vunpack.c.l.b16 %v418
      %v1570 = vunpack.c.h.b16 %v418
      %v1571 = vunpack.c.l.b16 %v419
      %v1572 = vunpack.c.h.b16 %v419
      %v1573 = vunpack.c.l.b16 %v420
      %v1574 = vunpack.c.h.b16 %v420
      %v1575 = vunpack.c.l.b16 %v421
      %v1576 = vunpack.c.h.b16 %v421
      %v1577 = vunpack.c.l.b16 %v422
      %v1578 = vunpack.c.h.b16 %v422
      %v1579 = vunpack.c.l.b16 %v423
      %v1580 = vunpack.c.h.b16 %v423
      %v1581 = vunpack.c.l.b16 %v424
      %v1582 = vunpack.c.h.b16 %v424
      %v1583 = vunpack.c.l.b16 %v425
      %v1584 = vunpack.c.h.b16 %v425
      %v1585 = vunpack.c.l.b16 %v426
      %v1586 = vunpack.c.h.b16 %v426
      %v1587 = vunpack.c.l.b16 %v427
      %v1588 = vunpack.c.h.b16 %v427
      %v1589 = vunpack.c.l.b16 %v428
      %v1590 = vunpack.c.h.b16 %v428
      %v1591 = vunpack.c.l.b16 %v429
      %v1592 = vunpack.c.h.b16 %v429
      %v1593 = vunpack.c.l.b16 %v430
      %v1594 = vunpack.c.h.b16 %v430
      %v1595 = vunpack.c.l.b16 %v431
      %v1596 = vunpack.c.h.b16 %v431
      %v1597 = vunpack.c.l.b16 %v432
      %v1598 = vunpack.c.h.b16 %v432
      %v1599 = vunpack.c.l.b16 %v433
      %v1600 = vunpack.c.h.b16 %v433
      %v1601 = vunpack.c.l.b16 %v434
      %v1602 = vunpack.c.h.b16 %v434
      %v1603 = vunpack.c.l.b16 %v435
      %v1604 = vunpack.c.h.b16 %v435
      %v1605 = vunpack.c.l.b16 %v436
      %v1606 = vunpack.c.h.b16 %v436
      %v1607 = vunpack.c.l.b16 %v437
      %v1608 = vunpack.c.h.b16 %v437
      %v1609 = vunpack.c.l.b16 %v438
      %v1610 = vunpack.c.h.b16 %v438
      %v1611 = vunpack.c.l.b16 %v439
      %v1612 = vunpack.c.h.b16 %v439
      %v1613 = vunpack.c.l.b16 %v440
      %v1614 = vunpack.c.h.b16 %v440
      %v1615 = vunpack.c.l.b16 %v441
      %v1616 = vunpack.c.h.b16 %v441
      %v1617 = vunpack.c.l.b16 %v442
      %v1618 = vunpack.c.h.b16 %v442
      %v1619 = vunpack.c.l.b16 %v443
      %v1620 = vunpack.c.h.b16 %v443
      %v1621 = vunpack.c.l.b16 %v444
      %v1622 = vunpack.c.h.b16 %v444
      %v1623 = vunpack.c.l.b16 %v445
      %v1624 = vunpack.c.h.b16 %v445
      %v1625 = vunpack.c.l.b16 %v446
      %v1626 = vunpack.c.h.b16 %v446
      %v1627 = vunpack.c.l.b16 %v447
      %v1628 = vunpack.c.h.b16 %v447
      %v1629 = vunpack.c.l.b16 %v448
      %v1630 = vunpack.c.h.b16 %v448
      %v1631 = vunpack.c.l.b16 %v449
      %v1632 = vunpack.c.h.b16 %v449
      %v1633 = vunpack.c.l.b16 %v450
      %v1634 = vunpack.c.h.b16 %v450
      %v1635 = vunpack.c.l.b16 %v451
      %v1636 = vunpack.c.h.b16 %v451
      %v1637 = vunpack.c.l.b16 %v452
      %v1638 = vunpack.c.h.b16 %v452
      %v1639 = vunpack.c.l.b16 %v453
      %v1640 = vunpack.c.h.b16 %v453
      %v1641 = vunpack.c.l.b16 %v454
      %v1642 = vunpack.c.h.b16 %v454
      %v1643 = vunpack.c.l.b16 %v455
      %v1644 = vunpack.c.h.b16 %v455
      %v1645 = vunpack.c.l.b16 %v456
      %v1646 = vunpack.c.h.b16 %v456
      %v1647 = vunpack.c.l.b16 %v457
      %v1648 = vunpack.c.h.b16 %v457
      %v1649 = vunpack.c.l.b16 %v458
      %v1650 = vunpack.c.h.b16 %v458
      %v1651 = vunpack.c.l.b16 %v459
      %v1652 = vunpack.c.h.b16 %v459
      %v1653 = vunpack.c.l.b16 %v460
      %v1654 = vunpack.c.h.b16 %v460
      %v1655 = vunpack.c.l.b16 %v461
      %v1656 = vunpack.c.h.b16 %v461
      %v1657 = vunpack.c.l.b16 %v462
      %v1658 = vunpack.c.h.b16 %v462
      %v1659 = vunpack.c.l.b16 %v463
      %v1660 = vunpack.c.h.b16 %v463
      %v1661 = vunpack.c.l.b16 %v464
      %v1662 = vunpack.c.h.b16 %v464
      %v1663 = vunpack.c.l.b16 %v465
      %v1664 = vunpack.c.h.b16 %v465
      %v1665 = vunpack.c.l.b16 %v466
      %v1666 = vunpack.c.h.b16 %v466
      %v1667 = vunpack.c.l.b16 %v467
      %v1668 = vunpack.c.h.b16 %v467
      %v1669 = vunpack.c.l.b16 %v468
      %v1670 = vunpack.c.h.b16 %v468
      %v1671 = vunpack.c.l.b16 %v469
      %v1672 = vunpack.c.h.b16 %v469
      %v1673 = vunpack.c.l.b16 %v470
      %v1674 = vunpack.c.h.b16 %v470
      %v1675 = vunpack.c.l.b16 %v471
      %v1676 = vunpack.c.h.b16 %v471
      %v1677 = vunpack.c.l.b16 %v472
      %v1678 = vunpack.c.h.b16 %v472
      %v1679 = vunpack.c.l.b16 %v473
      %v1680 = vunpack.c.h.b16 %v473
      %v1681 = vunpack.c.l.b16 %v474
      %v1682 = vunpack.c.h.b16 %v474
      %v1683 = vunpack.c.l.b16 %v475
      %v1684 = vunpack.c.h.b16 %v475
      %v1685 = vunpack.c.l.b16 %v476
      %v1686 = vunpack.c.h.b16 %v476
      %v1687 = vunpack.c.l.b16 %v477
      %v1688 = vunpack.c.h.b16 %v477
      %v1689 = vunpack.c.l.b16 %v478
      %v1690 = vunpack.c.h.b16 %v478
      %v1691 = vunpack.c.l.b16 %v479
      %v1692 = vunpack.c.h.b16 %v479
      %v1693 = vunpack.c.l.b16 %v480
      %v1694 = vunpack.c.h.b16 %v480
      %v1695 = vunpack.c.l.b16 %v481
      %v1696 = vunpack.c.h.b16 %v481
      %v1697 = vunpack.c.l.b16 %v482
      %v1698 = vunpack.c.h.b16 %v482
      %v1699 = vunpack.c.l.b16 %v483
      %v1700 = vunpack.c.h.b16 %v483
      %v1701 = vunpack.c.l.b16 %v484
      %v1702 = vunpack.c.h.b16 %v484
      %v1703 = vunpack.c.l.b16 %v485
      %v1704 = vunpack.c.h.b16 %v485
      %v1705 = vunpack.c.l.b16 %v486
      %v1706 = vunpack.c.h.b16 %v486
      %v1707 = vunpack.c.l.b16 %v487
      %v1708 = vunpack.c.h.b16 %v487
      %v1709 = vunpack.c.l.b16 %v488
      %v1710 = vunpack.c.h.b16 %v488
      %v1711 = vunpack.c.l.b16 %v489
      %v1712 = vunpack.c.h.b16 %v489
      %v1713 = vunpack.c.l.b16 %v490
      %v1714 = vunpack.c.h.b16 %v490
      %v1715 = vunpack.c.l.b16 %v491
      %v1716 = vunpack.c.h.b16 %v491
      %v1717 = vunpack.c.l.b16 %v492
      %v1718 = vunpack.c.h.b16 %v492
      %v1719 = vunpack.c.l.b16 %v493
      %v1720 = vunpack.c.h.b16 %v493
      %v1721 = vunpack.c.l.b16 %v494
      %v1722 = vunpack.c.h.b16 %v494
      %v1723 = vunpack.c.l.b16 %v495
      %v1724 = vunpack.c.h.b16 %v495
      %v1725 = vunpack.c.l.b16 %v496
      %v1726 = vunpack.c.h.b16 %v496
      %v1727 = vunpack.c.l.b16 %v497
      %v1728 = vunpack.c.h.b16 %v497
      %v1729 = vunpack.c.l.b16 %v498
      %v1730 = vunpack.c.h.b16 %v498
      %v1731 = vunpack.c.l.b16 %v499
      %v1732 = vunpack.c.h.b16 %v499
      %v1733 = vunpack.c.l.b16 %v500
      %v1734 = vunpack.c.h.b16 %v500
      %v1735 = vunpack.c.l.b16 %v501
      %v1736 = vunpack.c.h.b16 %v501
      %v1737 = vunpack.c.l.b16 %v502
      %v1738 = vunpack.c.h.b16 %v502
      %v1739 = vunpack.c.l.b16 %v503
      %v1740 = vunpack.c.h.b16 %v503
      %v1741 = vunpack.c.l.b16 %v504
      %v1742 = vunpack.c.h.b16 %v504
      %v1743 = vunpack.c.l.b16 %v505
      %v1744 = vunpack.c.h.b16 %v505
      %v1745 = vunpack.c.l.b16 %v506
      %v1746 = vunpack.c.h.b16 %v506
      %v1747 = vunpack.c.l.b16 %v507
      %v1748 = vunpack.c.h.b16 %v507
      %v1749 = vunpack.c.l.b16 %v508
      %v1750 = vunpack.c.h.b16 %v508
      %v1751 = vunpack.c.l.b16 %v509
      %v1752 = vunpack.c.h.b16 %v509
      %v1753 = vunpack.c.l.b16 %v510
      %v1754 = vunpack.c.h.b16 %v510
      %v1755 = vunpack.c.l.b16 %v511
      %v1756 = vunpack.c.h.b16 %v511
      %v1757 = vunpack.c.l.b16 %v512
      %v1758 = vunpack.c.h.b16 %v512
      %v1759 = vunpack.c.l.b16 %v513
      %v1760 = vunpack.c.h.b16 %v513
      %v1761 = vunpack.c.l.b16 %v514
      %v1762 = vunpack.c.h.b16 %v514
      %v1763 = vunpack.c.l.b16 %v515
      %v1764 = vunpack.c.h.b16 %v515
      %v1765 = vunpack.c.l.b16 %v516
      %v1766 = vunpack.c.h.b16 %v516
      %v1767 = vunpack.c.l.b16 %v517
      %v1768 = vunpack.c.h.b16 %v517
      %v1769 = vunpack.c.l.b16 %v518
      %v1770 = vunpack.c.h.b16 %v518
      %v1771 = vunpack.c.l.b16 %v519
      %v1772 = vunpack.c.h.b16 %v519
      %v1773 = vunpack.c.l.b16 %v520
      %v1774 = vunpack.c.h.b16 %v520
      %v1775 = vunpack.c.l.b16 %v521
      %v1776 = vunpack.c.h.b16 %v521
      %v1777 = vunpack.c.l.b16 %v522
      %v1778 = vunpack.c.h.b16 %v522
      %v1779 = vunpack.c.l.b16 %v523
      %v1780 = vunpack.c.h.b16 %v523
      %v1781 = vunpack.c.l.b16 %v524
      %v1782 = vunpack.c.h.b16 %v524
      %v1783 = vunpack.c.l.b16 %v525
      %v1784 = vunpack.c.h.b16 %v525
      %v1785 = vunpack.c.l.b16 %v526
      %v1786 = vunpack.c.h.b16 %v526
      %v1787 = vunpack.c.l.b16 %v527
      %v1788 = vunpack.c.h.b16 %v527
      %v1789 = vunpack.c.l.b16 %v528
      %v1790 = vunpack.c.h.b16 %v528
      %v1791 = vunpack.c.l.b16 %v529
      %v1792 = vunpack.c.h.b16 %v529
      %v1793 = vunpack.c.l.b16 %v530
      %v1794 = vunpack.c.h.b16 %v530
      %v1795 = vunpack.c.l.b16 %v531
      %v1796 = vunpack.c.h.b16 %v531
      %v1797 = vunpack.c.l.b16 %v532
      %v1798 = vunpack.c.h.b16 %v532
      %v1799 = vunpack.c.l.b16 %v533
      %v1800 = vunpack.c.h.b16 %v533
      %v1801 = vunpack.c.l.b16 %v534
      %v1802 = vunpack.c.h.b16 %v534
      %v1803 = vunpack.c.l.b16 %v535
      %v1804 = vunpack.c.h.b16 %v535
      %v1805 = vunpack.c.l.b16 %v536
      %v1806 = vunpack.c.h.b16 %v536
      %v1807 = vunpack.c.l.b16 %v537
      %v1808 = vunpack.c.h.b16 %v537
      %v1809 = vunpack.c.l.b16 %v538
      %v1810 = vunpack.c.h.b16 %v538
      %v1811 = vunpack.c.l.b16 %v539
      %v1812 = vunpack.c.h.b16 %v539
      %v1813 = vunpack.c.l.b16 %v540
      %v1814 = vunpack.c.h.b16 %v540
      %v1815 = vunpack.c.l.b16 %v541
      %v1816 = vunpack.c.h.b16 %v541
      %v1817 = vunpack.c.l.b16 %v542
      %v1818 = vunpack.c.h.b16 %v542
      %v1819 = vunpack.c.l.b16 %v543
      %v1820 = vunpack.c.h.b16 %v543
      %v1821 = vunpack.c.l.b16 %v544
      %v1822 = vunpack.c.h.b16 %v544
      %v1823 = vunpack.c.l.b16 %v545
      %v1824 = vunpack.c.h.b16 %v545
      %v1825 = vpack.c.b16 %v1219, %v1217
      %v1826 = vpack.c.b16 %v1220, %v1218
      %v1827 = vpack.c.b16 %v1223, %v1221
      %v1828 = vpack.c.b16 %v1224, %v1222
      %v1829 = vpack.c.b16 %v1227, %v1225
      %v1830 = vpack.c.b16 %v1228, %v1226
      %v1831 = vpack.c.b16 %v1231, %v1229
      %v1832 = vpack.c.b16 %v1232, %v1230
      %v1833 = vpack.c.b16 %v1235, %v1233
      %v1834 = vpack.c.b16 %v1236, %v1234
      %v1835 = vpack.c.b16 %v1239, %v1237
      %v1836 = vpack.c.b16 %v1240, %v1238
      %v1837 = vpack.c.b16 %v1243, %v1241
      %v1838 = vpack.c.b16 %v1244, %v1242
      %v1839 = vpack.c.b16 %v1247, %v1245
      %v1840 = vpack.c.b16 %v1248, %v1246
      %v1841 = vpack.c.b16 %v1251, %v1249
      %v1842 = vpack.c.b16 %v1252, %v1250
      %v1843 = vpack.c.b16 %v1255, %v1253
      %v1844 = vpack.c.b16 %v1256, %v1254
      %v1845 = vpack.c.b16 %v1259, %v1257
      %v1846 = vpack.c.b16 %v1260, %v1258
      %v1847 = vpack.c.b16 %v1263, %v1261
      %v1848 = vpack.c.b16 %v1264, %v1262
      %v1849 = vpack.c.b16 %v1267, %v1265
      %v1850 = vpack.c.b16 %v1268, %v1266
      %v1851 = vpack.c.b16 %v1271, %v1269
      %v1852 = vpack.c.b16 %v1272, %v1270
      %v1853 = vpack.c.b16 %v1275, %v1273
      %v1854 = vpack.c.b16 %v1276, %v1274
      %v1855 = vpack.c.b16 %v1279, %v1277
      %v1856 = vpack.c.b16 %v1280, %v1278
      %v1857 = vpack.c.b16 %v1283, %v1281
      %v1858 = vpack.c.b16 %v1284, %v1282
      %v1859 = vpack.c.b16 %v1287, %v1285
      %v1860 = vpack.c.b16 %v1288, %v1286
      %v1861 = vpack.c.b16 %v1291, %v1289
      %v1862 = vpack.c.b16 %v1292, %v1290
      %v1863 = vpack.c.b16 %v1295, %v1293
      %v1864 = vpack.c.b16 %v1296, %v1294
      %v1865 = vpack.c.b16 %v1299, %v1297
      %v1866 = vpack.c.b16 %v1300, %v1298
      %v1867 = vpack.c.b16 %v1303, %v1301
      %v1868 = vpack.c.b16 %v1304, %v1302
      %v1869 = vpack.c.b16 %v1307, %v1305
      %v1870 = vpack.c.b16 %v1308, %v1306
      %v1871 = vpack.c.b16 %v1311, %v1309
      %v1872 = vpack.c.b16 %v1312, %v1310
      %v1873 = vpack.c.b16 %v1315, %v1313
      %v1874 = vpack.c.b16 %v1316, %v1314
      %v1875 = vpack.c.b16 %v1319, %v1317
      %v1876 = vpack.c.b16 %v1320, %v1318
      %v1877 = vpack.c.b16 %v1323, %v1321
      %v1878 = vpack.c.b16 %v1324, %v1322
      %v1879 = vpack.c.b16 %v1327, %v1325
      %v1880 = vpack.c.b16 %v1328, %v1326
      %v1881 = vpack.c.b16 %v1331, %v1329
      %v1882 = vpack.c.b16 %v1332, %v1330
      %v1883 = vpack.c.b16 %v1335, %v1333
      %v1884 = vpack.c.b16 %v1336, %v1334
      %v1885 = vpack.c.b16 %v1339, %v1337
      %v1886 = vpack.c.b16 %v1340, %v1338
      %v1887 = vpack.c.b16 %v1343, %v1341
      %v1888 = vpack.c.b16 %v1344, %v1342
      %v1889 = vpack.c.b16 %v1347, %v1345
      %v1890 = vpack.c.b16 %v1348, %v1346
      %v1891 = vpack.c.b16 %v1351, %v1349
      %v1892 = vpack.c.b16 %v1352, %v1350
      %v1893 = vpack.c.b16 %v1355, %v1353
      %v1894 = vpack.c.b16 %v1356, %v1354
      %v1895 = vpack.c.b16 %v1359, %v1357
      %v1896 = vpack.c.b16 %v1360, %v1358
      %v1897 = vpack.c.b16 %v1363, %v1361
      %v1898 = vpack.c.b16 %v1364, %v1362
      %v1899 = vpack.c.b16 %v1367, %v1365
      %v1900 = vpack.c.b16 %v1368, %v1366
      %v1901 = vpack.c.b16 %v1371, %v1369
      %v1902 = vpack.c.b16 %v1372, %v1370
      %v1903 = vpack.c.b16 %v1375, %v1373
      %v1904 = vpack.c.b16 %v1376, %v1374
      %v1905 = vpack.c.b16 %v1379, %v1377
      %v1906 = vpack.c.b16 %v1380, %v1378
      %v1907 = vpack.c.b16 %v1383, %v1381
      %v1908 = vpack.c.b16 %v1384, %v1382
      %v1909 = vpack.c.b16 %v1387, %v1385
      %v1910 = vpack.c.b16 %v1388, %v1386
      %v1911 = vpack.c.b16 %v1391, %v1389
      %v1912 = vpack.c.b16 %v1392, %v1390
      %v1913 = vpack.c.b16 %v1395, %v1393
      %v1914 = vpack.c.b16 %v1396, %v1394
      %v1915 = vpack.c.b16 %v1399, %v1397
      %v1916 = vpack.c.b16 %v1400, %v1398
      %v1917 = vpack.c.b16 %v1403, %v1401
      %v1918 = vpack.c.b16 %v1404, %v1402
      %v1919 = vpack.c.b16 %v1407, %v1405
      %v1920 = vpack.c.b16 %v1408, %v1406
      %v1921 = vpack.c.b16 %v1411, %v1409
      %v1922 = vpack.c.b16 %v1412, %v1410
      %v1923 = vpack.c.b16 %v1415, %v1413
      %v1924 = vpack.c.b16 %v1416, %v1414
      %v1925 = vpack.c.b16 %v1419, %v1417
      %v1926 = vpack.c.b16 %v1420, %v1418
      %v1927 = vpack.c.b16 %v1423, %v1421
      %v1928 = vpack.c.b16 %v1424, %v1422
      %v1929 = vpack.c.b16 %v1427, %v1425
      %v1930 = vpack.c.b16 %v1428, %v1426
      %v1931 = vpack.c.b16 %v1431, %v1429
      %v1932 = vpack.c.b16 %v1432, %v1430
      %v1933 = vpack.c.b16 %v1435, %v1433
      %v1934 = vpack.c.b16 %v1436, %v1434
      %v1935 = vpack.c.b16 %v1439, %v1437
      %v1936 = vpack.c.b16 %v1440, %v1438
      %v1937 = vpack.c.b16 %v1443, %v1441
      %v1938 = vpack.c.b16 %v1444, %v1442
      %v1939 = vpack.c.b16 %v1447, %v1445
      %v1940 = vpack.c.b16 %v1448, %v1446
      %v1941 = vpack.c.b16 %v1451, %v1449
      %v1942 = vpack.c.b16 %v1452, %v1450
      %v1943 = vpack.c.b16 %v1455, %v1453
      %v1944 = vpack.c.b16 %v1456, %v1454
      %v1945 = vpack.c.b16 %v1459, %v1457
      %v1946 = vpack.c.b16 %v1460, %v1458
      %v1947 = vpack.c.b16 %v1463, %v1461
      %v1948 = vpack.c.b16 %v1464, %v1462
      %v1949 = vpack.c.b16 %v1467, %v1465
      %v1950 = vpack.c.b16 %v1468, %v1466
      %v1951 = vpack.c.b16 %v1471, %v1469
      %v1952 = vpack.c.b16 %v1472, %v1470
      %v1953 = vpack.c.b16 %v1475, %v1473
      %v1954 = vpack.c.b16 %v1476, %v1474
      %v1955 = vpack.c.b16 %v1479, %v1477
      %v1956 = vpack.c.b16 %v1480, %v1478
      %v1957 = vpack.c.b16 %v1483, %v1481
      %v1958 = vpack.c.b16 %v1484, %v1482
      %v1959 = vpack.c.b16 %v1487, %v1485
      %v1960 = vpack.c.b16 %v1488, %v1486
      %v1961 = vpack.c.b16 %v1491, %v1489
      %v1962 = vpack.c.b16 %v1492, %v1490
      %v1963 = vpack.c.b16 %v1495, %v1493
      %v1964 = vpack.c.b16 %v1496, %v1494
      %v1965 = vpack.c.b16 %v1499, %v1497
      %v1966 = vpack.c.b16 %v1500, %v1498
      %v1967 = vpack.c.b16 %v1503, %v1501
      %v1968 = vpack.c.b16 %v1504, %v1502
      %v1969 = vpack.c.b16 %v1507, %v1505
      %v1970 = vpack.c.b16 %v1508, %v1506
      %v1971 = vpack.c.b16 %v1511, %v1509
      %v1972 = vpack.c.b16 %v1512, %v1510
      %v1973 = vpack.c.b16 %v1515, %v1513
      %v1974 = vpack.c.b16 %v1516, %v1514
      %v1975 = vpack.c.b16 %v1519, %v1517
      %v1976 = vpack.c.b16 %v1520, %v1518
      %v1977 = vpack.c.b16 %v1523, %v1521
      %v1978 = vpack.c.b16 %v1524, %v1522
      %v1979 = vpack.c.b16 %v1527, %v1525
      %v1980 = vpack.c.b16 %v1528, %v1526
      %v1981 = vpack.c.b16 %v1531, %v1529
      %v1982 = vpack.c.b16 %v1532, %v1530
      %v1983 = vpack.c.b16 %v1535, %v1533
      %v1984 = vpack.c.b16 %v1536, %v1534
      %v1985 = vpack.c.b16 %v1539, %v1537
      %v1986 = vpack.c.b16 %v1540, %v1538
      %v1987 = vpack.c.b16 %v1543, %v1541
      %v1988 = vpack.c.b16 %v1544, %v1542
      %v1989 = vpack.c.b16 %v1547, %v1545
      %v1990 = vpack.c.b16 %v1548, %v1546
      %v1991 = vpack.c.b16 %v1551, %v1549
      %v1992 = vpack.c.b16 %v1552, %v1550
      %v1993 = vpack.c.b16 %v1555, %v1553
      %v1994 = vpack.c.b16 %v1556, %v1554
      %v1995 = vpack.c.b16 %v1559, %v1557
      %v1996 = vpack.c.b16 %v1560, %v1558
      %v1997 = vpack.c.b16 %v1563, %v1561
      %v1998 = vpack.c.b16 %v1564, %v1562
      %v1999 = vpack.c.b16 %v1567, %v1565
      %v2000 = vpack.c.b16 %v1568, %v1566
      %v2001 = vpack.c.b16 %v1571, %v1569
      %v2002 = vpack.c.b16 %v1572, %v1570
      %v2003 = vpack.c.b16 %v1575, %v1573
      %v2004 = vpack.c.b16 %v1576, %v1574
      %v2005 = vpack.c.b16 %v1579, %v1577
      %v2006 = vpack.c.b16 %v1580, %v1578
      %v2007 = vpack.c.b16 %v1583, %v1581
      %v2008 = vpack.c.b16 %v1584, %v1582
      %v2009 = vpack.c.b16 %v1587, %v1585
      %v2010 = vpack.c.b16 %v1588, %v1586
      %v2011 = vpack.c.b16 %v1591, %v1589
      %v2012 = vpack.c.b16 %v1592, %v1590
      %v2013 = vpack.c.b16 %v1595, %v1593
      %v2014 = vpack.c.b16 %v1596, %v1594
      %v2015 = vpack.c.b16 %v1599, %v1597
      %v2016 = vpack.c.b16 %v1600, %v1598
      %v2017 = vpack.c.b16 %v1603, %v1601
      %v2018 = vpack.c.b16 %v1604, %v1602
      %v2019 = vpack.c.b16 %v1607, %v1605
      %v2020 = vpack.c.b16 %v1608, %v1606
      %v2021 = vpack.c.b16 %v1611, %v1609
      %v2022 = vpack.c.b16 %v1612, %v1610
      %v2023 = vpack.c.b16 %v1615, %v1613
      %v2024 = vpack.c.b16 %v1616, %v1614
      %v2025 = vpack.c.b16 %v1619, %v1617
      %v2026 = vpack.c.b16 %v1620, %v1618
      %v2027 = vpack.c.b16 %v1623, %v1621
      %v2028 = vpack.c.b16 %v1624, %v1622
      %v2029 = vpack.c.b16 %v1627, %v1625
      %v2030 = vpack.c.b16 %v1628, %v1626
      %v2031 = vpack.c.b16 %v1631, %v1629
      %v2032 = vpack.c.b16 %v1632, %v1630
      %v2033 = vpack.c.b16 %v1635, %v1633
      %v2034 = vpack.c.b16 %v1636, %v1634
      %v2035 = vpack.c.b16 %v1639, %v1637
      %v2036 = vpack.c.b16 %v1640, %v1638
      %v2037 = vpack.c.b16 %v1643, %v1641
      %v2038 = vpack.c.b16 %v1644, %v1642
      %v2039 = vpack.c.b16 %v1647, %v1645
      %v2040 = vpack.c.b16 %v1648, %v1646
      %v2041 = vpack.c.b16 %v1651, %v1649
      %v2042 = vpack.c.b16 %v1652, %v1650
      %v2043 = vpack.c.b16 %v1655, %v1653
      %v2044 = vpack.c.b16 %v1656, %v1654
      %v2045 = vpack.c.b16 %v1659, %v1657
      %v2046 = vpack.c.b16 %v1660, %v1658
      %v2047 = vpack.c.b16 %v1663, %v1661
      %v2048 = vpack.c.b16 %v1664, %v1662
      %v2049 = vpack.c.b16 %v1667, %v1665
      %v2050 = vpack.c.b16 %v1668, %v1666
      %v2051 = vpack.c.b16 %v1671, %v1669
      %v2052 = vpack.c.b16 %v1672, %v1670
      %v2053 = vpack.c.b16 %v1675, %v1673
      %v2054 = vpack.c.b16 %v1676, %v1674
      %v2055 = vpack.c.b16 %v1679, %v1677
      %v2056 = vpack.c.b16 %v1680, %v1678
      %v2057 = vpack.c.b16 %v1683, %v1681
      %v2058 = vpack.c.b16 %v1684, %v1682
      %v2059 = vpack.c.b16 %v1687, %v1685
      %v2060 = vpack.c.b16 %v1688, %v1686
      %v2061 = vpack.c.b16 %v1691, %v1689
      %v2062 = vpack.c.b16 %v1692, %v1690
      %v2063 = vpack.c.b16 %v1695, %v1693
      %v2064 = vpack.c.b16 %v1696, %v1694
      %v2065 = vpack.c.b16 %v1699, %v1697
      %v2066 = vpack.c.b16 %v1700, %v1698
      %v2067 = vpack.c.b16 %v1703, %v1701
      %v2068 = vpack.c.b16 %v1704, %v1702
      %v2069 = vpack.c.b16 %v1707, %v1705
      %v2070 = vpack.c.b16 %v1708, %v1706
      %v2071 = vpack.c.b16 %v1711, %v1709
      %v2072 = vpack.c.b16 %v1712, %v1710
      %v2073 = vpack.c.b16 %v1715, %v1713
      %v2074 = vpack.c.b16 %v1716, %v1714
      %v2075 = vpack.c.b16 %v1719, %v1717
      %v2076 = vpack.c.b16 %v1720, %v1718
      %v2077 = vpack.c.b16 %v1723, %v1721
      %v2078 = vpack.c.b16 %v1724, %v1722
      %v2079 = vpack.c.b16 %v1727, %v1725
      %v2080 = vpack.c.b16 %v1728, %v1726
      %v2081 = vpack.c.b16 %v1731, %v1729
      %v2082 = vpack.c.b16 %v1732, %v1730
      %v2083 = vpack.c.b16 %v1735, %v1733
      %v2084 = vpack.c.b16 %v1736, %v1734
      %v2085 = vpack.c.b16 %v1739, %v1737
      %v2086 = vpack.c.b16 %v1740, %v1738
      %v2087 = vpack.c.b16 %v1743, %v1741
      %v2088 = vpack.c.b16 %v1744, %v1742
      %v2089 = vpack.c.b16 %v1747, %v1745
      %v2090 = vpack.c.b16 %v1748, %v1746
      %v2091 = vpack.c.b16 %v1751, %v1749
      %v2092 = vpack.c.b16 %v1752, %v1750
      %v2093 = vpack.c.b16 %v1755, %v1753
      %v2094 = vpack.c.b16 %v1756, %v1754
      %v2095 = vpack.c.b16 %v1759, %v1757
      %v2096 = vpack.c.b16 %v1760, %v1758
      %v2097 = vpack.c.b16 %v1763, %v1761
      %v2098 = vpack.c.b16 %v1764, %v1762
      %v2099 = vpack.c.b16 %v1767, %v1765
      %v2100 = vpack.c.b16 %v1768, %v1766
      %v2101 = vpack.c.b16 %v1771, %v1769
      %v2102 = vpack.c.b16 %v1772, %v1770
      %v2103 = vpack.c.b16 %v1775, %v1773
      %v2104 = vpack.c.b16 %v1776, %v1774
      %v2105 = vpack.c.b16 %v1779, %v1777
      %v2106 = vpack.c.b16 %v1780, %v1778
      %v2107 = vpack.c.b16 %v1783, %v1781
      %v2108 = vpack.c.b16 %v1784, %v1782
      %v2109 = vpack.c.b16 %v1787, %v1785
      %v2110 = vpack.c.b16 %v1788, %v1786
      %v2111 = vpack.c.b16 %v1791, %v1789
      %v2112 = vpack.c.b16 %v1792, %v1790
      %v2113 = vpack.c.b16 %v1795, %v1793
      %v2114 = vpack.c.b16 %v1796, %v1794
      %v2115 = vpack.c.b16 %v1799, %v1797
      %v2116 = vpack.c.b16 %v1800, %v1798
      %v2117 = vpack.c.b16 %v1803, %v1801
      %v2118 = vpack.c.b16 %v1804, %v1802
      %v2119 = vpack.c.b16 %v1807, %v1805
      %v2120 = vpack.c.b16 %v1808, %v1806
      %v2121 = vpack.c.b16 %v1811, %v1809
      %v2122 = vpack.c.b16 %v1812, %v1810
      %v2123 = vpack.c.b16 %v1815, %v1813
      %v2124 = vpack.c.b16 %v1816, %v1814
      %v2125 = vpack.c.b16 %v1819, %v1817
      %v2126 = vpack.c.b16 %v1820, %v1818
      %v2127 = vpack.c.b16 %v1823, %v1821
      %v2128 = vpack.c.b16 %v1824, %v1822
      %2433 = vmatprep.subr.bf16.mxu0 %v1826
      %2434 = vmatpush1.bf16.msra.mxu0 %v1825
      %2435 = vmatprep.subr.bf16.mxu0 %v1828
      %2436 = vmatpush1.bf16.msra.mxu0 %v1827
      %2437 = vmatprep.subr.bf16.mxu0 %v1830
      %2438 = vmatpush1.bf16.msra.mxu0 %v1829
      %2439 = vmatprep.subr.bf16.mxu0 %v1832
      %2440 = vmatpush1.bf16.msra.mxu0 %v1831
      %2441 = vmatprep.subr.bf16.mxu0 %v1834
      %2442 = vmatpush1.bf16.msra.mxu0 %v1833
      %2443 = vmatprep.subr.bf16.mxu0 %v1836
      %2444 = vmatpush1.bf16.msra.mxu0 %v1835
      %2445 = vmatprep.subr.bf16.mxu0 %v1838
      %2446 = vmatpush1.bf16.msra.mxu0 %v1837
      %2447 = vmatprep.subr.bf16.mxu0 %v1840
      %2448 = vmatpush1.bf16.msra.mxu0 %v1839
      %2449 = vmatprep.subr.bf16.mxu0 %v1842
      %2450 = vmatpush1.bf16.msra.mxu0 %v1841
      %2451 = vmatprep.subr.bf16.mxu0 %v1844
      %2452 = vmatpush1.bf16.msra.mxu0 %v1843
      %2453 = vmatprep.subr.bf16.mxu0 %v1846
      %2454 = vmatpush1.bf16.msra.mxu0 %v1845
      %2455 = vmatprep.subr.bf16.mxu0 %v1848
      %2456 = vmatpush1.bf16.msra.mxu0 %v1847
      %2457 = vmatprep.subr.bf16.mxu0 %v1850
      %2458 = vmatpush1.bf16.msra.mxu0 %v1849
      %2459 = vmatprep.subr.bf16.mxu0 %v1852
      %2460 = vmatpush1.bf16.msra.mxu0 %v1851
      %2461 = vmatprep.subr.bf16.mxu0 %v1854
      %2462 = vmatpush1.bf16.msra.mxu0 %v1853
      %2463 = vmatprep.subr.bf16.mxu0 %v1856
      %2464 = vmatpush1.bf16.msra.mxu0 %v1855
      %2465 = vmatprep.mubr.bf16.mxu0 %v762
      %2466 = vmatmul.mubr.bf16.gmra.mrb[0].mxu0 %v761
      %v2467 = vpop.f32.mrb[0].mxu0
      %v2468 = vadd.f32 %v551, %v2467
      %v2469 = vpop.f32.mrb[0].mxu0
      %v2470 = vadd.f32 %v555, %v2469
      %v2471 = vpop.f32.mrb[0].mxu0
      %v2472 = vadd.f32 %v551, %v2471
      %v2473 = vpop.f32.mrb[0].mxu0
      %v2474 = vadd.f32 %v555, %v2473
      %2475 = vmatprep.mubr.bf16.mxu0 %v781
      %2476 = vmatmul.mubr.bf16.gmra.mrb[0].mxu0 %v780
      %v2477 = vpop.f32.mrb[0].mxu0
      %v2478 = vadd.f32 %v551, %v2477
      %v2479 = vpop.f32.mrb[0].mxu0
      %v2480 = vadd.f32 %v555, %v2479
      %v2481 = vpop.f32.mrb[0].mxu0
      %v2482 = vadd.f32 %v551, %v2481
      %v2483 = vpop.f32.mrb[0].mxu0
      %v2484 = vadd.f32 %v555, %v2483
      %2485 = vmatprep.mubr.bf16.mxu0 %v800
      %2486 = vmatmul.mubr.bf16.gmra.mrb[0].mxu0 %v799
      %v2487 = vpop.f32.mrb[0].mxu0
      %v2488 = vadd.f32 %v551, %v2487
      %v2489 = vpop.f32.mrb[0].mxu0
      %v2490 = vadd.f32 %v555, %v2489
      %v2491 = vpop.f32.mrb[0].mxu0
      %v2492 = vadd.f32 %v551, %v2491
      %v2493 = vpop.f32.mrb[0].mxu0
      %v2494 = vadd.f32 %v555, %v2493
      %2495 = vmatprep.mubr.bf16.mxu0 %v819
      %2496 = vmatmul.mubr.bf16.gmra.mrb[0].mxu0 %v818
      %v2497 = vpop.f32.mrb[0].mxu0
      %v2498 = vadd.f32 %v551, %v2497
      %v2499 = vpop.f32.mrb[0].mxu0
      %v2500 = vadd.f32 %v555, %v2499
      %v2501 = vpop.f32.mrb[0].mxu0
      %v2502 = vpop.f32.mrb[0].mxu0
      %2503 = vdwg.mxu0
      %2504 = vmatprep.subr.bf16.mxu0 %v1858
      %2505 = vmatpush1.bf16.msra.mxu0 %v1857
      %2506 = vmatprep.subr.bf16.mxu0 %v1860
      %2507 = vmatpush1.bf16.msra.mxu0 %v1859
      %2508 = vmatprep.subr.bf16.mxu0 %v1862
      %2509 = vmatpush1.bf16.msra.mxu0 %v1861
      %2510 = vmatprep.subr.bf16.mxu0 %v1864
      %2511 = vmatpush1.bf16.msra.mxu0 %v1863
      %2512 = vmatprep.subr.bf16.mxu0 %v1866
      %2513 = vmatpush1.bf16.msra.mxu0 %v1865
      %2514 = vmatprep.subr.bf16.mxu0 %v1868
      %2515 = vmatpush1.bf16.msra.mxu0 %v1867
      %2516 = vmatprep.subr.bf16.mxu0 %v1870
      %2517 = vmatpush1.bf16.msra.mxu0 %v1869
      %2518 = vmatprep.subr.bf16.mxu0 %v1872
      %2519 = vmatpush1.bf16.msra.mxu0 %v1871
      %2520 = vmatprep.subr.bf16.mxu0 %v1874
      %2521 = vmatpush1.bf16.msra.mxu0 %v1873
      %2522 = vmatprep.subr.bf16.mxu0 %v1876
      %2523 = vmatpush1.bf16.msra.mxu0 %v1875
      %2524 = vmatprep.subr.bf16.mxu0 %v1878
      %2525 = vmatpush1.bf16.msra.mxu0 %v1877
      %2526 = vmatprep.subr.bf16.mxu0 %v1880
      %2527 = vmatpush1.bf16.msra.mxu0 %v1879
      %2528 = vmatprep.subr.bf16.mxu0 %v1882
      %2529 = vmatpush1.bf16.msra.mxu0 %v1881
      %2530 = vmatprep.subr.bf16.mxu0 %v1884
      %2531 = vmatpush1.bf16.msra.mxu0 %v1883
      %2532 = vmatprep.subr.bf16.mxu0 %v1886
      %2533 = vmatpush1.bf16.msra.mxu0 %v1885
      %2534 = vmatprep.subr.bf16.mxu0 %v1888
      %2535 = vmatpush1.bf16.msra.mxu0 %v1887
      %2536 = vmatprep.mubr.bf16.mxu0 %v764
      %2537 = vmatmul.mubr.bf16.gmra.mrb[0].mxu0 %v763
      %v2538 = vpop.f32.mrb[0].mxu0
      %v2539 = vadd.f32 %v2468, %v2538
      %v2540 = vpop.f32.mrb[0].mxu0
      %v2541 = vadd.f32 %v2470, %v2540
      %v2542 = vpop.f32.mrb[0].mxu0
      %v2543 = vadd.f32 %v2472, %v2542
      %v2544 = vpop.f32.mrb[0].mxu0
      %v2545 = vadd.f32 %v2474, %v2544
      %2546 = vmatprep.mubr.bf16.mxu0 %v783
      %2547 = vmatmul.mubr.bf16.gmra.mrb[0].mxu0 %v782
      %v2548 = vpop.f32.mrb[0].mxu0
      %v2549 = vadd.f32 %v2478, %v2548
      %v2550 = vpop.f32.mrb[0].mxu0
      %v2551 = vadd.f32 %v2480, %v2550
      %v2552 = vpop.f32.mrb[0].mxu0
      %v2553 = vadd.f32 %v2482, %v2552
      %v2554 = vpop.f32.mrb[0].mxu0
      %v2555 = vadd.f32 %v2484, %v2554
      %2556 = vmatprep.mubr.bf16.mxu0 %v802
      %2557 = vmatmul.mubr.bf16.gmra.mrb[0].mxu0 %v801
      %v2558 = vpop.f32.mrb[0].mxu0
      %v2559 = vadd.f32 %v2488, %v2558
      %v2560 = vpop.f32.mrb[0].mxu0
      %v2561 = vadd.f32 %v2490, %v2560
      %v2562 = vpop.f32.mrb[0].mxu0
      %v2563 = vadd.f32 %v2492, %v2562
      %v2564 = vpop.f32.mrb[0].mxu0
      %v2565 = vadd.f32 %v2494, %v2564
      %2566 = vmatprep.mubr.bf16.mxu0 %v821
      %2567 = vmatmul.mubr.bf16.gmra.mrb[0].mxu0 %v820
      %v2568 = vpop.f32.mrb[0].mxu0
      %v2569 = vadd.f32 %v2498, %v2568
      %v2570 = vpop.f32.mrb[0].mxu0
      %v2571 = vadd.f32 %v2500, %v2570
      %v2572 = vpop.f32.mrb[0].mxu0
      %v2573 = vpop.f32.mrb[0].mxu0
      %2574 = vdwg.mxu0
      %2575 = vmatprep.subr.bf16.mxu0 %v1890
      %2576 = vmatpush1.bf16.msra.mxu0 %v1889
      %2577 = vmatprep.subr.bf16.mxu0 %v1892
      %2578 = vmatpush1.bf16.msra.mxu0 %v1891
      %2579 = vmatprep.subr.bf16.mxu0 %v1894
      %2580 = vmatpush1.bf16.msra.mxu0 %v1893
      %2581 = vmatprep.subr.bf16.mxu0 %v1896
      %2582 = vmatpush1.bf16.msra.mxu0 %v1895
      %2583 = vmatprep.subr.bf16.mxu0 %v1898
      %2584 = vmatpush1.bf16.msra.mxu0 %v1897
      %2585 = vmatprep.subr.bf16.mxu0 %v1900
      %2586 = vmatpush1.bf16.msra.mxu0 %v1899
      %2587 = vmatprep.subr.bf16.mxu0 %v1902
      %2588 = vmatpush1.bf16.msra.mxu0 %v1901
      %2589 = vmatprep.subr.bf16.mxu0 %v1904
      %2590 = vmatpush1.bf16.msra.mxu0 %v1903
      %2591 = vmatprep.subr.bf16.mxu0 %v1906
      %2592 = vmatpush1.bf16.msra.mxu0 %v1905
      %2593 = vmatprep.subr.bf16.mxu0 %v1908
      %2594 = vmatpush1.bf16.msra.mxu0 %v1907
      %2595 = vmatprep.subr.bf16.mxu0 %v1910
      %2596 = vmatpush1.bf16.msra.mxu0 %v1909
      %2597 = vmatprep.subr.bf16.mxu0 %v1912
      %2598 = vmatpush1.bf16.msra.mxu0 %v1911
      %2599 = vmatprep.subr.bf16.mxu0 %v1914
      %2600 = vmatpush1.bf16.msra.mxu0 %v1913
      %2601 = vmatprep.subr.bf16.mxu0 %v1916
      %2602 = vmatpush1.bf16.msra.mxu0 %v1915
      %2603 = vmatprep.subr.bf16.mxu0 %v1918
      %2604 = vmatpush1.bf16.msra.mxu0 %v1917
      %2605 = vmatprep.subr.bf16.mxu0 %v1920
      %2606 = vmatpush1.bf16.msra.mxu0 %v1919
      %2607 = vmatprep.mubr.bf16.mxu0 %v766
      %2608 = vmatmul.mubr.bf16.gmra.mrb[0].mxu0 %v765
      %v2609 = vpop.f32.mrb[0].mxu0
      %v2610 = vadd.f32 %v2539, %v2609
      %v2611 = vpop.f32.mrb[0].mxu0
      %v2612 = vadd.f32 %v2541, %v2611
      %v2613 = vpop.f32.mrb[0].mxu0
      %v2614 = vadd.f32 %v2543, %v2613
      %v2615 = vpop.f32.mrb[0].mxu0
      %v2616 = vadd.f32 %v2545, %v2615
      %2617 = vmatprep.mubr.bf16.mxu0 %v785
      %2618 = vmatmul.mubr.bf16.gmra.mrb[0].mxu0 %v784
      %v2619 = vpop.f32.mrb[0].mxu0
      %v2620 = vadd.f32 %v2549, %v2619
      %v2621 = vpop.f32.mrb[0].mxu0
      %v2622 = vadd.f32 %v2551, %v2621
      %v2623 = vpop.f32.mrb[0].mxu0
      %v2624 = vadd.f32 %v2553, %v2623
      %v2625 = vpop.f32.mrb[0].mxu0
      %v2626 = vadd.f32 %v2555, %v2625
      %2627 = vmatprep.mubr.bf16.mxu0 %v804
      %2628 = vmatmul.mubr.bf16.gmra.mrb[0].mxu0 %v803
      %v2629 = vpop.f32.mrb[0].mxu0
      %v2630 = vadd.f32 %v2559, %v2629
      %v2631 = vpop.f32.mrb[0].mxu0
      %v2632 = vadd.f32 %v2561, %v2631
      %v2633 = vpop.f32.mrb[0].mxu0
      %v2634 = vadd.f32 %v2563, %v2633
      %v2635 = vpop.f32.mrb[0].mxu0
      %v2636 = vadd.f32 %v2565, %v2635
      %2637 = vmatprep.mubr.bf16.mxu0 %v823
      %2638 = vmatmul.mubr.bf16.gmra.mrb[0].mxu0 %v822
      %v2639 = vpop.f32.mrb[0].mxu0
      %v2640 = vadd.f32 %v2569, %v2639
      %v2641 = vpop.f32.mrb[0].mxu0
      %v2642 = vadd.f32 %v2571, %v2641
      %v2643 = vpop.f32.mrb[0].mxu0
      %v2644 = vpop.f32.mrb[0].mxu0
      %2645 = vdwg.mxu0
      %2646 = vmatprep.subr.bf16.mxu0 %v1922
      %2647 = vmatpush1.bf16.msra.mxu0 %v1921
      %2648 = vmatprep.subr.bf16.mxu0 %v1924
      %2649 = vmatpush1.bf16.msra.mxu0 %v1923
      %2650 = vmatprep.subr.bf16.mxu0 %v1926
      %2651 = vmatpush1.bf16.msra.mxu0 %v1925
      %2652 = vmatprep.subr.bf16.mxu0 %v1928
      %2653 = vmatpush1.bf16.msra.mxu0 %v1927
      %2654 = vmatprep.subr.bf16.mxu0 %v1930
      %2655 = vmatpush1.bf16.msra.mxu0 %v1929
      %2656 = vmatprep.subr.bf16.mxu0 %v1932
      %2657 = vmatpush1.bf16.msra.mxu0 %v1931
      %2658 = vmatprep.subr.bf16.mxu0 %v1934
      %2659 = vmatpush1.bf16.msra.mxu0 %v1933
      %2660 = vmatprep.subr.bf16.mxu0 %v1936
      %2661 = vmatpush1.bf16.msra.mxu0 %v1935
      %2662 = vmatprep.subr.bf16.mxu0 %v1938
      %2663 = vmatpush1.bf16.msra.mxu0 %v1937
      %2664 = vmatprep.subr.bf16.mxu0 %v1940
      %2665 = vmatpush1.bf16.msra.mxu0 %v1939
      %2666 = vmatprep.subr.bf16.mxu0 %v1942
      %2667 = vmatpush1.bf16.msra.mxu0 %v1941
      %2668 = vmatprep.subr.bf16.mxu0 %v1944
      %2669 = vmatpush1.bf16.msra.mxu0 %v1943
      %2670 = vmatprep.subr.bf16.mxu0 %v1946
      %2671 = vmatpush1.bf16.msra.mxu0 %v1945
      %2672 = vmatprep.subr.bf16.mxu0 %v1948
      %2673 = vmatpush1.bf16.msra.mxu0 %v1947
      %2674 = vmatprep.subr.bf16.mxu0 %v1950
      %2675 = vmatpush1.bf16.msra.mxu0 %v1949
      %2676 = vmatprep.subr.bf16.mxu0 %v1952
      %2677 = vmatpush1.bf16.msra.mxu0 %v1951
      %2678 = vmatprep.mubr.bf16.mxu0 %v768
      %2679 = vmatmul.mubr.bf16.gmra.mrb[0].mxu0 %v767
      %v2680 = vpop.f32.mrb[0].mxu0
      %v2681 = vadd.f32 %v2610, %v2680
      %v2682 = vpop.f32.mrb[0].mxu0
      %v2683 = vadd.f32 %v2612, %v2682
      %v2684 = vpop.f32.mrb[0].mxu0
      %v2685 = vadd.f32 %v2614, %v2684
      %v2686 = vpop.f32.mrb[0].mxu0
      %v2687 = vadd.f32 %v2616, %v2686
      %2688 = vmatprep.mubr.bf16.mxu0 %v787
      %2689 = vmatmul.mubr.bf16.gmra.mrb[0].mxu0 %v786
      %v2690 = vpop.f32.mrb[0].mxu0
      %v2691 = vadd.f32 %v2620, %v2690
      %v2692 = vpop.f32.mrb[0].mxu0
      %v2693 = vadd.f32 %v2622, %v2692
      %v2694 = vpop.f32.mrb[0].mxu0
      %v2695 = vadd.f32 %v2624, %v2694
      %v2696 = vpop.f32.mrb[0].mxu0
      %v2697 = vadd.f32 %v2626, %v2696
      %2698 = vmatprep.mubr.bf16.mxu0 %v806
      %2699 = vmatmul.mubr.bf16.gmra.mrb[0].mxu0 %v805
      %v2700 = vpop.f32.mrb[0].mxu0
      %v2701 = vadd.f32 %v2630, %v2700
      %v2702 = vpop.f32.mrb[0].mxu0
      %v2703 = vadd.f32 %v2632, %v2702
      %v2704 = vpop.f32.mrb[0].mxu0
      %v2705 = vadd.f32 %v2634, %v2704
      %v2706 = vpop.f32.mrb[0].mxu0
      %v2707 = vadd.f32 %v2636, %v2706
      %2708 = vmatprep.mubr.bf16.mxu0 %v825
      %2709 = vmatmul.mubr.bf16.gmra.mrb[0].mxu0 %v824
      %v2710 = vpop.f32.mrb[0].mxu0
      %v2711 = vadd.f32 %v2640, %v2710
      %v2712 = vpop.f32.mrb[0].mxu0
      %v2713 = vadd.f32 %v2642, %v2712
      %v2714 = vpop.f32.mrb[0].mxu0
      %v2715 = vpop.f32.mrb[0].mxu0
      %2716 = vdwg.mxu0
      %2717 = vmatprep.subr.bf16.mxu0 %v1954
      %2718 = vmatpush1.bf16.msra.mxu0 %v1953
      %2719 = vmatprep.subr.bf16.mxu0 %v1956
      %2720 = vmatpush1.bf16.msra.mxu0 %v1955
      %2721 = vmatprep.subr.bf16.mxu0 %v1958
      %2722 = vmatpush1.bf16.msra.mxu0 %v1957
      %2723 = vmatprep.subr.bf16.mxu0 %v1960
      %2724 = vmatpush1.bf16.msra.mxu0 %v1959
      %2725 = vmatprep.subr.bf16.mxu0 %v1962
      %2726 = vmatpush1.bf16.msra.mxu0 %v1961
      %2727 = vmatprep.subr.bf16.mxu0 %v1964
      %2728 = vmatpush1.bf16.msra.mxu0 %v1963
      %2729 = vmatprep.subr.bf16.mxu0 %v1966
      %2730 = vmatpush1.bf16.msra.mxu0 %v1965
      %2731 = vmatprep.subr.bf16.mxu0 %v1968
      %2732 = vmatpush1.bf16.msra.mxu0 %v1967
      %2733 = vmatprep.subr.bf16.mxu0 %v1970
      %2734 = vmatpush1.bf16.msra.mxu0 %v1969
      %2735 = vmatprep.subr.bf16.mxu0 %v1972
      %2736 = vmatpush1.bf16.msra.mxu0 %v1971
      %2737 = vmatprep.subr.bf16.mxu0 %v1974
      %2738 = vmatpush1.bf16.msra.mxu0 %v1973
      %2739 = vmatprep.subr.bf16.mxu0 %v1976
      %2740 = vmatpush1.bf16.msra.mxu0 %v1975
      %2741 = vmatprep.subr.bf16.mxu0 %v1978
      %2742 = vmatpush1.bf16.msra.mxu0 %v1977
      %2743 = vmatprep.subr.bf16.mxu0 %v1980
      %2744 = vmatpush1.bf16.msra.mxu0 %v1979
      %2745 = vmatprep.subr.bf16.mxu0 %v1982
      %2746 = vmatpush1.bf16.msra.mxu0 %v1981
      %2747 = vmatprep.subr.bf16.mxu0 %v1984
      %2748 = vmatpush1.bf16.msra.mxu0 %v1983
      %2749 = vmatprep.mubr.bf16.mxu0 %v770
      %2750 = vmatmul.mubr.bf16.gmra.mrb[0].mxu0 %v769
      %v2751 = vpop.f32.mrb[0].mxu0
      %v2752 = vadd.f32 %v2681, %v2751
      %v2753 = vpop.f32.mrb[0].mxu0
      %v2754 = vadd.f32 %v2683, %v2753
      %v2755 = vpop.f32.mrb[0].mxu0
      %v2756 = vadd.f32 %v2685, %v2755
      %v2757 = vpop.f32.mrb[0].mxu0
      %v2758 = vadd.f32 %v2687, %v2757
      %2759 = vmatprep.mubr.bf16.mxu0 %v789
      %2760 = vmatmul.mubr.bf16.gmra.mrb[0].mxu0 %v788
      %v2761 = vpop.f32.mrb[0].mxu0
      %v2762 = vadd.f32 %v2691, %v2761
      %v2763 = vpop.f32.mrb[0].mxu0
      %v2764 = vadd.f32 %v2693, %v2763
      %v2765 = vpop.f32.mrb[0].mxu0
      %v2766 = vadd.f32 %v2695, %v2765
      %v2767 = vpop.f32.mrb[0].mxu0
      %v2768 = vadd.f32 %v2697, %v2767
      %2769 = vmatprep.mubr.bf16.mxu0 %v808
      %2770 = vmatmul.mubr.bf16.gmra.mrb[0].mxu0 %v807
      %v2771 = vpop.f32.mrb[0].mxu0
      %v2772 = vadd.f32 %v2701, %v2771
      %v2773 = vpop.f32.mrb[0].mxu0
      %v2774 = vadd.f32 %v2703, %v2773
      %v2775 = vpop.f32.mrb[0].mxu0
      %v2776 = vadd.f32 %v2705, %v2775
      %v2777 = vpop.f32.mrb[0].mxu0
      %v2778 = vadd.f32 %v2707, %v2777
      %2779 = vmatprep.mubr.bf16.mxu0 %v827
      %2780 = vmatmul.mubr.bf16.gmra.mrb[0].mxu0 %v826
      %v2781 = vpop.f32.mrb[0].mxu0
      %v2782 = vadd.f32 %v2711, %v2781
      %v2783 = vpop.f32.mrb[0].mxu0
      %v2784 = vadd.f32 %v2713, %v2783
      %v2785 = vpop.f32.mrb[0].mxu0
      %v2786 = vpop.f32.mrb[0].mxu0
      %2787 = vdwg.mxu0
      %2788 = vmatprep.subr.bf16.mxu0 %v1986
      %2789 = vmatpush1.bf16.msra.mxu0 %v1985
      %2790 = vmatprep.subr.bf16.mxu0 %v1988
      %2791 = vmatpush1.bf16.msra.mxu0 %v1987
      %2792 = vmatprep.subr.bf16.mxu0 %v1990
      %2793 = vmatpush1.bf16.msra.mxu0 %v1989
      %2794 = vmatprep.subr.bf16.mxu0 %v1992
      %2795 = vmatpush1.bf16.msra.mxu0 %v1991
      %2796 = vmatprep.subr.bf16.mxu0 %v1994
      %2797 = vmatpush1.bf16.msra.mxu0 %v1993
      %2798 = vmatprep.subr.bf16.mxu0 %v1996
      %2799 = vmatpush1.bf16.msra.mxu0 %v1995
      %2800 = vmatprep.subr.bf16.mxu0 %v1998
      %2801 = vmatpush1.bf16.msra.mxu0 %v1997
      %2802 = vmatprep.subr.bf16.mxu0 %v2000
      %2803 = vmatpush1.bf16.msra.mxu0 %v1999
      %2804 = vmatprep.subr.bf16.mxu0 %v2002
      %2805 = vmatpush1.bf16.msra.mxu0 %v2001
      %2806 = vmatprep.subr.bf16.mxu0 %v2004
      %2807 = vmatpush1.bf16.msra.mxu0 %v2003
      %2808 = vmatprep.subr.bf16.mxu0 %v2006
      %2809 = vmatpush1.bf16.msra.mxu0 %v2005
      %2810 = vmatprep.subr.bf16.mxu0 %v2008
      %2811 = vmatpush1.bf16.msra.mxu0 %v2007
      %2812 = vmatprep.subr.bf16.mxu0 %v2010
      %2813 = vmatpush1.bf16.msra.mxu0 %v2009
      %2814 = vmatprep.subr.bf16.mxu0 %v2012
      %2815 = vmatpush1.bf16.msra.mxu0 %v2011
      %2816 = vmatprep.subr.bf16.mxu0 %v2014
      %2817 = vmatpush1.bf16.msra.mxu0 %v2013
      %2818 = vmatprep.subr.bf16.mxu0 %v2016
      %2819 = vmatpush1.bf16.msra.mxu0 %v2015
      %2820 = vmatprep.mubr.bf16.mxu0 %v772
      %2821 = vmatmul.mubr.bf16.gmra.mrb[0].mxu0 %v771
      %v2822 = vpop.f32.mrb[0].mxu0
      %v2823 = vadd.f32 %v2752, %v2822
      %v2824 = vpop.f32.mrb[0].mxu0
      %v2825 = vadd.f32 %v2754, %v2824
      %v2826 = vpop.f32.mrb[0].mxu0
      %v2827 = vadd.f32 %v2756, %v2826
      %v2828 = vpop.f32.mrb[0].mxu0
      %v2829 = vadd.f32 %v2758, %v2828
      %2830 = vmatprep.mubr.bf16.mxu0 %v791
      %2831 = vmatmul.mubr.bf16.gmra.mrb[0].mxu0 %v790
      %v2832 = vpop.f32.mrb[0].mxu0
      %v2833 = vadd.f32 %v2762, %v2832
      %v2834 = vpop.f32.mrb[0].mxu0
      %v2835 = vadd.f32 %v2764, %v2834
      %v2836 = vpop.f32.mrb[0].mxu0
      %v2837 = vadd.f32 %v2766, %v2836
      %v2838 = vpop.f32.mrb[0].mxu0
      %v2839 = vadd.f32 %v2768, %v2838
      %2840 = vmatprep.mubr.bf16.mxu0 %v810
      %2841 = vmatmul.mubr.bf16.gmra.mrb[0].mxu0 %v809
      %v2842 = vpop.f32.mrb[0].mxu0
      %v2843 = vadd.f32 %v2772, %v2842
      %v2844 = vpop.f32.mrb[0].mxu0
      %v2845 = vadd.f32 %v2774, %v2844
      %v2846 = vpop.f32.mrb[0].mxu0
      %v2847 = vadd.f32 %v2776, %v2846
      %v2848 = vpop.f32.mrb[0].mxu0
      %v2849 = vadd.f32 %v2778, %v2848
      %2850 = vmatprep.mubr.bf16.mxu0 %v829
      %2851 = vmatmul.mubr.bf16.gmra.mrb[0].mxu0 %v828
      %v2852 = vpop.f32.mrb[0].mxu0
      %v2853 = vadd.f32 %v2782, %v2852
      %v2854 = vpop.f32.mrb[0].mxu0
      %v2855 = vadd.f32 %v2784, %v2854
      %v2856 = vpop.f32.mrb[0].mxu0
      %v2857 = vpop.f32.mrb[0].mxu0
      %2858 = vdwg.mxu0
      %2859 = vmatprep.subr.bf16.mxu0 %v2018
      %2860 = vmatpush1.bf16.msra.mxu0 %v2017
      %2861 = vmatprep.subr.bf16.mxu0 %v2020
      %2862 = vmatpush1.bf16.msra.mxu0 %v2019
      %2863 = vmatprep.subr.bf16.mxu0 %v2022
      %2864 = vmatpush1.bf16.msra.mxu0 %v2021
      %2865 = vmatprep.subr.bf16.mxu0 %v2024
      %2866 = vmatpush1.bf16.msra.mxu0 %v2023
      %2867 = vmatprep.subr.bf16.mxu0 %v2026
      %2868 = vmatpush1.bf16.msra.mxu0 %v2025
      %2869 = vmatprep.subr.bf16.mxu0 %v2028
      %2870 = vmatpush1.bf16.msra.mxu0 %v2027
      %2871 = vmatprep.subr.bf16.mxu0 %v2030
      %2872 = vmatpush1.bf16.msra.mxu0 %v2029
      %2873 = vmatprep.subr.bf16.mxu0 %v2032
      %2874 = vmatpush1.bf16.msra.mxu0 %v2031
      %2875 = vmatprep.subr.bf16.mxu0 %v2034
      %2876 = vmatpush1.bf16.msra.mxu0 %v2033
      %2877 = vmatprep.subr.bf16.mxu0 %v2036
      %2878 = vmatpush1.bf16.msra.mxu0 %v2035
      %2879 = vmatprep.subr.bf16.mxu0 %v2038
      %2880 = vmatpush1.bf16.msra.mxu0 %v2037
      %2881 = vmatprep.subr.bf16.mxu0 %v2040
      %2882 = vmatpush1.bf16.msra.mxu0 %v2039
      %2883 = vmatprep.subr.bf16.mxu0 %v2042
      %2884 = vmatpush1.bf16.msra.mxu0 %v2041
      %2885 = vmatprep.subr.bf16.mxu0 %v2044
      %2886 = vmatpush1.bf16.msra.mxu0 %v2043
      %2887 = vmatprep.subr.bf16.mxu0 %v2046
      %2888 = vmatpush1.bf16.msra.mxu0 %v2045
      %2889 = vmatprep.subr.bf16.mxu0 %v2048
      %2890 = vmatpush1.bf16.msra.mxu0 %v2047
      %2891 = vmatprep.mubr.bf16.mxu0 %v774
      %2892 = vmatmul.mubr.bf16.gmra.mrb[0].mxu0 %v773
      %v2893 = vpop.f32.mrb[0].mxu0
      %v2894 = vadd.f32 %v2823, %v2893
      %v2895 = vpop.f32.mrb[0].mxu0
      %v2896 = vadd.f32 %v2825, %v2895
      %v2897 = vpop.f32.mrb[0].mxu0
      %v2898 = vadd.f32 %v2827, %v2897
      %v2899 = vpop.f32.mrb[0].mxu0
      %v2900 = vadd.f32 %v2829, %v2899
      %2901 = vmatprep.mubr.bf16.mxu0 %v793
      %2902 = vmatmul.mubr.bf16.gmra.mrb[0].mxu0 %v792
      %v2903 = vpop.f32.mrb[0].mxu0
      %v2904 = vadd.f32 %v2833, %v2903
      %v2905 = vpop.f32.mrb[0].mxu0
      %v2906 = vadd.f32 %v2835, %v2905
      %v2907 = vpop.f32.mrb[0].mxu0
      %v2908 = vadd.f32 %v2837, %v2907
      %v2909 = vpop.f32.mrb[0].mxu0
      %v2910 = vadd.f32 %v2839, %v2909
      %2911 = vmatprep.mubr.bf16.mxu0 %v812
      %2912 = vmatmul.mubr.bf16.gmra.mrb[0].mxu0 %v811
      %v2913 = vpop.f32.mrb[0].mxu0
      %v2914 = vadd.f32 %v2843, %v2913
      %v2915 = vpop.f32.mrb[0].mxu0
      %v2916 = vadd.f32 %v2845, %v2915
      %v2917 = vpop.f32.mrb[0].mxu0
      %v2918 = vadd.f32 %v2847, %v2917
      %v2919 = vpop.f32.mrb[0].mxu0
      %v2920 = vadd.f32 %v2849, %v2919
      %2921 = vmatprep.mubr.bf16.mxu0 %v831
      %2922 = vmatmul.mubr.bf16.gmra.mrb[0].mxu0 %v830
      %v2923 = vpop.f32.mrb[0].mxu0
      %v2924 = vadd.f32 %v2853, %v2923
      %v2925 = vpop.f32.mrb[0].mxu0
      %v2926 = vadd.f32 %v2855, %v2925
      %v2927 = vpop.f32.mrb[0].mxu0
      %v2928 = vpop.f32.mrb[0].mxu0
      %2929 = vdwg.mxu0
      %2930 = vmatprep.subr.bf16.mxu0 %v2050
      %2931 = vmatpush1.bf16.msra.mxu0 %v2049
      %2932 = vmatprep.subr.bf16.mxu0 %v2052
      %2933 = vmatpush1.bf16.msra.mxu0 %v2051
      %2934 = vmatprep.subr.bf16.mxu0 %v2054
      %2935 = vmatpush1.bf16.msra.mxu0 %v2053
      %2936 = vmatprep.subr.bf16.mxu0 %v2056
      %2937 = vmatpush1.bf16.msra.mxu0 %v2055
      %2938 = vmatprep.subr.bf16.mxu0 %v2058
      %2939 = vmatpush1.bf16.msra.mxu0 %v2057
      %2940 = vmatprep.subr.bf16.mxu0 %v2060
      %2941 = vmatpush1.bf16.msra.mxu0 %v2059
      %2942 = vmatprep.subr.bf16.mxu0 %v2062
      %2943 = vmatpush1.bf16.msra.mxu0 %v2061
      %2944 = vmatprep.subr.bf16.mxu0 %v2064
      %2945 = vmatpush1.bf16.msra.mxu0 %v2063
      %2946 = vmatprep.subr.bf16.mxu0 %v2066
      %2947 = vmatpush1.bf16.msra.mxu0 %v2065
      %2948 = vmatprep.subr.bf16.mxu0 %v2068
      %2949 = vmatpush1.bf16.msra.mxu0 %v2067
      %2950 = vmatprep.subr.bf16.mxu0 %v2070
      %2951 = vmatpush1.bf16.msra.mxu0 %v2069
      %2952 = vmatprep.subr.bf16.mxu0 %v2072
      %2953 = vmatpush1.bf16.msra.mxu0 %v2071
      %2954 = vmatprep.subr.bf16.mxu0 %v2074
      %2955 = vmatpush1.bf16.msra.mxu0 %v2073
      %2956 = vmatprep.subr.bf16.mxu0 %v2076
      %2957 = vmatpush1.bf16.msra.mxu0 %v2075
      %2958 = vmatprep.subr.bf16.mxu0 %v2078
      %2959 = vmatpush1.bf16.msra.mxu0 %v2077
      %2960 = vmatprep.subr.bf16.mxu0 %v2080
      %2961 = vmatpush1.bf16.msra.mxu0 %v2079
      %2962 = vmatprep.mubr.bf16.mxu0 %v776
      %2963 = vmatmul.mubr.bf16.gmra.mrb[0].mxu0 %v775
      %v2964 = vpop.f32.mrb[0].mxu0
      %v2965 = vadd.f32 %v2894, %v2964
      %v2966 = vpop.f32.mrb[0].mxu0
      %v2967 = vadd.f32 %v2896, %v2966
      %v2968 = vpop.f32.mrb[0].mxu0
      %v2969 = vadd.f32 %v2898, %v2968
      %v2970 = vpop.f32.mrb[0].mxu0
      %v2971 = vadd.f32 %v2900, %v2970
      %2972 = vmatprep.mubr.bf16.mxu0 %v795
      %2973 = vmatmul.mubr.bf16.gmra.mrb[0].mxu0 %v794
      %v2974 = vpop.f32.mrb[0].mxu0
      %v2975 = vadd.f32 %v2904, %v2974
      %v2976 = vpop.f32.mrb[0].mxu0
      %v2977 = vadd.f32 %v2906, %v2976
      %v2978 = vpop.f32.mrb[0].mxu0
      %v2979 = vadd.f32 %v2908, %v2978
      %v2980 = vpop.f32.mrb[0].mxu0
      %v2981 = vadd.f32 %v2910, %v2980
      %2982 = vmatprep.mubr.bf16.mxu0 %v814
      %2983 = vmatmul.mubr.bf16.gmra.mrb[0].mxu0 %v813
      %v2984 = vpop.f32.mrb[0].mxu0
      %v2985 = vadd.f32 %v2914, %v2984
      %v2986 = vpop.f32.mrb[0].mxu0
      %v2987 = vadd.f32 %v2916, %v2986
      %v2988 = vpop.f32.mrb[0].mxu0
      %v2989 = vadd.f32 %v2918, %v2988
      %v2990 = vpop.f32.mrb[0].mxu0
      %v2991 = vadd.f32 %v2920, %v2990
      %2992 = vmatprep.mubr.bf16.mxu0 %v833
      %2993 = vmatmul.mubr.bf16.gmra.mrb[0].mxu0 %v832
      %v2994 = vpop.f32.mrb[0].mxu0
      %v2995 = vadd.f32 %v2924, %v2994
      %v2996 = vpop.f32.mrb[0].mxu0
      %v2997 = vadd.f32 %v2926, %v2996
      %v2998 = vpop.f32.mrb[0].mxu0
      %v2999 = vpop.f32.mrb[0].mxu0
      %3000 = vdwg.mxu0
      %3001 = vmatprep.subr.bf16.mxu0 %v2082
      %3002 = vmatpush1.bf16.msra.mxu0 %v2081
      %3003 = vmatprep.subr.bf16.mxu0 %v2084
      %3004 = vmatpush1.bf16.msra.mxu0 %v2083
      %3005 = vmatprep.subr.bf16.mxu0 %v2086
      %3006 = vmatpush1.bf16.msra.mxu0 %v2085
      %3007 = vmatprep.subr.bf16.mxu0 %v2088
      %3008 = vmatpush1.bf16.msra.mxu0 %v2087
      %3009 = vmatprep.subr.bf16.mxu0 %v2090
      %3010 = vmatpush1.bf16.msra.mxu0 %v2089
      %3011 = vmatprep.subr.bf16.mxu0 %v2092
      %3012 = vmatpush1.bf16.msra.mxu0 %v2091
      %3013 = vmatprep.subr.bf16.mxu0 %v2094
      %3014 = vmatpush1.bf16.msra.mxu0 %v2093
      %3015 = vmatprep.subr.bf16.mxu0 %v2096
      %3016 = vmatpush1.bf16.msra.mxu0 %v2095
      %3017 = vmatprep.subr.bf16.mxu0 %v2098
      %3018 = vmatpush1.bf16.msra.mxu0 %v2097
      %3019 = vmatprep.subr.bf16.mxu0 %v2100
      %3020 = vmatpush1.bf16.msra.mxu0 %v2099
      %3021 = vmatprep.subr.bf16.mxu0 %v2102
      %3022 = vmatpush1.bf16.msra.mxu0 %v2101
      %3023 = vmatprep.subr.bf16.mxu0 %v2104
      %3024 = vmatpush1.bf16.msra.mxu0 %v2103
      %3025 = vmatprep.subr.bf16.mxu0 %v2106
      %3026 = vmatpush1.bf16.msra.mxu0 %v2105
      %3027 = vmatprep.subr.bf16.mxu0 %v2108
      %3028 = vmatpush1.bf16.msra.mxu0 %v2107
      %3029 = vmatprep.subr.bf16.mxu0 %v2110
      %3030 = vmatpush1.bf16.msra.mxu0 %v2109
      %3031 = vmatprep.subr.bf16.mxu0 %v2112
      %3032 = vmatpush1.bf16.msra.mxu0 %v2111
      %3033 = vmatprep.mubr.bf16.mxu0 %v778
      %3034 = vmatmul.mubr.bf16.gmra.mrb[0].mxu0 %v777
      %v3035 = vpop.f32.mrb[0].mxu0
      %v3036 = vadd.f32 %v2965, %v3035
      %v3037 = vpop.f32.mrb[0].mxu0
      %v3038 = vadd.f32 %v2967, %v3037
      %v3039 = vpop.f32.mrb[0].mxu0
      %v3040 = vadd.f32 %v2969, %v3039
      %v3041 = vpop.f32.mrb[0].mxu0
      %v3042 = vadd.f32 %v2971, %v3041
      %3043 = vmatprep.mubr.bf16.mxu0 %v797
      %3044 = vmatmul.mubr.bf16.gmra.mrb[0].mxu0 %v796
      %v3045 = vpop.f32.mrb[0].mxu0
      %v3046 = vadd.f32 %v2975, %v3045
      %v3047 = vpop.f32.mrb[0].mxu0
      %v3048 = vadd.f32 %v2977, %v3047
      %v3049 = vpop.f32.mrb[0].mxu0
      %v3050 = vadd.f32 %v2979, %v3049
      %v3051 = vpop.f32.mrb[0].mxu0
      %v3052 = vadd.f32 %v2981, %v3051
      %3053 = vmatprep.mubr.bf16.mxu0 %v816
      %3054 = vmatmul.mubr.bf16.gmra.mrb[0].mxu0 %v815
      %v3055 = vpop.f32.mrb[0].mxu0
      %v3056 = vadd.f32 %v2985, %v3055
      %v3057 = vpop.f32.mrb[0].mxu0
      %v3058 = vadd.f32 %v2987, %v3057
      %v3059 = vpop.f32.mrb[0].mxu0
      %v3060 = vadd.f32 %v2989, %v3059
      %v3061 = vpop.f32.mrb[0].mxu0
      %v3062 = vadd.f32 %v2991, %v3061
      %3063 = vmatprep.mubr.bf16.mxu0 %v835
      %3064 = vmatmul.mubr.bf16.gmra.mrb[0].mxu0 %v834
      %v3065 = vpop.f32.mrb[0].mxu0
      %v3066 = vadd.f32 %v2995, %v3065
      %v3067 = vpop.f32.mrb[0].mxu0
      %v3068 = vadd.f32 %v2997, %v3067
      %v3069 = vpop.f32.mrb[0].mxu0
      %v3070 = vpop.f32.mrb[0].mxu0
      %3071 = vdwg.mxu0
      %3072 = vmatprep.subr.bf16.mxu0 %v2114
      %3073 = vmatpush1.bf16.msra.mxu0 %v2113
      %3074 = vmatprep.subr.bf16.mxu0 %v2116
      %3075 = vmatpush1.bf16.msra.mxu0 %v2115
      %3076 = vmatprep.subr.bf16.mxu0 %v2118
      %3077 = vmatpush1.bf16.msra.mxu0 %v2117
      %3078 = vmatprep.subr.bf16.mxu0 %v2120
      %3079 = vmatpush1.bf16.msra.mxu0 %v2119
      %3080 = vmatprep.subr.bf16.mxu0 %v2122
      %3081 = vmatpush1.bf16.msra.mxu0 %v2121
      %3082 = vmatprep.subr.bf16.mxu0 %v2124
      %3083 = vmatpush1.bf16.msra.mxu0 %v2123
      %3084 = vmatprep.subr.bf16.mxu0 %v2126
      %3085 = vmatpush1.bf16.msra.mxu0 %v2125
      %3086 = vmatprep.subr.bf16.mxu0 %v2128
      %3087 = vmatpush1.bf16.msra.mxu0 %v2127
      %3088 = vmatprep.subr.bf16.mxu0 0
      %3089 = vmatpush1.bf16.msra.mxu0 0
      %3090 = vmatprep.subr.bf16.mxu0 0
      %3091 = vmatpush1.bf16.msra.mxu0 0
      %3092 = vmatprep.subr.bf16.mxu0 0
      %3093 = vmatpush1.bf16.msra.mxu0 0
      %3094 = vmatprep.subr.bf16.mxu0 0
      %3095 = vmatpush1.bf16.msra.mxu0 0
      %3096 = vmatprep.subr.bf16.mxu0 0
      %3097 = vmatpush1.bf16.msra.mxu0 0
      %3098 = vmatprep.subr.bf16.mxu0 0
      %3099 = vmatpush1.bf16.msra.mxu0 0
      %3100 = vmatprep.subr.bf16.mxu0 0
      %3101 = vmatpush1.bf16.msra.mxu0 0
      %3102 = vmatprep.subr.bf16.mxu0 0
      %3103 = vmatpush1.bf16.msra.mxu0 0
      %3104 = vmatprep.mubr.bf16.mxu0 0
      %3105 = vmatmul.mubr.bf16.gmra.mrb[0].mxu0 %v779
      %v3106 = vpop.f32.mrb[0].mxu0
      %v3107 = vadd.f32 %v3036, %v3106
      %v3108 = vpop.f32.mrb[0].mxu0
      %v3109 = vadd.f32 %v3038, %v3108
      %v3110 = vpop.f32.mrb[0].mxu0
      %v3111 = vadd.f32 %v3040, %v3110
      %v3112 = vpop.f32.mrb[0].mxu0
      %v3113 = vadd.f32 %v3042, %v3112
      %3114 = vmatprep.mubr.bf16.mxu0 0
      %3115 = vmatmul.mubr.bf16.gmra.mrb[0].mxu0 %v798
      %v3116 = vpop.f32.mrb[0].mxu0
      %v3117 = vadd.f32 %v3046, %v3116
      %v3118 = vpop.f32.mrb[0].mxu0
      %v3119 = vadd.f32 %v3048, %v3118
      %v3120 = vpop.f32.mrb[0].mxu0
      %v3121 = vadd.f32 %v3050, %v3120
      %v3122 = vpop.f32.mrb[0].mxu0
      %v3123 = vadd.f32 %v3052, %v3122
      %3124 = vmatprep.mubr.bf16.mxu0 0
      %3125 = vmatmul.mubr.bf16.gmra.mrb[0].mxu0 %v817
      %v3126 = vpop.f32.mrb[0].mxu0
      %v3127 = vadd.f32 %v3056, %v3126
      %v3128 = vpop.f32.mrb[0].mxu0
      %v3129 = vadd.f32 %v3058, %v3128
      %v3130 = vpop.f32.mrb[0].mxu0
      %v3131 = vadd.f32 %v3060, %v3130
      %v3132 = vpop.f32.mrb[0].mxu0
      %v3133 = vadd.f32 %v3062, %v3132
      %3134 = vmatprep.mubr.bf16.mxu0 0
      %3135 = vmatmul.mubr.bf16.gmra.mrb[0].mxu0 %v836
      %v3136 = vpop.f32.mrb[0].mxu0
      %v3137 = vadd.f32 %v3066, %v3136
      %v3138 = vpop.f32.mrb[0].mxu0
      %v3139 = vadd.f32 %v3068, %v3138
      %v3140 = vpop.f32.mrb[0].mxu0
      %v3141 = vpop.f32.mrb[0].mxu0
      %3142 = vdwg.mxu0
      %v3143 = vmax.f32 %v3107, 0.0
      %v3144 = vmax.f32 %v3109, 0.0
      %v3145 = vmax.f32 %v3111, 0.0
      %v3146 = vmax.f32 %v3113, 0.0
      %v3147 = vmax.f32 %v3117, 0.0
      %v3148 = vmax.f32 %v3119, 0.0
      %v3149 = vmax.f32 %v3121, 0.0
      %v3150 = vmax.f32 %v3123, 0.0
      %v3151 = vmax.f32 %v3127, 0.0
      %v3152 = vmax.f32 %v3129, 0.0
      %v3153 = vmax.f32 %v3131, 0.0
      %v3154 = vmax.f32 %v3133, 0.0
      %v3155 = vmax.f32 %v3137, 0.0
      %v3156 = vmax.f32 %v3139, 0.0
      %v3157 = vpack.c.bf16 %v3145, %v3143
      %v3158 = vpack.c.bf16 %v3146, %v3144
      %v3159 = vpack.c.bf16 %v3149, %v3147
      %v3160 = vpack.c.bf16 %v3150, %v3148
      %v3161 = vpack.c.bf16 %v3153, %v3151
      %v3162 = vpack.c.bf16 %v3154, %v3152
      %v3163 = vpack.c.bf16 %v3155, %v3155
      %v3164 = vpack.c.bf16 %v3156, %v3156
      %v3173 = vunpack.c.l.b16 %v3157
      %v3174 = vunpack.c.l.b16 %v3158
      %v3175 = vunpack.c.h.b16 %v3157
      %v3176 = vunpack.c.h.b16 %v3158
      %v3177 = vunpack.c.l.b16 %v3159
      %v3178 = vunpack.c.l.b16 %v3160
      %v3179 = vunpack.c.h.b16 %v3159
      %v3180 = vunpack.c.h.b16 %v3160
      %v3181 = vunpack.c.l.b16 %v3161
      %v3182 = vunpack.c.l.b16 %v3162
      %v3183 = vunpack.c.h.b16 %v3161
      %v3184 = vunpack.c.h.b16 %v3162
      %v3185 = vunpack.c.l.b16 %v3163
      %v3186 = vunpack.c.l.b16 %v3164
      %v3187 = vpack.c.b16 %v3174, %v3173
      %v3188 = vpack.c.b16 %v3176, %v3175
      %v3189 = vpack.c.b16 %v3178, %v3177
      %v3190 = vpack.c.b16 %v3180, %v3179
      %v3191 = vpack.c.b16 %v3182, %v3181
      %v3192 = vpack.c.b16 %v3184, %v3183
      %v3193 = vpack.c.b16 %v3186, %v3185
      %3201 = vst [vmem:[%s170] sm:$0xff] %v3187
      %3202 = vst [vmem:[%s170 + $0x8] sm:$0xff] %v3188
      %3203 = vst [vmem:[%s170 + $0x10] sm:$0xff] %v3189
      %3204 = vst [vmem:[%s170 + $0x18] sm:$0xff] %v3190
      %3205 = vst [vmem:[%s170 + $0x20] sm:$0xff] %v3191
      %3206 = vst [vmem:[%s170 + $0x28] sm:$0xff] %v3192
      %3207 = vst [vmem:[%s170 + $0x30] sm:$0xff] %v3193
      %p3208 = scmp.lt.s32.totalorder %s14, 1
      %s3209 = scalar_select %p3208, %s14, 1
      %s3210 = smul.addr %s3209, 14
      %s3211 = smul.addr %s3210, 4
      %s3212 = scalar_lea.vmem %s3, %s3211
      // Predicated region
      $region33: #{model_strided_a_forward.4} parent=31 // pred_check
        %p3213 = pneg %p100
      $region34: #{model_strided_a_forward.4} parent=31 // pred_check_branch
        %3215 = sbr.rel (%p3213) target = $region36
      $region35: #{model_strided_a_forward.4} parent=31 // pred_region
        _
      $region36: #{model_strided_a_forward.4} parent=31 // pred_fallthru
        _
    $region32: #{model_strided_a_forward.4} parent=5 // pred_fallthru
      _
    %p3216 = scmp.le.s32.totalorder 2, %s9
    // Predicated region
    $region37: #{model_strided_a_forward.4} parent=5 // pred_check
      %p3217 = pneg %p3216
    $region38: #{model_strided_a_forward.4} parent=5 // pred_check_branch
      %3219 = sbr.rel (%p3217) target = $region40
    $region39: #{model_strided_a_forward.4} parent=5 // pred_region
      %s3220 = ssub.s32 %s9, 2
      // Predicated region
      $region41: #{model_strided_a_forward.4} parent=39 // pred_check
        %p3221 = pneg %p106
      $region42: #{model_strided_a_forward.4} parent=39 // pred_check_branch
        %3223 = sbr.rel (%p3221) target = $region44
      $region43: #{model_strided_a_forward.4} parent=39 // pred_region
        %p3224 = scmp.lt.s32.totalorder %s15, 1
        %s3225 = scalar_select %p3224, %s15, 1
        %s3226 = smul.addr %s3225, 14
        %s3227 = smul.addr %s3226, 4
        %s3228 = scalar_lea.vmem %s3, %s3227
      $region44: #{model_strided_a_forward.4} parent=39 // pred_fallthru
        _
    $region40: #{model_strided_a_forward.4} parent=5 // pred_fallthru
      _
  $region6: #{model_strided_a_forward.4} parent=0 // loop_footer
    %s13 = sadd.s32 1, %s9
  $region7: #{model_strided_a_forward.4} parent=0 // loop_footer_branch
    %8 = sbr.rel target = $region3
  $region8: #{model_strided_a_forward.4} parent=0 // loop_exit
    _

// kernel: model_strided_a_forward.5
$region0: #{model_strided_a_forward.5}
  #allocation0 [shape = 'u32[]', space=smem, size = 0x4, offset = 0x4, fixed_abs, tag = 'smem constant byte address 0x4 - core index']
  #allocation1 [shape = 'u32[144,128]{1,0:T(1,128)}', space=vmem, size = 0x12000, scoped, tag = 'internal scratch']
  %s0 = inlined_call_operand.vmem [shape: bf16[2,56,1792], index: 0, kind: input, shape index: {}]
  %s1 = inlined_call_operand.vmem [shape: bf16[1792,256], index: 1, kind: input, shape index: {}]
  %s2 = inlined_call_operand.vmem [shape: f32[1,256], index: 2, kind: input, shape index: {}]
  %s3 = inlined_call_operand.vmem [shape: bf16[256,256], index: 3, kind: input, shape index: {}]
  %s4 = inlined_call_operand.vmem [shape: f32[1,256], index: 4, kind: input, shape index: {}]
  %s5 = inlined_call_operand.vmem [shape: bf16[256,128], index: 5, kind: input, shape index: {}]
  %s6 = inlined_call_operand.vmem [shape: f32[1,128], index: 6, kind: input, shape index: {}]
  %s7 = inlined_call_operand.vmem [shape: f32[2,8,128], index: 7, kind: output, shape index: {}]
  %s8 = sld [smem:[#allocation0]]
  $region61: #{model_strided_a_forward.5} parent=0
    _
  %s10 = ssub.s32 1, %s8
  %s11 = scalar_select 0, %s10, %s8
  loop: start=0, step=1, limit=4
  $region2: #{model_strided_a_forward.5} parent=0 // loop_pre_header
    _
  $region3: #{model_strided_a_forward.5} parent=0 // loop_header
    %s13 = sphi 0, %s17
    %p14 = scmp.ge.s32.totalorder %s13, 4
    %s23 = sphi 0, %s25
    %s26 = sphi 0, %s23
    %s27 = sphi 0, %s26
    %s43 = sphi 0, %s27
    %s47 = sphi 0, %s47
    %s49 = sphi 0, %s47
    %s50 = sphi 0, %s49
    %s64 = sphi 0, %s50
    %s68 = sphi 0, %s68
    %s70 = sphi 0, %s68
    %s71 = sphi 0, %s70
    %s85 = sphi 0, %s71
    %s89 = sphi 0, %s89
    %s91 = sphi 0, %s89
    %s92 = sphi 0, %s91
    %s106 = sphi 0, %s92
    %s110 = sphi 0, %s110
    %s112 = sphi 0, %s110
    %s113 = sphi 0, %s112
    %s127 = sphi 0, %s113
    %s131 = sphi 0, %s131
    %s133 = sphi 0, %s131
    %s134 = sphi 0, %s133
    %s148 = sphi 0, %s134
    %s152 = sphi 0, %s152
    %s154 = sphi 0, %s152
    %s155 = sphi 0, %s154
    %s169 = sphi 0, %s155
    %s175 = sphi 0, %s177
    %s178 = sphi 0, %s175
    %s179 = sphi 0, %s178
    %s195 = sphi 0, %s179
  $region4: #{model_strided_a_forward.5} parent=0 // loop_header_branch
    %16 = sbr.rel (%p14) target = $region8
  $region5: #{model_strided_a_forward.5} parent=0 // loop_body
    %s18 = ssub.s32 %s13, 1
    %s19 = ssub.s32 %s13, 2
    %s20 = sadd.s32 %s13, 1
    %s21 = ssub.s32 %s13, %s20
    %p22 = scmp.eq.s32.totalorder %s21, 0
    %s24 = sadd.s32 %s23, 1
    %s25 = scalar_select %p22, %s23, %s24
    %p28 = pneg %p22
    %p29 = scmp.eq.s32.totalorder %s13, 1
    %p30 = por %p28, %p29
    %p31 = scmp.ne.s32.totalorder %s23, %s26
    %p32 = scmp.eq.s32.totalorder %s13, 0
    %p33 = por %p31, %p32
    %p34 = scmp.ne.s32.totalorder %s23, %s26
    %p35 = scmp.eq.s32.totalorder %s18, 1
    %p36 = por %p34, %p35
    %p37 = scmp.ne.s32.totalorder %s26, %s27
    %p38 = scmp.eq.s32.totalorder %s18, 0
    %p39 = por %p37, %p38
    %p40 = scmp.ne.s32.totalorder %s26, %s27
    %p41 = scmp.eq.s32.totalorder %s19, 1
    %p42 = por %p40, %p41
    %p44 = scmp.ne.s32.totalorder %s27, %s43
    %p45 = scmp.eq.s32.totalorder %s19, 0
    %p46 = por %p44, %p45
    %s48 = sadd.s32 %s47, 1
    %p51 = scmp.eq.s32.totalorder %s13, 1
    %p52 = scmp.ne.s32.totalorder %s47, %s49
    %p53 = scmp.eq.s32.totalorder %s13, 0
    %p54 = por %p52, %p53
    %p55 = scmp.ne.s32.totalorder %s47, %s49
    %p56 = scmp.eq.s32.totalorder %s18, 1
    %p57 = por %p55, %p56
    %p58 = scmp.ne.s32.totalorder %s49, %s50
    %p59 = scmp.eq.s32.totalorder %s18, 0
    %p60 = por %p58, %p59
    %p61 = scmp.ne.s32.totalorder %s49, %s50
    %p62 = scmp.eq.s32.totalorder %s19, 1
    %p63 = por %p61, %p62
    %p65 = scmp.ne.s32.totalorder %s50, %s64
    %p66 = scmp.eq.s32.totalorder %s19, 0
    %p67 = por %p65, %p66
    %s69 = sadd.s32 %s68, 1
    %p72 = scmp.eq.s32.totalorder %s13, 1
    %p73 = scmp.ne.s32.totalorder %s68, %s70
    %p74 = scmp.eq.s32.totalorder %s13, 0
    %p75 = por %p73, %p74
    %p76 = scmp.ne.s32.totalorder %s68, %s70
    %p77 = scmp.eq.s32.totalorder %s18, 1
    %p78 = por %p76, %p77
    %p79 = scmp.ne.s32.totalorder %s70, %s71
    %p80 = scmp.eq.s32.totalorder %s18, 0
    %p81 = por %p79, %p80
    %p82 = scmp.ne.s32.totalorder %s70, %s71
    %p83 = scmp.eq.s32.totalorder %s19, 1
    %p84 = por %p82, %p83
    %p86 = scmp.ne.s32.totalorder %s71, %s85
    %p87 = scmp.eq.s32.totalorder %s19, 0
    %p88 = por %p86, %p87
    %s90 = sadd.s32 %s89, 1
    %p93 = scmp.eq.s32.totalorder %s13, 1
    %p94 = scmp.ne.s32.totalorder %s89, %s91
    %p95 = scmp.eq.s32.totalorder %s13, 0
    %p96 = por %p94, %p95
    %p97 = scmp.ne.s32.totalorder %s89, %s91
    %p98 = scmp.eq.s32.totalorder %s18, 1
    %p99 = por %p97, %p98
    %p100 = scmp.ne.s32.totalorder %s91, %s92
    %p101 = scmp.eq.s32.totalorder %s18, 0
    %p102 = por %p100, %p101
    %p103 = scmp.ne.s32.totalorder %s91, %s92
    %p104 = scmp.eq.s32.totalorder %s19, 1
    %p105 = por %p103, %p104
    %p107 = scmp.ne.s32.totalorder %s92, %s106
    %p108 = scmp.eq.s32.totalorder %s19, 0
    %p109 = por %p107, %p108
    %s111 = sadd.s32 %s110, 1
    %p114 = scmp.eq.s32.totalorder %s13, 1
    %p115 = scmp.ne.s32.totalorder %s110, %s112
    %p116 = scmp.eq.s32.totalorder %s13, 0
    %p117 = por %p115, %p116
    %p118 = scmp.ne.s32.totalorder %s110, %s112
    %p119 = scmp.eq.s32.totalorder %s18, 1
    %p120 = por %p118, %p119
    %p121 = scmp.ne.s32.totalorder %s112, %s113
    %p122 = scmp.eq.s32.totalorder %s18, 0
    %p123 = por %p121, %p122
    %p124 = scmp.ne.s32.totalorder %s112, %s113
    %p125 = scmp.eq.s32.totalorder %s19, 1
    %p126 = por %p124, %p125
    %p128 = scmp.ne.s32.totalorder %s113, %s127
    %p129 = scmp.eq.s32.totalorder %s19, 0
    %p130 = por %p128, %p129
    %s132 = sadd.s32 %s131, 1
    %p135 = scmp.eq.s32.totalorder %s13, 1
    %p136 = scmp.ne.s32.totalorder %s131, %s133
    %p137 = scmp.eq.s32.totalorder %s13, 0
    %p138 = por %p136, %p137
    %p139 = scmp.ne.s32.totalorder %s131, %s133
    %p140 = scmp.eq.s32.totalorder %s18, 1
    %p141 = por %p139, %p140
    %p142 = scmp.ne.s32.totalorder %s133, %s134
    %p143 = scmp.eq.s32.totalorder %s18, 0
    %p144 = por %p142, %p143
    %p145 = scmp.ne.s32.totalorder %s133, %s134
    %p146 = scmp.eq.s32.totalorder %s19, 1
    %p147 = por %p145, %p146
    %p149 = scmp.ne.s32.totalorder %s134, %s148
    %p150 = scmp.eq.s32.totalorder %s19, 0
    %p151 = por %p149, %p150
    %s153 = sadd.s32 %s152, 1
    %p156 = scmp.eq.s32.totalorder %s13, 1
    %p157 = scmp.ne.s32.totalorder %s152, %s154
    %p158 = scmp.eq.s32.totalorder %s13, 0
    %p159 = por %p157, %p158
    %p160 = scmp.ne.s32.totalorder %s152, %s154
    %p161 = scmp.eq.s32.totalorder %s18, 1
    %p162 = por %p160, %p161
    %p163 = scmp.ne.s32.totalorder %s154, %s155
    %p164 = scmp.eq.s32.totalorder %s18, 0
    %p165 = por %p163, %p164
    %p166 = scmp.ne.s32.totalorder %s154, %s155
    %p167 = scmp.eq.s32.totalorder %s19, 1
    %p168 = por %p166, %p167
    %p170 = scmp.ne.s32.totalorder %s155, %s169
    %p171 = scmp.eq.s32.totalorder %s19, 0
    %p172 = por %p170, %p171
    %s173 = ssub.s32 %s13, %s20
    %p174 = scmp.eq.s32.totalorder %s173, 0
    %s176 = sadd.s32 %s175, 1
    %s177 = scalar_select %p174, %s175, %s176
    %p180 = pneg %p174
    %p181 = scmp.eq.s32.totalorder %s13, 1
    %p182 = por %p180, %p181
    %p183 = scmp.ne.s32.totalorder %s175, %s178
    %p184 = scmp.eq.s32.totalorder %s13, 0
    %p185 = por %p183, %p184
    %p186 = scmp.ne.s32.totalorder %s175, %s178
    %p187 = scmp.eq.s32.totalorder %s18, 1
    %p188 = por %p186, %p187
    %p189 = scmp.ne.s32.totalorder %s178, %s179
    %p190 = scmp.eq.s32.totalorder %s18, 0
    %p191 = por %p189, %p190
    %p192 = scmp.ne.s32.totalorder %s178, %s179
    %p193 = scmp.eq.s32.totalorder %s19, 1
    %p194 = por %p192, %p193
    %p196 = scmp.ne.s32.totalorder %s179, %s195
    %p197 = scmp.eq.s32.totalorder %s19, 0
    %p198 = por %p196, %p197
    %p199 = scmp.le.s32.totalorder 1, %s13
    %p200 = scmp.lt.s32.totalorder %s13, 3
    %p201 = pnand %p199, %p200
    %p202 = pneg %p201
    // Predicated region
    $region9: #{model_strided_a_forward.5} parent=5 // pred_check
      _
    $region10: #{model_strided_a_forward.5} parent=5 // pred_check_branch
      %204 = sbr.rel (%p201) target = $region12
    $region11: #{model_strided_a_forward.5} parent=5 // pred_region
      %s205 = ssub.s32 %s13, 1
      // Predicated region
      $region13: #{model_strided_a_forward.5} parent=11 // pred_check
        %p206 = pneg %p60
      $region14: #{model_strided_a_forward.5} parent=11 // pred_check_branch
        %208 = sbr.rel (%p206) target = $region16
      $region15: #{model_strided_a_forward.5} parent=11 // pred_region
        _
      $region16: #{model_strided_a_forward.5} parent=11 // pred_fallthru
        _
      // Predicated region
      $region17: #{model_strided_a_forward.5} parent=11 // pred_check
        %p209 = pneg %p81
      $region18: #{model_strided_a_forward.5} parent=11 // pred_check_branch
        %211 = sbr.rel (%p209) target = $region20
      $region19: #{model_strided_a_forward.5} parent=11 // pred_region
        _
      $region20: #{model_strided_a_forward.5} parent=11 // pred_fallthru
        _
      // Predicated region
      $region21: #{model_strided_a_forward.5} parent=11 // pred_check
        %p212 = pneg %p102
      $region22: #{model_strided_a_forward.5} parent=11 // pred_check_branch
        %214 = sbr.rel (%p212) target = $region24
      $region23: #{model_strided_a_forward.5} parent=11 // pred_region
        _
      $region24: #{model_strided_a_forward.5} parent=11 // pred_fallthru
        _
      // Predicated region
      $region25: #{model_strided_a_forward.5} parent=11 // pred_check
        %p215 = pneg %p123
      $region26: #{model_strided_a_forward.5} parent=11 // pred_check_branch
        %217 = sbr.rel (%p215) target = $region28
      $region27: #{model_strided_a_forward.5} parent=11 // pred_region
        _
      $region28: #{model_strided_a_forward.5} parent=11 // pred_fallthru
        _
      // Predicated region
      $region29: #{model_strided_a_forward.5} parent=11 // pred_check
        %p218 = pneg %p144
      $region30: #{model_strided_a_forward.5} parent=11 // pred_check_branch
        %220 = sbr.rel (%p218) target = $region32
      $region31: #{model_strided_a_forward.5} parent=11 // pred_region
        _
      $region32: #{model_strided_a_forward.5} parent=11 // pred_fallthru
        _
      // Predicated region
      $region33: #{model_strided_a_forward.5} parent=11 // pred_check
        %p221 = pneg %p165
      $region34: #{model_strided_a_forward.5} parent=11 // pred_check_branch
        %223 = sbr.rel (%p221) target = $region36
      $region35: #{model_strided_a_forward.5} parent=11 // pred_region
        _
      $region36: #{model_strided_a_forward.5} parent=11 // pred_fallthru
        _
    $region12: #{model_strided_a_forward.5} parent=5 // pred_fallthru
      _
    %p224 = scmp.lt.s32.totalorder %s13, 2
    // Predicated region
    $region37: #{model_strided_a_forward.5} parent=5 // pred_check
      %p225 = pneg %p224
    $region38: #{model_strided_a_forward.5} parent=5 // pred_check_branch
      %227 = sbr.rel (%p225) target = $region40
    $region39: #{model_strided_a_forward.5} parent=5 // pred_region
      // Predicated region
      $region41: #{model_strided_a_forward.5} parent=39 // pred_check
        %p228 = pneg %p33
      $region42: #{model_strided_a_forward.5} parent=39 // pred_check_branch
        %230 = sbr.rel (%p228) target = $region44
      $region43: #{model_strided_a_forward.5} parent=39 // pred_region
        %p231 = scmp.lt.s32.totalorder %s13, 1
        %s232 = scalar_select %p231, %s13, 1
        %s233 = smul.addr %s232, 98
        %s234 = smul.addr %s233, 4
        %s235 = scalar_lea.vmem %s0, %s234
      $region44: #{model_strided_a_forward.5} parent=39 // pred_fallthru
        _
    $region40: #{model_strided_a_forward.5} parent=5 // pred_fallthru
      _
    %p236 = scmp.le.s32.totalorder 1, %s13
    %p237 = scmp.lt.s32.totalorder %s13, 3
    %p238 = pnand %p236, %p237
    %p239 = pneg %p238
    // Predicated region
    $region45: #{model_strided_a_forward.5} parent=5 // pred_check
      _
    $region46: #{model_strided_a_forward.5} parent=5 // pred_check_branch
      %241 = sbr.rel (%p238) target = $region48
    $region47: #{model_strided_a_forward.5} parent=5 // pred_region
      %s242 = ssub.s32 %s13, 1
      %p243 = scmp.lt.s32.totalorder %s18, 1
      %s244 = scalar_select %p243, %s18, 1
      %s245 = smul.addr %s244, 98
      %s246 = smul.addr %s245, 4
      %s247 = scalar_lea.vmem %s0, %s246
      %p248 = pneg %p39
      %p249 = pneg %p36
      %p250 = pneg %p60
      %p251 = pneg %p57
      %p252 = pneg %p81
      %p253 = pneg %p78
      %p254 = pneg %p102
      %p255 = pneg %p99
      %p256 = pneg %p123
      %p257 = pneg %p120
      %p258 = pneg %p144
      %p259 = pneg %p141
      %p260 = pneg %p165
      %p261 = pneg %p162
      %p262 = pneg %p191
      %p263 = pneg %p188
      %p264 = scmp.lt.s32.totalorder %s18, 1
      %s265 = scalar_select %p264, %s18, 1
      %s266 = smul.addr %s265, 8
      %s267 = scalar_lea.vmem %s7, %s266
      %p268 = scmp.lt.s32.totalorder %s18, 1
      %s269 = scalar_select %p268, %s18, 1
      %s270 = smul.addr %s269, 98
      %s271 = smul.addr %s270, 4
      %s272 = scalar_lea.vmem %s0, %s271
      %p273 = scmp.lt.s32.totalorder %s18, 1
      %s274 = scalar_select %p273, %s18, 1
      %s275 = smul.addr %s274, 8
      %s276 = scalar_lea.vmem %s7, %s275
      %v278 = vld [vmem:[%s3] sm:$0xff]
      %v279 = vld [vmem:[%s3 + $0x8] sm:$0xff]
      %v280 = vld [vmem:[%s3 + $0x10] sm:$0xff]
      %v281 = vld [vmem:[%s3 + $0x18] sm:$0xff]
      %v282 = vld [vmem:[%s3 + $0x20] sm:$0xff]
      %v283 = vld [vmem:[%s3 + $0x28] sm:$0xff]
      %v284 = vld [vmem:[%s3 + $0x30] sm:$0xff]
      %v285 = vld [vmem:[%s3 + $0x38] sm:$0xff]
      %v286 = vld [vmem:[%s3 + $0x40] sm:$0xff]
      %v287 = vld [vmem:[%s3 + $0x48] sm:$0xff]
      %v288 = vld [vmem:[%s3 + $0x50] sm:$0xff]
      %v289 = vld [vmem:[%s3 + $0x58] sm:$0xff]
      %v290 = vld [vmem:[%s3 + $0x60] sm:$0xff]
      %v291 = vld [vmem:[%s3 + $0x68] sm:$0xff]
      %v292 = vld [vmem:[%s3 + $0x70] sm:$0xff]
      %v293 = vld [vmem:[%s3 + $0x78] sm:$0xff]
      %v294 = vld [vmem:[%s3 + $0x80] sm:$0xff]
      %v295 = vld [vmem:[%s3 + $0x88] sm:$0xff]
      %v296 = vld [vmem:[%s3 + $0x90] sm:$0xff]
      %v297 = vld [vmem:[%s3 + $0x98] sm:$0xff]
      %v298 = vld [vmem:[%s3 + $0xa0] sm:$0xff]
      %v299 = vld [vmem:[%s3 + $0xa8] sm:$0xff]
      %v300 = vld [vmem:[%s3 + $0xb0] sm:$0xff]
      %v301 = vld [vmem:[%s3 + $0xb8] sm:$0xff]
      %v302 = vld [vmem:[%s3 + $0xc0] sm:$0xff]
      %v303 = vld [vmem:[%s3 + $0xc8] sm:$0xff]
      %v304 = vld [vmem:[%s3 + $0xd0] sm:$0xff]
      %v305 = vld [vmem:[%s3 + $0xd8] sm:$0xff]
      %v306 = vld [vmem:[%s3 + $0xe0] sm:$0xff]
      %v307 = vld [vmem:[%s3 + $0xe8] sm:$0xff]
      %v308 = vld [vmem:[%s3 + $0xf0] sm:$0xff]
      %v309 = vld [vmem:[%s3 + $0xf8] sm:$0xff]
      %v310 = vld [vmem:[%s5] sm:$0xf]
      %v311 = vld [vmem:[%s5 + $0x4] sm:$0xf]
      %v312 = vld [vmem:[%s5 + $0x8] sm:$0xf]
      %v313 = vld [vmem:[%s5 + $0xc] sm:$0xf]
      %v314 = vld [vmem:[%s5 + $0x10] sm:$0xf]
      %v315 = vld [vmem:[%s5 + $0x14] sm:$0xf]
      %v316 = vld [vmem:[%s5 + $0x18] sm:$0xf]
      %v317 = vld [vmem:[%s5 + $0x1c] sm:$0xf]
      %v318 = vld [vmem:[%s5 + $0x20] sm:$0xf]
      %v319 = vld [vmem:[%s5 + $0x24] sm:$0xf]
      %v320 = vld [vmem:[%s5 + $0x28] sm:$0xf]
      %v321 = vld [vmem:[%s5 + $0x2c] sm:$0xf]
      %v322 = vld [vmem:[%s5 + $0x30] sm:$0xf]
      %v323 = vld [vmem:[%s5 + $0x34] sm:$0xf]
      %v324 = vld [vmem:[%s5 + $0x38] sm:$0xf]
      %v325 = vld [vmem:[%s5 + $0x3c] sm:$0xf]
      %v326 = vld [vmem:[%s5 + $0x40] sm:$0xf]
      %v327 = vld [vmem:[%s5 + $0x44] sm:$0xf]
      %v328 = vld [vmem:[%s5 + $0x48] sm:$0xf]
      %v329 = vld [vmem:[%s5 + $0x4c] sm:$0xf]
      %v330 = vld [vmem:[%s5 + $0x50] sm:$0xf]
      %v331 = vld [vmem:[%s5 + $0x54] sm:$0xf]
      %v332 = vld [vmem:[%s5 + $0x58] sm:$0xf]
      %v333 = vld [vmem:[%s5 + $0x5c] sm:$0xf]
      %v334 = vld [vmem:[%s5 + $0x60] sm:$0xf]
      %v335 = vld [vmem:[%s5 + $0x64] sm:$0xf]
      %v336 = vld [vmem:[%s5 + $0x68] sm:$0xf]
      %v337 = vld [vmem:[%s5 + $0x6c] sm:$0xf]
      %v338 = vld [vmem:[%s5 + $0x70] sm:$0xf]
      %v339 = vld [vmem:[%s5 + $0x74] sm:$0xf]
      %v340 = vld [vmem:[%s5 + $0x78] sm:$0xf]
      %v341 = vld [vmem:[%s5 + $0x7c] sm:$0xf]
      %v342 = vld [vmem:[%s4] sm:$0x3]
      %v343 = vld [vmem:[%s6] sm:$0x1]
      %v344 = vld [vmem:[%s272] sm:$0xff]
      %v345 = vld [vmem:[%s272 + $0x8] sm:$0xff]
      %v346 = vld [vmem:[%s272 + $0x10] sm:$0xff]
      %v347 = vld [vmem:[%s272 + $0x18] sm:$0xff]
      %v348 = vld [vmem:[%s272 + $0x20] sm:$0xff]
      %v349 = vld [vmem:[%s272 + $0x28] sm:$0xff]
      %v350 = vld [vmem:[%s272 + $0x30] sm:$0xff]
      %v351 = vld [vmem:[%s272 + $0x38] sm:$0xff]
      %v352 = vld [vmem:[%s272 + $0x40] sm:$0xff]
      %v353 = vld [vmem:[%s272 + $0x48] sm:$0xff]
      %v354 = vld [vmem:[%s272 + $0x50] sm:$0xff]
      %v355 = vld [vmem:[%s272 + $0x58] sm:$0xff]
      %v356 = vld [vmem:[%s272 + $0x60] sm:$0xff]
      %v357 = vld [vmem:[%s272 + $0x68] sm:$0xff]
      %v358 = vld [vmem:[%s272 + $0x70] sm:$0xff]
      %v359 = vld [vmem:[%s272 + $0x78] sm:$0xff]
      %v360 = vld [vmem:[%s272 + $0x80] sm:$0xff]
      %v361 = vld [vmem:[%s272 + $0x88] sm:$0xff]
      %v362 = vld [vmem:[%s272 + $0x90] sm:$0xff]
      %v363 = vld [vmem:[%s272 + $0x98] sm:$0xff]
      %v364 = vld [vmem:[%s272 + $0xa0] sm:$0xff]
      %v365 = vld [vmem:[%s272 + $0xa8] sm:$0xff]
      %v366 = vld [vmem:[%s272 + $0xb0] sm:$0xff]
      %v367 = vld [vmem:[%s272 + $0xb8] sm:$0xff]
      %v368 = vld [vmem:[%s272 + $0xc0] sm:$0xff]
      %v369 = vld [vmem:[%s272 + $0xc8] sm:$0xff]
      %v370 = vld [vmem:[%s272 + $0xd0] sm:$0xff]
      %v371 = vld [vmem:[%s272 + $0xd8] sm:$0xff]
      %v372 = vld [vmem:[%s272 + $0xe0] sm:$0xff]
      %v373 = vld [vmem:[%s272 + $0xe8] sm:$0xff]
      %v374 = vld [vmem:[%s272 + $0xf0] sm:$0xff]
      %v375 = vld [vmem:[%s272 + $0xf8] sm:$0xff]
      %v376 = vld [vmem:[%s272 + $0x100] sm:$0xff]
      %v377 = vld [vmem:[%s272 + $0x108] sm:$0xff]
      %v378 = vld [vmem:[%s272 + $0x110] sm:$0xff]
      %v379 = vld [vmem:[%s272 + $0x118] sm:$0xff]
      %v380 = vld [vmem:[%s272 + $0x120] sm:$0xff]
      %v381 = vld [vmem:[%s272 + $0x128] sm:$0xff]
      %v382 = vld [vmem:[%s272 + $0x130] sm:$0xff]
      %v383 = vld [vmem:[%s272 + $0x138] sm:$0xff]
      %v384 = vld [vmem:[%s272 + $0x140] sm:$0xff]
      %v385 = vld [vmem:[%s272 + $0x148] sm:$0xff]
      %v386 = vld [vmem:[%s272 + $0x150] sm:$0xff]
      %v387 = vld [vmem:[%s272 + $0x158] sm:$0xff]
      %v388 = vld [vmem:[%s272 + $0x160] sm:$0xff]
      %v389 = vld [vmem:[%s272 + $0x168] sm:$0xff]
      %v390 = vld [vmem:[%s272 + $0x170] sm:$0xff]
      %v391 = vld [vmem:[%s272 + $0x178] sm:$0xff]
      %v392 = vld [vmem:[%s272 + $0x180] sm:$0xff]
      %v393 = vld [vmem:[%s1] sm:$0xff]
      %v394 = vld [vmem:[%s1 + $0x8] sm:$0xff]
      %v395 = vld [vmem:[%s1 + $0x10] sm:$0xff]
      %v396 = vld [vmem:[%s1 + $0x18] sm:$0xff]
      %v397 = vld [vmem:[%s1 + $0x20] sm:$0xff]
      %v398 = vld [vmem:[%s1 + $0x28] sm:$0xff]
      %v399 = vld [vmem:[%s1 + $0x30] sm:$0xff]
      %v400 = vld [vmem:[%s1 + $0x38] sm:$0xff]
      %v401 = vld [vmem:[%s1 + $0x40] sm:$0xff]
      %v402 = vld [vmem:[%s1 + $0x48] sm:$0xff]
      %v403 = vld [vmem:[%s1 + $0x50] sm:$0xff]
      %v404 = vld [vmem:[%s1 + $0x58] sm:$0xff]
      %v405 = vld [vmem:[%s1 + $0x60] sm:$0xff]
      %v406 = vld [vmem:[%s1 + $0x68] sm:$0xff]
      %v407 = vld [vmem:[%s1 + $0x70] sm:$0xff]
      %v408 = vld [vmem:[%s1 + $0x78] sm:$0xff]
      %v409 = vld [vmem:[%s1 + $0x80] sm:$0xff]
      %v410 = vld [vmem:[%s1 + $0x88] sm:$0xff]
      %v411 = vld [vmem:[%s1 + $0x90] sm:$0xff]
      %v412 = vld [vmem:[%s1 + $0x98] sm:$0xff]
      %v413 = vld [vmem:[%s1 + $0xa0] sm:$0xff]
      %v414 = vld [vmem:[%s1 + $0xa8] sm:$0xff]
      %v415 = vld [vmem:[%s1 + $0xb0] sm:$0xff]
      %v416 = vld [vmem:[%s1 + $0xb8] sm:$0xff]
      %v417 = vld [vmem:[%s1 + $0xc0] sm:$0xff]
      %v418 = vld [vmem:[%s1 + $0xc8] sm:$0xff]
      %v419 = vld [vmem:[%s1 + $0xd0] sm:$0xff]
      %v420 = vld [vmem:[%s1 + $0xd8] sm:$0xff]
      %v421 = vld [vmem:[%s1 + $0xe0] sm:$0xff]
      %v422 = vld [vmem:[%s1 + $0xe8] sm:$0xff]
      %v423 = vld [vmem:[%s1 + $0xf0] sm:$0xff]
      %v424 = vld [vmem:[%s1 + $0xf8] sm:$0xff]
      %v425 = vld [vmem:[%s1 + $0x100] sm:$0xff]
      %v426 = vld [vmem:[%s1 + $0x108] sm:$0xff]
      %v427 = vld [vmem:[%s1 + $0x110] sm:$0xff]
      %v428 = vld [vmem:[%s1 + $0x118] sm:$0xff]
      %v429 = vld [vmem:[%s1 + $0x120] sm:$0xff]
      %v430 = vld [vmem:[%s1 + $0x128] sm:$0xff]
      %v431 = vld [vmem:[%s1 + $0x130] sm:$0xff]
      %v432 = vld [vmem:[%s1 + $0x138] sm:$0xff]
      %v433 = vld [vmem:[%s1 + $0x140] sm:$0xff]
      %v434 = vld [vmem:[%s1 + $0x148] sm:$0xff]
      %v435 = vld [vmem:[%s1 + $0x150] sm:$0xff]
      %v436 = vld [vmem:[%s1 + $0x158] sm:$0xff]
      %v437 = vld [vmem:[%s1 + $0x160] sm:$0xff]
      %v438 = vld [vmem:[%s1 + $0x168] sm:$0xff]
      %v439 = vld [vmem:[%s1 + $0x170] sm:$0xff]
      %v440 = vld [vmem:[%s1 + $0x178] sm:$0xff]
      %v441 = vld [vmem:[%s1 + $0x180] sm:$0xff]
      %v442 = vld [vmem:[%s1 + $0x188] sm:$0xff]
      %v443 = vld [vmem:[%s1 + $0x190] sm:$0xff]
      %v444 = vld [vmem:[%s1 + $0x198] sm:$0xff]
      %v445 = vld [vmem:[%s1 + $0x1a0] sm:$0xff]
      %v446 = vld [vmem:[%s1 + $0x1a8] sm:$0xff]
      %v447 = vld [vmem:[%s1 + $0x1b0] sm:$0xff]
      %v448 = vld [vmem:[%s1 + $0x1b8] sm:$0xff]
      %v449 = vld [vmem:[%s1 + $0x1c0] sm:$0xff]
      %v450 = vld [vmem:[%s1 + $0x1c8] sm:$0xff]
      %v451 = vld [vmem:[%s1 + $0x1d0] sm:$0xff]
      %v452 = vld [vmem:[%s1 + $0x1d8] sm:$0xff]
      %v453 = vld [vmem:[%s1 + $0x1e0] sm:$0xff]
      %v454 = vld [vmem:[%s1 + $0x1e8] sm:$0xff]
      %v455 = vld [vmem:[%s1 + $0x1f0] sm:$0xff]
      %v456 = vld [vmem:[%s1 + $0x1f8] sm:$0xff]
      %v457 = vld [vmem:[%s1 + $0x200] sm:$0xff]
      %v458 = vld [vmem:[%s1 + $0x208] sm:$0xff]
      %v459 = vld [vmem:[%s1 + $0x210] sm:$0xff]
      %v460 = vld [vmem:[%s1 + $0x218] sm:$0xff]
      %v461 = vld [vmem:[%s1 + $0x220] sm:$0xff]
      %v462 = vld [vmem:[%s1 + $0x228] sm:$0xff]
      %v463 = vld [vmem:[%s1 + $0x230] sm:$0xff]
      %v464 = vld [vmem:[%s1 + $0x238] sm:$0xff]
      %v465 = vld [vmem:[%s1 + $0x240] sm:$0xff]
      %v466 = vld [vmem:[%s1 + $0x248] sm:$0xff]
      %v467 = vld [vmem:[%s1 + $0x250] sm:$0xff]
      %v468 = vld [vmem:[%s1 + $0x258] sm:$0xff]
      %v469 = vld [vmem:[%s1 + $0x260] sm:$0xff]
      %v470 = vld [vmem:[%s1 + $0x268] sm:$0xff]
      %v471 = vld [vmem:[%s1 + $0x270] sm:$0xff]
      %v472 = vld [vmem:[%s1 + $0x278] sm:$0xff]
      %v473 = vld [vmem:[%s1 + $0x280] sm:$0xff]
      %v474 = vld [vmem:[%s1 + $0x288] sm:$0xff]
      %v475 = vld [vmem:[%s1 + $0x290] sm:$0xff]
      %v476 = vld [vmem:[%s1 + $0x298] sm:$0xff]
      %v477 = vld [vmem:[%s1 + $0x2a0] sm:$0xff]
      %v478 = vld [vmem:[%s1 + $0x2a8] sm:$0xff]
      %v479 = vld [vmem:[%s1 + $0x2b0] sm:$0xff]
      %v480 = vld [vmem:[%s1 + $0x2b8] sm:$0xff]
      %v481 = vld [vmem:[%s1 + $0x2c0] sm:$0xff]
      %v482 = vld [vmem:[%s1 + $0x2c8] sm:$0xff]
      %v483 = vld [vmem:[%s1 + $0x2d0] sm:$0xff]
      %v484 = vld [vmem:[%s1 + $0x2d8] sm:$0xff]
      %v485 = vld [vmem:[%s1 + $0x2e0] sm:$0xff]
      %v486 = vld [vmem:[%s1 + $0x2e8] sm:$0xff]
      %v487 = vld [vmem:[%s1 + $0x2f0] sm:$0xff]
      %v488 = vld [vmem:[%s1 + $0x2f8] sm:$0xff]
      %v489 = vld [vmem:[%s1 + $0x300] sm:$0xff]
      %v490 = vld [vmem:[%s1 + $0x308] sm:$0xff]
      %v491 = vld [vmem:[%s1 + $0x310] sm:$0xff]
      %v492 = vld [vmem:[%s1 + $0x318] sm:$0xff]
      %v493 = vld [vmem:[%s1 + $0x320] sm:$0xff]
      %v494 = vld [vmem:[%s1 + $0x328] sm:$0xff]
      %v495 = vld [vmem:[%s1 + $0x330] sm:$0xff]
      %v496 = vld [vmem:[%s1 + $0x338] sm:$0xff]
      %v497 = vld [vmem:[%s1 + $0x340] sm:$0xff]
      %v498 = vld [vmem:[%s1 + $0x348] sm:$0xff]
      %v499 = vld [vmem:[%s1 + $0x350] sm:$0xff]
      %v500 = vld [vmem:[%s1 + $0x358] sm:$0xff]
      %v501 = vld [vmem:[%s1 + $0x360] sm:$0xff]
      %v502 = vld [vmem:[%s1 + $0x368] sm:$0xff]
      %v503 = vld [vmem:[%s1 + $0x370] sm:$0xff]
      %v504 = vld [vmem:[%s1 + $0x378] sm:$0xff]
      %v505 = vld [vmem:[%s1 + $0x380] sm:$0xff]
      %v506 = vld [vmem:[%s1 + $0x388] sm:$0xff]
      %v507 = vld [vmem:[%s1 + $0x390] sm:$0xff]
      %v508 = vld [vmem:[%s1 + $0x398] sm:$0xff]
      %v509 = vld [vmem:[%s1 + $0x3a0] sm:$0xff]
      %v510 = vld [vmem:[%s1 + $0x3a8] sm:$0xff]
      %v511 = vld [vmem:[%s1 + $0x3b0] sm:$0xff]
      %v512 = vld [vmem:[%s1 + $0x3b8] sm:$0xff]
      %v513 = vld [vmem:[%s1 + $0x3c0] sm:$0xff]
      %v514 = vld [vmem:[%s1 + $0x3c8] sm:$0xff]
      %v515 = vld [vmem:[%s1 + $0x3d0] sm:$0xff]
      %v516 = vld [vmem:[%s1 + $0x3d8] sm:$0xff]
      %v517 = vld [vmem:[%s1 + $0x3e0] sm:$0xff]
      %v518 = vld [vmem:[%s1 + $0x3e8] sm:$0xff]
      %v519 = vld [vmem:[%s1 + $0x3f0] sm:$0xff]
      %v520 = vld [vmem:[%s1 + $0x3f8] sm:$0xff]
      %v521 = vld [vmem:[%s1 + $0x400] sm:$0xff]
      %v522 = vld [vmem:[%s1 + $0x408] sm:$0xff]
      %v523 = vld [vmem:[%s1 + $0x410] sm:$0xff]
      %v524 = vld [vmem:[%s1 + $0x418] sm:$0xff]
      %v525 = vld [vmem:[%s1 + $0x420] sm:$0xff]
      %v526 = vld [vmem:[%s1 + $0x428] sm:$0xff]
      %v527 = vld [vmem:[%s1 + $0x430] sm:$0xff]
      %v528 = vld [vmem:[%s1 + $0x438] sm:$0xff]
      %v529 = vld [vmem:[%s1 + $0x440] sm:$0xff]
      %v530 = vld [vmem:[%s1 + $0x448] sm:$0xff]
      %v531 = vld [vmem:[%s1 + $0x450] sm:$0xff]
      %v532 = vld [vmem:[%s1 + $0x458] sm:$0xff]
      %v533 = vld [vmem:[%s1 + $0x460] sm:$0xff]
      %v534 = vld [vmem:[%s1 + $0x468] sm:$0xff]
      %v535 = vld [vmem:[%s1 + $0x470] sm:$0xff]
      %v536 = vld [vmem:[%s1 + $0x478] sm:$0xff]
      %v537 = vld [vmem:[%s1 + $0x480] sm:$0xff]
      %v538 = vld [vmem:[%s1 + $0x488] sm:$0xff]
      %v539 = vld [vmem:[%s1 + $0x490] sm:$0xff]
      %v540 = vld [vmem:[%s1 + $0x498] sm:$0xff]
      %v541 = vld [vmem:[%s1 + $0x4a0] sm:$0xff]
      %v542 = vld [vmem:[%s1 + $0x4a8] sm:$0xff]
      %v543 = vld [vmem:[%s1 + $0x4b0] sm:$0xff]
      %v544 = vld [vmem:[%s1 + $0x4b8] sm:$0xff]
      %v545 = vld [vmem:[%s1 + $0x4c0] sm:$0xff]
      %v546 = vld [vmem:[%s1 + $0x4c8] sm:$0xff]
      %v547 = vld [vmem:[%s1 + $0x4d0] sm:$0xff]
      %v548 = vld [vmem:[%s1 + $0x4d8] sm:$0xff]
      %v549 = vld [vmem:[%s1 + $0x4e0] sm:$0xff]
      %v550 = vld [vmem:[%s1 + $0x4e8] sm:$0xff]
      %v551 = vld [vmem:[%s1 + $0x4f0] sm:$0xff]
      %v552 = vld [vmem:[%s1 + $0x4f8] sm:$0xff]
      %v553 = vld [vmem:[%s1 + $0x500] sm:$0xff]
      %v554 = vld [vmem:[%s1 + $0x508] sm:$0xff]
      %v555 = vld [vmem:[%s1 + $0x510] sm:$0xff]
      %v556 = vld [vmem:[%s1 + $0x518] sm:$0xff]
      %v557 = vld [vmem:[%s1 + $0x520] sm:$0xff]
      %v558 = vld [vmem:[%s1 + $0x528] sm:$0xff]
      %v559 = vld [vmem:[%s1 + $0x530] sm:$0xff]
      %v560 = vld [vmem:[%s1 + $0x538] sm:$0xff]
      %v561 = vld [vmem:[%s1 + $0x540] sm:$0xff]
      %v562 = vld [vmem:[%s1 + $0x548] sm:$0xff]
      %v563 = vld [vmem:[%s1 + $0x550] sm:$0xff]
      %v564 = vld [vmem:[%s1 + $0x558] sm:$0xff]
      %v565 = vld [vmem:[%s1 + $0x560] sm:$0xff]
      %v566 = vld [vmem:[%s1 + $0x568] sm:$0xff]
      %v567 = vld [vmem:[%s1 + $0x570] sm:$0xff]
      %v568 = vld [vmem:[%s1 + $0x578] sm:$0xff]
      %v569 = vld [vmem:[%s1 + $0x580] sm:$0xff]
      %v570 = vld [vmem:[%s1 + $0x588] sm:$0xff]
      %v571 = vld [vmem:[%s1 + $0x590] sm:$0xff]
      %v572 = vld [vmem:[%s1 + $0x598] sm:$0xff]
      %v573 = vld [vmem:[%s1 + $0x5a0] sm:$0xff]
      %v574 = vld [vmem:[%s1 + $0x5a8] sm:$0xff]
      %v575 = vld [vmem:[%s1 + $0x5b0] sm:$0xff]
      %v576 = vld [vmem:[%s1 + $0x5b8] sm:$0xff]
      %v577 = vld [vmem:[%s1 + $0x5c0] sm:$0xff]
      %v578 = vld [vmem:[%s1 + $0x5c8] sm:$0xff]
      %v579 = vld [vmem:[%s1 + $0x5d0] sm:$0xff]
      %v580 = vld [vmem:[%s1 + $0x5d8] sm:$0xff]
      %v581 = vld [vmem:[%s1 + $0x5e0] sm:$0xff]
      %v582 = vld [vmem:[%s1 + $0x5e8] sm:$0xff]
      %v583 = vld [vmem:[%s1 + $0x5f0] sm:$0xff]
      %v584 = vld [vmem:[%s1 + $0x5f8] sm:$0xff]
      %v585 = vld [vmem:[%s1 + $0x600] sm:$0xff]
      %v586 = vld [vmem:[%s1 + $0x608] sm:$0xff]
      %v587 = vld [vmem:[%s1 + $0x610] sm:$0xff]
      %v588 = vld [vmem:[%s1 + $0x618] sm:$0xff]
      %v589 = vld [vmem:[%s1 + $0x620] sm:$0xff]
      %v590 = vld [vmem:[%s1 + $0x628] sm:$0xff]
      %v591 = vld [vmem:[%s1 + $0x630] sm:$0xff]
      %v592 = vld [vmem:[%s1 + $0x638] sm:$0xff]
      %v593 = vld [vmem:[%s1 + $0x640] sm:$0xff]
      %v594 = vld [vmem:[%s1 + $0x648] sm:$0xff]
      %v595 = vld [vmem:[%s1 + $0x650] sm:$0xff]
      %v596 = vld [vmem:[%s1 + $0x658] sm:$0xff]
      %v597 = vld [vmem:[%s1 + $0x660] sm:$0xff]
      %v598 = vld [vmem:[%s1 + $0x668] sm:$0xff]
      %v599 = vld [vmem:[%s1 + $0x670] sm:$0xff]
      %v600 = vld [vmem:[%s1 + $0x678] sm:$0xff]
      %v601 = vld [vmem:[%s1 + $0x680] sm:$0xff]
      %v602 = vld [vmem:[%s1 + $0x688] sm:$0xff]
      %v603 = vld [vmem:[%s1 + $0x690] sm:$0xff]
      %v604 = vld [vmem:[%s1 + $0x698] sm:$0xff]
      %v605 = vld [vmem:[%s1 + $0x6a0] sm:$0xff]
      %v606 = vld [vmem:[%s1 + $0x6a8] sm:$0xff]
      %v607 = vld [vmem:[%s1 + $0x6b0] sm:$0xff]
      %v608 = vld [vmem:[%s1 + $0x6b8] sm:$0xff]
      %v609 = vld [vmem:[%s1 + $0x6c0] sm:$0xff]
      %v610 = vld [vmem:[%s1 + $0x6c8] sm:$0xff]
      %v611 = vld [vmem:[%s1 + $0x6d0] sm:$0xff]
      %v612 = vld [vmem:[%s1 + $0x6d8] sm:$0xff]
      %v613 = vld [vmem:[%s1 + $0x6e0] sm:$0xff]
      %v614 = vld [vmem:[%s1 + $0x6e8] sm:$0xff]
      %v615 = vld [vmem:[%s1 + $0x6f0] sm:$0xff]
      %v616 = vld [vmem:[%s1 + $0x6f8] sm:$0xff]
      %v617 = vld [vmem:[%s2] sm:$0x3]
      %v619 = vlaneseq
      %v620 = vshrl.u32 %v619, 7
      %v621 = vsub.s32 0, %v620
      %v622 = vrot.slane %v617, %v621
      %v623 = vlaneseq
      %v624 = vshrl.u32 %v623, 7
      %v625 = vsub.s32 1, %v624
      %v626 = vrot.slane %v617, %v625
      %v678 = vunpack.c.l.b16 %v344
      %v679 = vunpack.c.h.b16 %v344
      %v680 = vunpack.c.l.b16 %v345
      %v681 = vunpack.c.h.b16 %v345
      %v682 = vunpack.c.l.b16 %v346
      %v683 = vunpack.c.h.b16 %v346
      %v684 = vunpack.c.l.b16 %v347
      %v685 = vunpack.c.h.b16 %v347
      %v686 = vunpack.c.l.b16 %v348
      %v687 = vunpack.c.h.b16 %v348
      %v688 = vunpack.c.l.b16 %v349
      %v689 = vunpack.c.h.b16 %v349
      %v690 = vunpack.c.l.b16 %v350
      %v691 = vunpack.c.h.b16 %v350
      %v692 = vunpack.c.l.b16 %v351
      %v693 = vunpack.c.h.b16 %v351
      %v694 = vunpack.c.l.b16 %v352
      %v695 = vunpack.c.h.b16 %v352
      %v696 = vunpack.c.l.b16 %v353
      %v697 = vunpack.c.h.b16 %v353
      %v698 = vunpack.c.l.b16 %v354
      %v699 = vunpack.c.h.b16 %v354
      %v700 = vunpack.c.l.b16 %v355
      %v701 = vunpack.c.h.b16 %v355
      %v702 = vunpack.c.l.b16 %v356
      %v703 = vunpack.c.h.b16 %v356
      %v704 = vunpack.c.l.b16 %v357
      %v705 = vunpack.c.h.b16 %v357
      %v706 = vunpack.c.l.b16 %v358
      %v707 = vunpack.c.h.b16 %v358
      %v708 = vunpack.c.l.b16 %v359
      %v709 = vunpack.c.h.b16 %v359
      %v710 = vunpack.c.l.b16 %v360
      %v711 = vunpack.c.h.b16 %v360
      %v712 = vunpack.c.l.b16 %v361
      %v713 = vunpack.c.h.b16 %v361
      %v714 = vunpack.c.l.b16 %v362
      %v715 = vunpack.c.h.b16 %v362
      %v716 = vunpack.c.l.b16 %v363
      %v717 = vunpack.c.h.b16 %v363
      %v718 = vunpack.c.l.b16 %v364
      %v719 = vunpack.c.h.b16 %v364
      %v720 = vunpack.c.l.b16 %v365
      %v721 = vunpack.c.h.b16 %v365
      %v722 = vunpack.c.l.b16 %v366
      %v723 = vunpack.c.h.b16 %v366
      %v724 = vunpack.c.l.b16 %v367
      %v725 = vunpack.c.h.b16 %v367
      %v726 = vunpack.c.l.b16 %v368
      %v727 = vunpack.c.h.b16 %v368
      %v728 = vunpack.c.l.b16 %v369
      %v729 = vunpack.c.h.b16 %v369
      %v730 = vunpack.c.l.b16 %v370
      %v731 = vunpack.c.h.b16 %v370
      %v732 = vunpack.c.l.b16 %v371
      %v733 = vunpack.c.h.b16 %v371
      %v734 = vunpack.c.l.b16 %v372
      %v735 = vunpack.c.h.b16 %v372
      %v736 = vunpack.c.l.b16 %v373
      %v737 = vunpack.c.h.b16 %v373
      %v738 = vunpack.c.l.b16 %v374
      %v739 = vunpack.c.h.b16 %v374
      %v740 = vunpack.c.l.b16 %v375
      %v741 = vunpack.c.h.b16 %v375
      %v742 = vunpack.c.l.b16 %v376
      %v743 = vunpack.c.h.b16 %v376
      %v744 = vunpack.c.l.b16 %v377
      %v745 = vunpack.c.h.b16 %v377
      %v746 = vunpack.c.l.b16 %v378
      %v747 = vunpack.c.h.b16 %v378
      %v748 = vunpack.c.l.b16 %v379
      %v749 = vunpack.c.h.b16 %v379
      %v750 = vunpack.c.l.b16 %v380
      %v751 = vunpack.c.h.b16 %v380
      %v752 = vunpack.c.l.b16 %v381
      %v753 = vunpack.c.h.b16 %v381
      %v754 = vunpack.c.l.b16 %v382
      %v755 = vunpack.c.h.b16 %v382
      %v756 = vunpack.c.l.b16 %v383
      %v757 = vunpack.c.h.b16 %v383
      %v758 = vunpack.c.l.b16 %v384
      %v759 = vunpack.c.h.b16 %v384
      %v760 = vunpack.c.l.b16 %v385
      %v761 = vunpack.c.h.b16 %v385
      %v762 = vunpack.c.l.b16 %v386
      %v763 = vunpack.c.h.b16 %v386
      %v764 = vunpack.c.l.b16 %v387
      %v765 = vunpack.c.h.b16 %v387
      %v766 = vunpack.c.l.b16 %v388
      %v767 = vunpack.c.h.b16 %v388
      %v768 = vunpack.c.l.b16 %v389
      %v769 = vunpack.c.h.b16 %v389
      %v770 = vunpack.c.l.b16 %v390
      %v771 = vunpack.c.h.b16 %v390
      %v772 = vunpack.c.l.b16 %v391
      %v773 = vunpack.c.h.b16 %v391
      %v774 = vunpack.c.l.b16 %v392
      %v775 = vunpack.c.h.b16 %v392
      %v776 = vpack.c.b16 %v692, %v678
      %v777 = vpack.c.b16 %v693, %v679
      %v778 = vpack.c.b16 %v694, %v680
      %v779 = vpack.c.b16 %v695, %v681
      %v780 = vpack.c.b16 %v696, %v682
      %v781 = vpack.c.b16 %v697, %v683
      %v782 = vpack.c.b16 %v698, %v684
      %v783 = vpack.c.b16 %v699, %v685
      %v784 = vpack.c.b16 %v700, %v686
      %v785 = vpack.c.b16 %v701, %v687
      %v786 = vpack.c.b16 %v702, %v688
      %v787 = vpack.c.b16 %v703, %v689
      %v788 = vpack.c.b16 %v704, %v690
      %v789 = vpack.c.b16 %v705, %v691
      %v790 = vpack.c.b16 %v720, %v706
      %v791 = vpack.c.b16 %v721, %v707
      %v792 = vpack.c.b16 %v722, %v708
      %v793 = vpack.c.b16 %v723, %v709
      %v794 = vpack.c.b16 %v724, %v710
      %v795 = vpack.c.b16 %v725, %v711
      %v796 = vpack.c.b16 %v726, %v712
      %v797 = vpack.c.b16 %v727, %v713
      %v798 = vpack.c.b16 %v728, %v714
      %v799 = vpack.c.b16 %v729, %v715
      %v800 = vpack.c.b16 %v730, %v716
      %v801 = vpack.c.b16 %v731, %v717
      %v802 = vpack.c.b16 %v732, %v718
      %v803 = vpack.c.b16 %v733, %v719
      %v804 = vpack.c.b16 %v748, %v734
      %v805 = vpack.c.b16 %v749, %v735
      %v806 = vpack.c.b16 %v750, %v736
      %v807 = vpack.c.b16 %v751, %v737
      %v808 = vpack.c.b16 %v752, %v738
      %v809 = vpack.c.b16 %v753, %v739
      %v810 = vpack.c.b16 %v754, %v740
      %v811 = vpack.c.b16 %v755, %v741
      %v812 = vpack.c.b16 %v756, %v742
      %v813 = vpack.c.b16 %v757, %v743
      %v814 = vpack.c.b16 %v758, %v744
      %v815 = vpack.c.b16 %v759, %v745
      %v816 = vpack.c.b16 %v760, %v746
      %v817 = vpack.c.b16 %v761, %v747
      %v818 = vpack.c.b16 %v762, %v762
      %v819 = vpack.c.b16 %v763, %v763
      %v820 = vpack.c.b16 %v764, %v764
      %v821 = vpack.c.b16 %v765, %v765
      %v822 = vpack.c.b16 %v766, %v766
      %v823 = vpack.c.b16 %v767, %v767
      %v824 = vpack.c.b16 %v768, %v768
      %v825 = vpack.c.b16 %v769, %v769
      %v826 = vpack.c.b16 %v770, %v770
      %v827 = vpack.c.b16 %v771, %v771
      %v828 = vpack.c.b16 %v772, %v772
      %v829 = vpack.c.b16 %v773, %v773
      %v830 = vpack.c.b16 %v774, %v774
      %v831 = vpack.c.b16 %v775, %v775
      %v1112 = vunpack.c.l.b16 %v393
      %v1113 = vunpack.c.h.b16 %v393
      %v1114 = vunpack.c.l.b16 %v394
      %v1115 = vunpack.c.h.b16 %v394
      %v1116 = vunpack.c.l.b16 %v395
      %v1117 = vunpack.c.h.b16 %v395
      %v1118 = vunpack.c.l.b16 %v396
      %v1119 = vunpack.c.h.b16 %v396
      %v1120 = vunpack.c.l.b16 %v397
      %v1121 = vunpack.c.h.b16 %v397
      %v1122 = vunpack.c.l.b16 %v398
      %v1123 = vunpack.c.h.b16 %v398
      %v1124 = vunpack.c.l.b16 %v399
      %v1125 = vunpack.c.h.b16 %v399
      %v1126 = vunpack.c.l.b16 %v400
      %v1127 = vunpack.c.h.b16 %v400
      %v1128 = vunpack.c.l.b16 %v401
      %v1129 = vunpack.c.h.b16 %v401
      %v1130 = vunpack.c.l.b16 %v402
      %v1131 = vunpack.c.h.b16 %v402
      %v1132 = vunpack.c.l.b16 %v403
      %v1133 = vunpack.c.h.b16 %v403
      %v1134 = vunpack.c.l.b16 %v404
      %v1135 = vunpack.c.h.b16 %v404
      %v1136 = vunpack.c.l.b16 %v405
      %v1137 = vunpack.c.h.b16 %v405
      %v1138 = vunpack.c.l.b16 %v406
      %v1139 = vunpack.c.h.b16 %v406
      %v1140 = vunpack.c.l.b16 %v407
      %v1141 = vunpack.c.h.b16 %v407
      %v1142 = vunpack.c.l.b16 %v408
      %v1143 = vunpack.c.h.b16 %v408
      %v1144 = vunpack.c.l.b16 %v409
      %v1145 = vunpack.c.h.b16 %v409
      %v1146 = vunpack.c.l.b16 %v410
      %v1147 = vunpack.c.h.b16 %v410
      %v1148 = vunpack.c.l.b16 %v411
      %v1149 = vunpack.c.h.b16 %v411
      %v1150 = vunpack.c.l.b16 %v412
      %v1151 = vunpack.c.h.b16 %v412
      %v1152 = vunpack.c.l.b16 %v413
      %v1153 = vunpack.c.h.b16 %v413
      %v1154 = vunpack.c.l.b16 %v414
      %v1155 = vunpack.c.h.b16 %v414
      %v1156 = vunpack.c.l.b16 %v415
      %v1157 = vunpack.c.h.b16 %v415
      %v1158 = vunpack.c.l.b16 %v416
      %v1159 = vunpack.c.h.b16 %v416
      %v1160 = vunpack.c.l.b16 %v417
      %v1161 = vunpack.c.h.b16 %v417
      %v1162 = vunpack.c.l.b16 %v418
      %v1163 = vunpack.c.h.b16 %v418
      %v1164 = vunpack.c.l.b16 %v419
      %v1165 = vunpack.c.h.b16 %v419
      %v1166 = vunpack.c.l.b16 %v420
      %v1167 = vunpack.c.h.b16 %v420
      %v1168 = vunpack.c.l.b16 %v421
      %v1169 = vunpack.c.h.b16 %v421
      %v1170 = vunpack.c.l.b16 %v422
      %v1171 = vunpack.c.h.b16 %v422
      %v1172 = vunpack.c.l.b16 %v423
      %v1173 = vunpack.c.h.b16 %v423
      %v1174 = vunpack.c.l.b16 %v424
      %v1175 = vunpack.c.h.b16 %v424
      %v1176 = vunpack.c.l.b16 %v425
      %v1177 = vunpack.c.h.b16 %v425
      %v1178 = vunpack.c.l.b16 %v426
      %v1179 = vunpack.c.h.b16 %v426
      %v1180 = vunpack.c.l.b16 %v427
      %v1181 = vunpack.c.h.b16 %v427
      %v1182 = vunpack.c.l.b16 %v428
      %v1183 = vunpack.c.h.b16 %v428
      %v1184 = vunpack.c.l.b16 %v429
      %v1185 = vunpack.c.h.b16 %v429
      %v1186 = vunpack.c.l.b16 %v430
      %v1187 = vunpack.c.h.b16 %v430
      %v1188 = vunpack.c.l.b16 %v431
      %v1189 = vunpack.c.h.b16 %v431
      %v1190 = vunpack.c.l.b16 %v432
      %v1191 = vunpack.c.h.b16 %v432
      %v1192 = vunpack.c.l.b16 %v433
      %v1193 = vunpack.c.h.b16 %v433
      %v1194 = vunpack.c.l.b16 %v434
      %v1195 = vunpack.c.h.b16 %v434
      %v1196 = vunpack.c.l.b16 %v435
      %v1197 = vunpack.c.h.b16 %v435
      %v1198 = vunpack.c.l.b16 %v436
      %v1199 = vunpack.c.h.b16 %v436
      %v1200 = vunpack.c.l.b16 %v437
      %v1201 = vunpack.c.h.b16 %v437
      %v1202 = vunpack.c.l.b16 %v438
      %v1203 = vunpack.c.h.b16 %v438
      %v1204 = vunpack.c.l.b16 %v439
      %v1205 = vunpack.c.h.b16 %v439
      %v1206 = vunpack.c.l.b16 %v440
      %v1207 = vunpack.c.h.b16 %v440
      %v1208 = vunpack.c.l.b16 %v441
      %v1209 = vunpack.c.h.b16 %v441
      %v1210 = vunpack.c.l.b16 %v442
      %v1211 = vunpack.c.h.b16 %v442
      %v1212 = vunpack.c.l.b16 %v443
      %v1213 = vunpack.c.h.b16 %v443
      %v1214 = vunpack.c.l.b16 %v444
      %v1215 = vunpack.c.h.b16 %v444
      %v1216 = vunpack.c.l.b16 %v445
      %v1217 = vunpack.c.h.b16 %v445
      %v1218 = vunpack.c.l.b16 %v446
      %v1219 = vunpack.c.h.b16 %v446
      %v1220 = vunpack.c.l.b16 %v447
      %v1221 = vunpack.c.h.b16 %v447
      %v1222 = vunpack.c.l.b16 %v448
      %v1223 = vunpack.c.h.b16 %v448
      %v1224 = vunpack.c.l.b16 %v449
      %v1225 = vunpack.c.h.b16 %v449
      %v1226 = vunpack.c.l.b16 %v450
      %v1227 = vunpack.c.h.b16 %v450
      %v1228 = vunpack.c.l.b16 %v451
      %v1229 = vunpack.c.h.b16 %v451
      %v1230 = vunpack.c.l.b16 %v452
      %v1231 = vunpack.c.h.b16 %v452
      %v1232 = vunpack.c.l.b16 %v453
      %v1233 = vunpack.c.h.b16 %v453
      %v1234 = vunpack.c.l.b16 %v454
      %v1235 = vunpack.c.h.b16 %v454
      %v1236 = vunpack.c.l.b16 %v455
      %v1237 = vunpack.c.h.b16 %v455
      %v1238 = vunpack.c.l.b16 %v456
      %v1239 = vunpack.c.h.b16 %v456
      %v1240 = vunpack.c.l.b16 %v457
      %v1241 = vunpack.c.h.b16 %v457
      %v1242 = vunpack.c.l.b16 %v458
      %v1243 = vunpack.c.h.b16 %v458
      %v1244 = vunpack.c.l.b16 %v459
      %v1245 = vunpack.c.h.b16 %v459
      %v1246 = vunpack.c.l.b16 %v460
      %v1247 = vunpack.c.h.b16 %v460
      %v1248 = vunpack.c.l.b16 %v461
      %v1249 = vunpack.c.h.b16 %v461
      %v1250 = vunpack.c.l.b16 %v462
      %v1251 = vunpack.c.h.b16 %v462
      %v1252 = vunpack.c.l.b16 %v463
      %v1253 = vunpack.c.h.b16 %v463
      %v1254 = vunpack.c.l.b16 %v464
      %v1255 = vunpack.c.h.b16 %v464
      %v1256 = vunpack.c.l.b16 %v465
      %v1257 = vunpack.c.h.b16 %v465
      %v1258 = vunpack.c.l.b16 %v466
      %v1259 = vunpack.c.h.b16 %v466
      %v1260 = vunpack.c.l.b16 %v467
      %v1261 = vunpack.c.h.b16 %v467
      %v1262 = vunpack.c.l.b16 %v468
      %v1263 = vunpack.c.h.b16 %v468
      %v1264 = vunpack.c.l.b16 %v469
      %v1265 = vunpack.c.h.b16 %v469
      %v1266 = vunpack.c.l.b16 %v470
      %v1267 = vunpack.c.h.b16 %v470
      %v1268 = vunpack.c.l.b16 %v471
      %v1269 = vunpack.c.h.b16 %v471
      %v1270 = vunpack.c.l.b16 %v472
      %v1271 = vunpack.c.h.b16 %v472
      %v1272 = vunpack.c.l.b16 %v473
      %v1273 = vunpack.c.h.b16 %v473
      %v1274 = vunpack.c.l.b16 %v474
      %v1275 = vunpack.c.h.b16 %v474
      %v1276 = vunpack.c.l.b16 %v475
      %v1277 = vunpack.c.h.b16 %v475
      %v1278 = vunpack.c.l.b16 %v476
      %v1279 = vunpack.c.h.b16 %v476
      %v1280 = vunpack.c.l.b16 %v477
      %v1281 = vunpack.c.h.b16 %v477
      %v1282 = vunpack.c.l.b16 %v478
      %v1283 = vunpack.c.h.b16 %v478
      %v1284 = vunpack.c.l.b16 %v479
      %v1285 = vunpack.c.h.b16 %v479
      %v1286 = vunpack.c.l.b16 %v480
      %v1287 = vunpack.c.h.b16 %v480
      %v1288 = vunpack.c.l.b16 %v481
      %v1289 = vunpack.c.h.b16 %v481
      %v1290 = vunpack.c.l.b16 %v482
      %v1291 = vunpack.c.h.b16 %v482
      %v1292 = vunpack.c.l.b16 %v483
      %v1293 = vunpack.c.h.b16 %v483
      %v1294 = vunpack.c.l.b16 %v484
      %v1295 = vunpack.c.h.b16 %v484
      %v1296 = vunpack.c.l.b16 %v485
      %v1297 = vunpack.c.h.b16 %v485
      %v1298 = vunpack.c.l.b16 %v486
      %v1299 = vunpack.c.h.b16 %v486
      %v1300 = vunpack.c.l.b16 %v487
      %v1301 = vunpack.c.h.b16 %v487
      %v1302 = vunpack.c.l.b16 %v488
      %v1303 = vunpack.c.h.b16 %v488
      %v1304 = vunpack.c.l.b16 %v489
      %v1305 = vunpack.c.h.b16 %v489
      %v1306 = vunpack.c.l.b16 %v490
      %v1307 = vunpack.c.h.b16 %v490
      %v1308 = vunpack.c.l.b16 %v491
      %v1309 = vunpack.c.h.b16 %v491
      %v1310 = vunpack.c.l.b16 %v492
      %v1311 = vunpack.c.h.b16 %v492
      %v1312 = vunpack.c.l.b16 %v493
      %v1313 = vunpack.c.h.b16 %v493
      %v1314 = vunpack.c.l.b16 %v494
      %v1315 = vunpack.c.h.b16 %v494
      %v1316 = vunpack.c.l.b16 %v495
      %v1317 = vunpack.c.h.b16 %v495
      %v1318 = vunpack.c.l.b16 %v496
      %v1319 = vunpack.c.h.b16 %v496
      %v1320 = vunpack.c.l.b16 %v497
      %v1321 = vunpack.c.h.b16 %v497
      %v1322 = vunpack.c.l.b16 %v498
      %v1323 = vunpack.c.h.b16 %v498
      %v1324 = vunpack.c.l.b16 %v499
      %v1325 = vunpack.c.h.b16 %v499
      %v1326 = vunpack.c.l.b16 %v500
      %v1327 = vunpack.c.h.b16 %v500
      %v1328 = vunpack.c.l.b16 %v501
      %v1329 = vunpack.c.h.b16 %v501
      %v1330 = vunpack.c.l.b16 %v502
      %v1331 = vunpack.c.h.b16 %v502
      %v1332 = vunpack.c.l.b16 %v503
      %v1333 = vunpack.c.h.b16 %v503
      %v1334 = vunpack.c.l.b16 %v504
      %v1335 = vunpack.c.h.b16 %v504
      %v1336 = vunpack.c.l.b16 %v505
      %v1337 = vunpack.c.h.b16 %v505
      %v1338 = vunpack.c.l.b16 %v506
      %v1339 = vunpack.c.h.b16 %v506
      %v1340 = vunpack.c.l.b16 %v507
      %v1341 = vunpack.c.h.b16 %v507
      %v1342 = vunpack.c.l.b16 %v508
      %v1343 = vunpack.c.h.b16 %v508
      %v1344 = vunpack.c.l.b16 %v509
      %v1345 = vunpack.c.h.b16 %v509
      %v1346 = vunpack.c.l.b16 %v510
      %v1347 = vunpack.c.h.b16 %v510
      %v1348 = vunpack.c.l.b16 %v511
      %v1349 = vunpack.c.h.b16 %v511
      %v1350 = vunpack.c.l.b16 %v512
      %v1351 = vunpack.c.h.b16 %v512
      %v1352 = vunpack.c.l.b16 %v513
      %v1353 = vunpack.c.h.b16 %v513
      %v1354 = vunpack.c.l.b16 %v514
      %v1355 = vunpack.c.h.b16 %v514
      %v1356 = vunpack.c.l.b16 %v515
      %v1357 = vunpack.c.h.b16 %v515
      %v1358 = vunpack.c.l.b16 %v516
      %v1359 = vunpack.c.h.b16 %v516
      %v1360 = vunpack.c.l.b16 %v517
      %v1361 = vunpack.c.h.b16 %v517
      %v1362 = vunpack.c.l.b16 %v518
      %v1363 = vunpack.c.h.b16 %v518
      %v1364 = vunpack.c.l.b16 %v519
      %v1365 = vunpack.c.h.b16 %v519
      %v1366 = vunpack.c.l.b16 %v520
      %v1367 = vunpack.c.h.b16 %v520
      %v1368 = vunpack.c.l.b16 %v521
      %v1369 = vunpack.c.h.b16 %v521
      %v1370 = vunpack.c.l.b16 %v522
      %v1371 = vunpack.c.h.b16 %v522
      %v1372 = vunpack.c.l.b16 %v523
      %v1373 = vunpack.c.h.b16 %v523
      %v1374 = vunpack.c.l.b16 %v524
      %v1375 = vunpack.c.h.b16 %v524
      %v1376 = vunpack.c.l.b16 %v525
      %v1377 = vunpack.c.h.b16 %v525
      %v1378 = vunpack.c.l.b16 %v526
      %v1379 = vunpack.c.h.b16 %v526
      %v1380 = vunpack.c.l.b16 %v527
      %v1381 = vunpack.c.h.b16 %v527
      %v1382 = vunpack.c.l.b16 %v528
      %v1383 = vunpack.c.h.b16 %v528
      %v1384 = vunpack.c.l.b16 %v529
      %v1385 = vunpack.c.h.b16 %v529
      %v1386 = vunpack.c.l.b16 %v530
      %v1387 = vunpack.c.h.b16 %v530
      %v1388 = vunpack.c.l.b16 %v531
      %v1389 = vunpack.c.h.b16 %v531
      %v1390 = vunpack.c.l.b16 %v532
      %v1391 = vunpack.c.h.b16 %v532
      %v1392 = vunpack.c.l.b16 %v533
      %v1393 = vunpack.c.h.b16 %v533
      %v1394 = vunpack.c.l.b16 %v534
      %v1395 = vunpack.c.h.b16 %v534
      %v1396 = vunpack.c.l.b16 %v535
      %v1397 = vunpack.c.h.b16 %v535
      %v1398 = vunpack.c.l.b16 %v536
      %v1399 = vunpack.c.h.b16 %v536
      %v1400 = vunpack.c.l.b16 %v537
      %v1401 = vunpack.c.h.b16 %v537
      %v1402 = vunpack.c.l.b16 %v538
      %v1403 = vunpack.c.h.b16 %v538
      %v1404 = vunpack.c.l.b16 %v539
      %v1405 = vunpack.c.h.b16 %v539
      %v1406 = vunpack.c.l.b16 %v540
      %v1407 = vunpack.c.h.b16 %v540
      %v1408 = vunpack.c.l.b16 %v541
      %v1409 = vunpack.c.h.b16 %v541
      %v1410 = vunpack.c.l.b16 %v542
      %v1411 = vunpack.c.h.b16 %v542
      %v1412 = vunpack.c.l.b16 %v543
      %v1413 = vunpack.c.h.b16 %v543
      %v1414 = vunpack.c.l.b16 %v544
      %v1415 = vunpack.c.h.b16 %v544
      %v1416 = vunpack.c.l.b16 %v545
      %v1417 = vunpack.c.h.b16 %v545
      %v1418 = vunpack.c.l.b16 %v546
      %v1419 = vunpack.c.h.b16 %v546
      %v1420 = vunpack.c.l.b16 %v547
      %v1421 = vunpack.c.h.b16 %v547
      %v1422 = vunpack.c.l.b16 %v548
      %v1423 = vunpack.c.h.b16 %v548
      %v1424 = vunpack.c.l.b16 %v549
      %v1425 = vunpack.c.h.b16 %v549
      %v1426 = vunpack.c.l.b16 %v550
      %v1427 = vunpack.c.h.b16 %v550
      %v1428 = vunpack.c.l.b16 %v551
      %v1429 = vunpack.c.h.b16 %v551
      %v1430 = vunpack.c.l.b16 %v552
      %v1431 = vunpack.c.h.b16 %v552
      %v1432 = vunpack.c.l.b16 %v553
      %v1433 = vunpack.c.h.b16 %v553
      %v1434 = vunpack.c.l.b16 %v554
      %v1435 = vunpack.c.h.b16 %v554
      %v1436 = vunpack.c.l.b16 %v555
      %v1437 = vunpack.c.h.b16 %v555
      %v1438 = vunpack.c.l.b16 %v556
      %v1439 = vunpack.c.h.b16 %v556
      %v1440 = vunpack.c.l.b16 %v557
      %v1441 = vunpack.c.h.b16 %v557
      %v1442 = vunpack.c.l.b16 %v558
      %v1443 = vunpack.c.h.b16 %v558
      %v1444 = vunpack.c.l.b16 %v559
      %v1445 = vunpack.c.h.b16 %v559
      %v1446 = vunpack.c.l.b16 %v560
      %v1447 = vunpack.c.h.b16 %v560
      %v1448 = vunpack.c.l.b16 %v561
      %v1449 = vunpack.c.h.b16 %v561
      %v1450 = vunpack.c.l.b16 %v562
      %v1451 = vunpack.c.h.b16 %v562
      %v1452 = vunpack.c.l.b16 %v563
      %v1453 = vunpack.c.h.b16 %v563
      %v1454 = vunpack.c.l.b16 %v564
      %v1455 = vunpack.c.h.b16 %v564
      %v1456 = vunpack.c.l.b16 %v565
      %v1457 = vunpack.c.h.b16 %v565
      %v1458 = vunpack.c.l.b16 %v566
      %v1459 = vunpack.c.h.b16 %v566
      %v1460 = vunpack.c.l.b16 %v567
      %v1461 = vunpack.c.h.b16 %v567
      %v1462 = vunpack.c.l.b16 %v568
      %v1463 = vunpack.c.h.b16 %v568
      %v1464 = vunpack.c.l.b16 %v569
      %v1465 = vunpack.c.h.b16 %v569
      %v1466 = vunpack.c.l.b16 %v570
      %v1467 = vunpack.c.h.b16 %v570
      %v1468 = vunpack.c.l.b16 %v571
      %v1469 = vunpack.c.h.b16 %v571
      %v1470 = vunpack.c.l.b16 %v572
      %v1471 = vunpack.c.h.b16 %v572
      %v1472 = vunpack.c.l.b16 %v573
      %v1473 = vunpack.c.h.b16 %v573
      %v1474 = vunpack.c.l.b16 %v574
      %v1475 = vunpack.c.h.b16 %v574
      %v1476 = vunpack.c.l.b16 %v575
      %v1477 = vunpack.c.h.b16 %v575
      %v1478 = vunpack.c.l.b16 %v576
      %v1479 = vunpack.c.h.b16 %v576
      %v1480 = vunpack.c.l.b16 %v577
      %v1481 = vunpack.c.h.b16 %v577
      %v1482 = vunpack.c.l.b16 %v578
      %v1483 = vunpack.c.h.b16 %v578
      %v1484 = vunpack.c.l.b16 %v579
      %v1485 = vunpack.c.h.b16 %v579
      %v1486 = vunpack.c.l.b16 %v580
      %v1487 = vunpack.c.h.b16 %v580
      %v1488 = vunpack.c.l.b16 %v581
      %v1489 = vunpack.c.h.b16 %v581
      %v1490 = vunpack.c.l.b16 %v582
      %v1491 = vunpack.c.h.b16 %v582
      %v1492 = vunpack.c.l.b16 %v583
      %v1493 = vunpack.c.h.b16 %v583
      %v1494 = vunpack.c.l.b16 %v584
      %v1495 = vunpack.c.h.b16 %v584
      %v1496 = vunpack.c.l.b16 %v585
      %v1497 = vunpack.c.h.b16 %v585
      %v1498 = vunpack.c.l.b16 %v586
      %v1499 = vunpack.c.h.b16 %v586
      %v1500 = vunpack.c.l.b16 %v587
      %v1501 = vunpack.c.h.b16 %v587
      %v1502 = vunpack.c.l.b16 %v588
      %v1503 = vunpack.c.h.b16 %v588
      %v1504 = vunpack.c.l.b16 %v589
      %v1505 = vunpack.c.h.b16 %v589
      %v1506 = vunpack.c.l.b16 %v590
      %v1507 = vunpack.c.h.b16 %v590
      %v1508 = vunpack.c.l.b16 %v591
      %v1509 = vunpack.c.h.b16 %v591
      %v1510 = vunpack.c.l.b16 %v592
      %v1511 = vunpack.c.h.b16 %v592
      %v1512 = vunpack.c.l.b16 %v593
      %v1513 = vunpack.c.h.b16 %v593
      %v1514 = vunpack.c.l.b16 %v594
      %v1515 = vunpack.c.h.b16 %v594
      %v1516 = vunpack.c.l.b16 %v595
      %v1517 = vunpack.c.h.b16 %v595
      %v1518 = vunpack.c.l.b16 %v596
      %v1519 = vunpack.c.h.b16 %v596
      %v1520 = vunpack.c.l.b16 %v597
      %v1521 = vunpack.c.h.b16 %v597
      %v1522 = vunpack.c.l.b16 %v598
      %v1523 = vunpack.c.h.b16 %v598
      %v1524 = vunpack.c.l.b16 %v599
      %v1525 = vunpack.c.h.b16 %v599
      %v1526 = vunpack.c.l.b16 %v600
      %v1527 = vunpack.c.h.b16 %v600
      %v1528 = vunpack.c.l.b16 %v601
      %v1529 = vunpack.c.h.b16 %v601
      %v1530 = vunpack.c.l.b16 %v602
      %v1531 = vunpack.c.h.b16 %v602
      %v1532 = vunpack.c.l.b16 %v603
      %v1533 = vunpack.c.h.b16 %v603
      %v1534 = vunpack.c.l.b16 %v604
      %v1535 = vunpack.c.h.b16 %v604
      %v1536 = vunpack.c.l.b16 %v605
      %v1537 = vunpack.c.h.b16 %v605
      %v1538 = vunpack.c.l.b16 %v606
      %v1539 = vunpack.c.h.b16 %v606
      %v1540 = vunpack.c.l.b16 %v607
      %v1541 = vunpack.c.h.b16 %v607
      %v1542 = vunpack.c.l.b16 %v608
      %v1543 = vunpack.c.h.b16 %v608
      %v1544 = vunpack.c.l.b16 %v609
      %v1545 = vunpack.c.h.b16 %v609
      %v1546 = vunpack.c.l.b16 %v610
      %v1547 = vunpack.c.h.b16 %v610
      %v1548 = vunpack.c.l.b16 %v611
      %v1549 = vunpack.c.h.b16 %v611
      %v1550 = vunpack.c.l.b16 %v612
      %v1551 = vunpack.c.h.b16 %v612
      %v1552 = vunpack.c.l.b16 %v613
      %v1553 = vunpack.c.h.b16 %v613
      %v1554 = vunpack.c.l.b16 %v614
      %v1555 = vunpack.c.h.b16 %v614
      %v1556 = vunpack.c.l.b16 %v615
      %v1557 = vunpack.c.h.b16 %v615
      %v1558 = vunpack.c.l.b16 %v616
      %v1559 = vunpack.c.h.b16 %v616
      %v1560 = vpack.c.b16 %v1114, %v1112
      %v1561 = vpack.c.b16 %v1115, %v1113
      %v1562 = vpack.c.b16 %v1118, %v1116
      %v1563 = vpack.c.b16 %v1119, %v1117
      %v1564 = vpack.c.b16 %v1122, %v1120
      %v1565 = vpack.c.b16 %v1123, %v1121
      %v1566 = vpack.c.b16 %v1126, %v1124
      %v1567 = vpack.c.b16 %v1127, %v1125
      %v1568 = vpack.c.b16 %v1130, %v1128
      %v1569 = vpack.c.b16 %v1131, %v1129
      %v1570 = vpack.c.b16 %v1134, %v1132
      %v1571 = vpack.c.b16 %v1135, %v1133
      %v1572 = vpack.c.b16 %v1138, %v1136
      %v1573 = vpack.c.b16 %v1139, %v1137
      %v1574 = vpack.c.b16 %v1142, %v1140
      %v1575 = vpack.c.b16 %v1143, %v1141
      %v1576 = vpack.c.b16 %v1146, %v1144
      %v1577 = vpack.c.b16 %v1147, %v1145
      %v1578 = vpack.c.b16 %v1150, %v1148
      %v1579 = vpack.c.b16 %v1151, %v1149
      %v1580 = vpack.c.b16 %v1154, %v1152
      %v1581 = vpack.c.b16 %v1155, %v1153
      %v1582 = vpack.c.b16 %v1158, %v1156
      %v1583 = vpack.c.b16 %v1159, %v1157
      %v1584 = vpack.c.b16 %v1162, %v1160
      %v1585 = vpack.c.b16 %v1163, %v1161
      %v1586 = vpack.c.b16 %v1166, %v1164
      %v1587 = vpack.c.b16 %v1167, %v1165
      %v1588 = vpack.c.b16 %v1170, %v1168
      %v1589 = vpack.c.b16 %v1171, %v1169
      %v1590 = vpack.c.b16 %v1174, %v1172
      %v1591 = vpack.c.b16 %v1175, %v1173
      %v1592 = vpack.c.b16 %v1178, %v1176
      %v1593 = vpack.c.b16 %v1179, %v1177
      %v1594 = vpack.c.b16 %v1182, %v1180
      %v1595 = vpack.c.b16 %v1183, %v1181
      %v1596 = vpack.c.b16 %v1186, %v1184
      %v1597 = vpack.c.b16 %v1187, %v1185
      %v1598 = vpack.c.b16 %v1190, %v1188
      %v1599 = vpack.c.b16 %v1191, %v1189
      %v1600 = vpack.c.b16 %v1194, %v1192
      %v1601 = vpack.c.b16 %v1195, %v1193
      %v1602 = vpack.c.b16 %v1198, %v1196
      %v1603 = vpack.c.b16 %v1199, %v1197
      %v1604 = vpack.c.b16 %v1202, %v1200
      %v1605 = vpack.c.b16 %v1203, %v1201
      %v1606 = vpack.c.b16 %v1206, %v1204
      %v1607 = vpack.c.b16 %v1207, %v1205
      %v1608 = vpack.c.b16 %v1210, %v1208
      %v1609 = vpack.c.b16 %v1211, %v1209
      %v1610 = vpack.c.b16 %v1214, %v1212
      %v1611 = vpack.c.b16 %v1215, %v1213
      %v1612 = vpack.c.b16 %v1218, %v1216
      %v1613 = vpack.c.b16 %v1219, %v1217
      %v1614 = vpack.c.b16 %v1222, %v1220
      %v1615 = vpack.c.b16 %v1223, %v1221
      %v1616 = vpack.c.b16 %v1226, %v1224
      %v1617 = vpack.c.b16 %v1227, %v1225
      %v1618 = vpack.c.b16 %v1230, %v1228
      %v1619 = vpack.c.b16 %v1231, %v1229
      %v1620 = vpack.c.b16 %v1234, %v1232
      %v1621 = vpack.c.b16 %v1235, %v1233
      %v1622 = vpack.c.b16 %v1238, %v1236
      %v1623 = vpack.c.b16 %v1239, %v1237
      %v1624 = vpack.c.b16 %v1242, %v1240
      %v1625 = vpack.c.b16 %v1243, %v1241
      %v1626 = vpack.c.b16 %v1246, %v1244
      %v1627 = vpack.c.b16 %v1247, %v1245
      %v1628 = vpack.c.b16 %v1250, %v1248
      %v1629 = vpack.c.b16 %v1251, %v1249
      %v1630 = vpack.c.b16 %v1254, %v1252
      %v1631 = vpack.c.b16 %v1255, %v1253
      %v1632 = vpack.c.b16 %v1258, %v1256
      %v1633 = vpack.c.b16 %v1259, %v1257
      %v1634 = vpack.c.b16 %v1262, %v1260
      %v1635 = vpack.c.b16 %v1263, %v1261
      %v1636 = vpack.c.b16 %v1266, %v1264
      %v1637 = vpack.c.b16 %v1267, %v1265
      %v1638 = vpack.c.b16 %v1270, %v1268
      %v1639 = vpack.c.b16 %v1271, %v1269
      %v1640 = vpack.c.b16 %v1274, %v1272
      %v1641 = vpack.c.b16 %v1275, %v1273
      %v1642 = vpack.c.b16 %v1278, %v1276
      %v1643 = vpack.c.b16 %v1279, %v1277
      %v1644 = vpack.c.b16 %v1282, %v1280
      %v1645 = vpack.c.b16 %v1283, %v1281
      %v1646 = vpack.c.b16 %v1286, %v1284
      %v1647 = vpack.c.b16 %v1287, %v1285
      %v1648 = vpack.c.b16 %v1290, %v1288
      %v1649 = vpack.c.b16 %v1291, %v1289
      %v1650 = vpack.c.b16 %v1294, %v1292
      %v1651 = vpack.c.b16 %v1295, %v1293
      %v1652 = vpack.c.b16 %v1298, %v1296
      %v1653 = vpack.c.b16 %v1299, %v1297
      %v1654 = vpack.c.b16 %v1302, %v1300
      %v1655 = vpack.c.b16 %v1303, %v1301
      %v1656 = vpack.c.b16 %v1306, %v1304
      %v1657 = vpack.c.b16 %v1307, %v1305
      %v1658 = vpack.c.b16 %v1310, %v1308
      %v1659 = vpack.c.b16 %v1311, %v1309
      %v1660 = vpack.c.b16 %v1314, %v1312
      %v1661 = vpack.c.b16 %v1315, %v1313
      %v1662 = vpack.c.b16 %v1318, %v1316
      %v1663 = vpack.c.b16 %v1319, %v1317
      %v1664 = vpack.c.b16 %v1322, %v1320
      %v1665 = vpack.c.b16 %v1323, %v1321
      %v1666 = vpack.c.b16 %v1326, %v1324
      %v1667 = vpack.c.b16 %v1327, %v1325
      %v1668 = vpack.c.b16 %v1330, %v1328
      %v1669 = vpack.c.b16 %v1331, %v1329
      %v1670 = vpack.c.b16 %v1334, %v1332
      %v1671 = vpack.c.b16 %v1335, %v1333
      %v1672 = vpack.c.b16 %v1338, %v1336
      %v1673 = vpack.c.b16 %v1339, %v1337
      %v1674 = vpack.c.b16 %v1342, %v1340
      %v1675 = vpack.c.b16 %v1343, %v1341
      %v1676 = vpack.c.b16 %v1346, %v1344
      %v1677 = vpack.c.b16 %v1347, %v1345
      %v1678 = vpack.c.b16 %v1350, %v1348
      %v1679 = vpack.c.b16 %v1351, %v1349
      %v1680 = vpack.c.b16 %v1354, %v1352
      %v1681 = vpack.c.b16 %v1355, %v1353
      %v1682 = vpack.c.b16 %v1358, %v1356
      %v1683 = vpack.c.b16 %v1359, %v1357
      %v1684 = vpack.c.b16 %v1362, %v1360
      %v1685 = vpack.c.b16 %v1363, %v1361
      %v1686 = vpack.c.b16 %v1366, %v1364
      %v1687 = vpack.c.b16 %v1367, %v1365
      %v1688 = vpack.c.b16 %v1370, %v1368
      %v1689 = vpack.c.b16 %v1371, %v1369
      %v1690 = vpack.c.b16 %v1374, %v1372
      %v1691 = vpack.c.b16 %v1375, %v1373
      %v1692 = vpack.c.b16 %v1378, %v1376
      %v1693 = vpack.c.b16 %v1379, %v1377
      %v1694 = vpack.c.b16 %v1382, %v1380
      %v1695 = vpack.c.b16 %v1383, %v1381
      %v1696 = vpack.c.b16 %v1386, %v1384
      %v1697 = vpack.c.b16 %v1387, %v1385
      %v1698 = vpack.c.b16 %v1390, %v1388
      %v1699 = vpack.c.b16 %v1391, %v1389
      %v1700 = vpack.c.b16 %v1394, %v1392
      %v1701 = vpack.c.b16 %v1395, %v1393
      %v1702 = vpack.c.b16 %v1398, %v1396
      %v1703 = vpack.c.b16 %v1399, %v1397
      %v1704 = vpack.c.b16 %v1402, %v1400
      %v1705 = vpack.c.b16 %v1403, %v1401
      %v1706 = vpack.c.b16 %v1406, %v1404
      %v1707 = vpack.c.b16 %v1407, %v1405
      %v1708 = vpack.c.b16 %v1410, %v1408
      %v1709 = vpack.c.b16 %v1411, %v1409
      %v1710 = vpack.c.b16 %v1414, %v1412
      %v1711 = vpack.c.b16 %v1415, %v1413
      %v1712 = vpack.c.b16 %v1418, %v1416
      %v1713 = vpack.c.b16 %v1419, %v1417
      %v1714 = vpack.c.b16 %v1422, %v1420
      %v1715 = vpack.c.b16 %v1423, %v1421
      %v1716 = vpack.c.b16 %v1426, %v1424
      %v1717 = vpack.c.b16 %v1427, %v1425
      %v1718 = vpack.c.b16 %v1430, %v1428
      %v1719 = vpack.c.b16 %v1431, %v1429
      %v1720 = vpack.c.b16 %v1434, %v1432
      %v1721 = vpack.c.b16 %v1435, %v1433
      %v1722 = vpack.c.b16 %v1438, %v1436
      %v1723 = vpack.c.b16 %v1439, %v1437
      %v1724 = vpack.c.b16 %v1442, %v1440
      %v1725 = vpack.c.b16 %v1443, %v1441
      %v1726 = vpack.c.b16 %v1446, %v1444
      %v1727 = vpack.c.b16 %v1447, %v1445
      %v1728 = vpack.c.b16 %v1450, %v1448
      %v1729 = vpack.c.b16 %v1451, %v1449
      %v1730 = vpack.c.b16 %v1454, %v1452
      %v1731 = vpack.c.b16 %v1455, %v1453
      %v1732 = vpack.c.b16 %v1458, %v1456
      %v1733 = vpack.c.b16 %v1459, %v1457
      %v1734 = vpack.c.b16 %v1462, %v1460
      %v1735 = vpack.c.b16 %v1463, %v1461
      %v1736 = vpack.c.b16 %v1466, %v1464
      %v1737 = vpack.c.b16 %v1467, %v1465
      %v1738 = vpack.c.b16 %v1470, %v1468
      %v1739 = vpack.c.b16 %v1471, %v1469
      %v1740 = vpack.c.b16 %v1474, %v1472
      %v1741 = vpack.c.b16 %v1475, %v1473
      %v1742 = vpack.c.b16 %v1478, %v1476
      %v1743 = vpack.c.b16 %v1479, %v1477
      %v1744 = vpack.c.b16 %v1482, %v1480
      %v1745 = vpack.c.b16 %v1483, %v1481
      %v1746 = vpack.c.b16 %v1486, %v1484
      %v1747 = vpack.c.b16 %v1487, %v1485
      %v1748 = vpack.c.b16 %v1490, %v1488
      %v1749 = vpack.c.b16 %v1491, %v1489
      %v1750 = vpack.c.b16 %v1494, %v1492
      %v1751 = vpack.c.b16 %v1495, %v1493
      %v1752 = vpack.c.b16 %v1498, %v1496
      %v1753 = vpack.c.b16 %v1499, %v1497
      %v1754 = vpack.c.b16 %v1502, %v1500
      %v1755 = vpack.c.b16 %v1503, %v1501
      %v1756 = vpack.c.b16 %v1506, %v1504
      %v1757 = vpack.c.b16 %v1507, %v1505
      %v1758 = vpack.c.b16 %v1510, %v1508
      %v1759 = vpack.c.b16 %v1511, %v1509
      %v1760 = vpack.c.b16 %v1514, %v1512
      %v1761 = vpack.c.b16 %v1515, %v1513
      %v1762 = vpack.c.b16 %v1518, %v1516
      %v1763 = vpack.c.b16 %v1519, %v1517
      %v1764 = vpack.c.b16 %v1522, %v1520
      %v1765 = vpack.c.b16 %v1523, %v1521
      %v1766 = vpack.c.b16 %v1526, %v1524
      %v1767 = vpack.c.b16 %v1527, %v1525
      %v1768 = vpack.c.b16 %v1530, %v1528
      %v1769 = vpack.c.b16 %v1531, %v1529
      %v1770 = vpack.c.b16 %v1534, %v1532
      %v1771 = vpack.c.b16 %v1535, %v1533
      %v1772 = vpack.c.b16 %v1538, %v1536
      %v1773 = vpack.c.b16 %v1539, %v1537
      %v1774 = vpack.c.b16 %v1542, %v1540
      %v1775 = vpack.c.b16 %v1543, %v1541
      %v1776 = vpack.c.b16 %v1546, %v1544
      %v1777 = vpack.c.b16 %v1547, %v1545
      %v1778 = vpack.c.b16 %v1550, %v1548
      %v1779 = vpack.c.b16 %v1551, %v1549
      %v1780 = vpack.c.b16 %v1554, %v1552
      %v1781 = vpack.c.b16 %v1555, %v1553
      %v1782 = vpack.c.b16 %v1558, %v1556
      %v1783 = vpack.c.b16 %v1559, %v1557
      %2008 = vmatprep.subr.bf16.mxu0 %v1561
      %2009 = vmatpush1.bf16.msra.mxu0 %v1560
      %2010 = vmatprep.subr.bf16.mxu0 %v1563
      %2011 = vmatpush1.bf16.msra.mxu0 %v1562
      %2012 = vmatprep.subr.bf16.mxu0 %v1565
      %2013 = vmatpush1.bf16.msra.mxu0 %v1564
      %2014 = vmatprep.subr.bf16.mxu0 %v1567
      %2015 = vmatpush1.bf16.msra.mxu0 %v1566
      %2016 = vmatprep.subr.bf16.mxu0 %v1569
      %2017 = vmatpush1.bf16.msra.mxu0 %v1568
      %2018 = vmatprep.subr.bf16.mxu0 %v1571
      %2019 = vmatpush1.bf16.msra.mxu0 %v1570
      %2020 = vmatprep.subr.bf16.mxu0 %v1573
      %2021 = vmatpush1.bf16.msra.mxu0 %v1572
      %2022 = vmatprep.subr.bf16.mxu0 %v1575
      %2023 = vmatpush1.bf16.msra.mxu0 %v1574
      %2024 = vmatprep.subr.bf16.mxu0 %v1577
      %2025 = vmatpush1.bf16.msra.mxu0 %v1576
      %2026 = vmatprep.subr.bf16.mxu0 %v1579
      %2027 = vmatpush1.bf16.msra.mxu0 %v1578
      %2028 = vmatprep.subr.bf16.mxu0 %v1581
      %2029 = vmatpush1.bf16.msra.mxu0 %v1580
      %2030 = vmatprep.subr.bf16.mxu0 %v1583
      %2031 = vmatpush1.bf16.msra.mxu0 %v1582
      %2032 = vmatprep.subr.bf16.mxu0 %v1585
      %2033 = vmatpush1.bf16.msra.mxu0 %v1584
      %2034 = vmatprep.subr.bf16.mxu0 %v1587
      %2035 = vmatpush1.bf16.msra.mxu0 %v1586
      %2036 = vmatprep.subr.bf16.mxu0 %v1589
      %2037 = vmatpush1.bf16.msra.mxu0 %v1588
      %2038 = vmatprep.subr.bf16.mxu0 %v1591
      %2039 = vmatpush1.bf16.msra.mxu0 %v1590
      %2040 = vmatprep.mubr.bf16.mxu0 %v777
      %2041 = vmatmul.mubr.bf16.gmra.mrb[0].mxu0 %v776
      %v2042 = vpop.f32.mrb[0].mxu0
      %v2043 = vadd.f32 %v622, %v2042
      %v2044 = vpop.f32.mrb[0].mxu0
      %v2045 = vadd.f32 %v626, %v2044
      %v2046 = vpop.f32.mrb[0].mxu0
      %v2047 = vadd.f32 %v622, %v2046
      %v2048 = vpop.f32.mrb[0].mxu0
      %v2049 = vadd.f32 %v626, %v2048
      %2050 = vmatprep.mubr.bf16.mxu0 %v791
      %2051 = vmatmul.mubr.bf16.gmra.mrb[0].mxu0 %v790
      %v2052 = vpop.f32.mrb[0].mxu0
      %v2053 = vadd.f32 %v622, %v2052
      %v2054 = vpop.f32.mrb[0].mxu0
      %v2055 = vadd.f32 %v626, %v2054
      %v2056 = vpop.f32.mrb[0].mxu0
      %v2057 = vadd.f32 %v622, %v2056
      %v2058 = vpop.f32.mrb[0].mxu0
      %v2059 = vadd.f32 %v626, %v2058
      %2060 = vmatprep.mubr.bf16.mxu0 %v805
      %2061 = vmatmul.mubr.bf16.gmra.mrb[0].mxu0 %v804
      %v2062 = vpop.f32.mrb[0].mxu0
      %v2063 = vadd.f32 %v622, %v2062
      %v2064 = vpop.f32.mrb[0].mxu0
      %v2065 = vadd.f32 %v626, %v2064
      %v2066 = vpop.f32.mrb[0].mxu0
      %v2067 = vadd.f32 %v622, %v2066
      %v2068 = vpop.f32.mrb[0].mxu0
      %v2069 = vadd.f32 %v626, %v2068
      %2070 = vmatprep.mubr.bf16.mxu0 %v819
      %2071 = vmatmul.mubr.bf16.gmra.mrb[0].mxu0 %v818
      %v2072 = vpop.f32.mrb[0].mxu0
      %v2073 = vadd.f32 %v622, %v2072
      %v2074 = vpop.f32.mrb[0].mxu0
      %v2075 = vadd.f32 %v626, %v2074
      %v2076 = vpop.f32.mrb[0].mxu0
      %v2077 = vpop.f32.mrb[0].mxu0
      %2078 = vdwg.mxu0
      %2079 = vmatprep.subr.bf16.mxu0 %v1593
      %2080 = vmatpush1.bf16.msra.mxu0 %v1592
      %2081 = vmatprep.subr.bf16.mxu0 %v1595
      %2082 = vmatpush1.bf16.msra.mxu0 %v1594
      %2083 = vmatprep.subr.bf16.mxu0 %v1597
      %2084 = vmatpush1.bf16.msra.mxu0 %v1596
      %2085 = vmatprep.subr.bf16.mxu0 %v1599
      %2086 = vmatpush1.bf16.msra.mxu0 %v1598
      %2087 = vmatprep.subr.bf16.mxu0 %v1601
      %2088 = vmatpush1.bf16.msra.mxu0 %v1600
      %2089 = vmatprep.subr.bf16.mxu0 %v1603
      %2090 = vmatpush1.bf16.msra.mxu0 %v1602
      %2091 = vmatprep.subr.bf16.mxu0 %v1605
      %2092 = vmatpush1.bf16.msra.mxu0 %v1604
      %2093 = vmatprep.subr.bf16.mxu0 %v1607
      %2094 = vmatpush1.bf16.msra.mxu0 %v1606
      %2095 = vmatprep.subr.bf16.mxu0 %v1609
      %2096 = vmatpush1.bf16.msra.mxu0 %v1608
      %2097 = vmatprep.subr.bf16.mxu0 %v1611
      %2098 = vmatpush1.bf16.msra.mxu0 %v1610
      %2099 = vmatprep.subr.bf16.mxu0 %v1613
      %2100 = vmatpush1.bf16.msra.mxu0 %v1612
      %2101 = vmatprep.subr.bf16.mxu0 %v1615
      %2102 = vmatpush1.bf16.msra.mxu0 %v1614
      %2103 = vmatprep.subr.bf16.mxu0 %v1617
      %2104 = vmatpush1.bf16.msra.mxu0 %v1616
      %2105 = vmatprep.subr.bf16.mxu0 %v1619
      %2106 = vmatpush1.bf16.msra.mxu0 %v1618
      %2107 = vmatprep.subr.bf16.mxu0 %v1621
      %2108 = vmatpush1.bf16.msra.mxu0 %v1620
      %2109 = vmatprep.subr.bf16.mxu0 %v1623
      %2110 = vmatpush1.bf16.msra.mxu0 %v1622
      %2111 = vmatprep.mubr.bf16.mxu0 %v779
      %2112 = vmatmul.mubr.bf16.gmra.mrb[0].mxu0 %v778
      %v2113 = vpop.f32.mrb[0].mxu0
      %v2114 = vadd.f32 %v2043, %v2113
      %v2115 = vpop.f32.mrb[0].mxu0
      %v2116 = vadd.f32 %v2045, %v2115
      %v2117 = vpop.f32.mrb[0].mxu0
      %v2118 = vadd.f32 %v2047, %v2117
      %v2119 = vpop.f32.mrb[0].mxu0
      %v2120 = vadd.f32 %v2049, %v2119
      %2121 = vmatprep.mubr.bf16.mxu0 %v793
      %2122 = vmatmul.mubr.bf16.gmra.mrb[0].mxu0 %v792
      %v2123 = vpop.f32.mrb[0].mxu0
      %v2124 = vadd.f32 %v2053, %v2123
      %v2125 = vpop.f32.mrb[0].mxu0
      %v2126 = vadd.f32 %v2055, %v2125
      %v2127 = vpop.f32.mrb[0].mxu0
      %v2128 = vadd.f32 %v2057, %v2127
      %v2129 = vpop.f32.mrb[0].mxu0
      %v2130 = vadd.f32 %v2059, %v2129
      %2131 = vmatprep.mubr.bf16.mxu0 %v807
      %2132 = vmatmul.mubr.bf16.gmra.mrb[0].mxu0 %v806
      %v2133 = vpop.f32.mrb[0].mxu0
      %v2134 = vadd.f32 %v2063, %v2133
      %v2135 = vpop.f32.mrb[0].mxu0
      %v2136 = vadd.f32 %v2065, %v2135
      %v2137 = vpop.f32.mrb[0].mxu0
      %v2138 = vadd.f32 %v2067, %v2137
      %v2139 = vpop.f32.mrb[0].mxu0
      %v2140 = vadd.f32 %v2069, %v2139
      %2141 = vmatprep.mubr.bf16.mxu0 %v821
      %2142 = vmatmul.mubr.bf16.gmra.mrb[0].mxu0 %v820
      %v2143 = vpop.f32.mrb[0].mxu0
      %v2144 = vadd.f32 %v2073, %v2143
      %v2145 = vpop.f32.mrb[0].mxu0
      %v2146 = vadd.f32 %v2075, %v2145
      %v2147 = vpop.f32.mrb[0].mxu0
      %v2148 = vpop.f32.mrb[0].mxu0
      %2149 = vdwg.mxu0
      %2150 = vmatprep.subr.bf16.mxu0 %v1625
      %2151 = vmatpush1.bf16.msra.mxu0 %v1624
      %2152 = vmatprep.subr.bf16.mxu0 %v1627
      %2153 = vmatpush1.bf16.msra.mxu0 %v1626
      %2154 = vmatprep.subr.bf16.mxu0 %v1629
      %2155 = vmatpush1.bf16.msra.mxu0 %v1628
      %2156 = vmatprep.subr.bf16.mxu0 %v1631
      %2157 = vmatpush1.bf16.msra.mxu0 %v1630
      %2158 = vmatprep.subr.bf16.mxu0 %v1633
      %2159 = vmatpush1.bf16.msra.mxu0 %v1632
      %2160 = vmatprep.subr.bf16.mxu0 %v1635
      %2161 = vmatpush1.bf16.msra.mxu0 %v1634
      %2162 = vmatprep.subr.bf16.mxu0 %v1637
      %2163 = vmatpush1.bf16.msra.mxu0 %v1636
      %2164 = vmatprep.subr.bf16.mxu0 %v1639
      %2165 = vmatpush1.bf16.msra.mxu0 %v1638
      %2166 = vmatprep.subr.bf16.mxu0 %v1641
      %2167 = vmatpush1.bf16.msra.mxu0 %v1640
      %2168 = vmatprep.subr.bf16.mxu0 %v1643
      %2169 = vmatpush1.bf16.msra.mxu0 %v1642
      %2170 = vmatprep.subr.bf16.mxu0 %v1645
      %2171 = vmatpush1.bf16.msra.mxu0 %v1644
      %2172 = vmatprep.subr.bf16.mxu0 %v1647
      %2173 = vmatpush1.bf16.msra.mxu0 %v1646
      %2174 = vmatprep.subr.bf16.mxu0 %v1649
      %2175 = vmatpush1.bf16.msra.mxu0 %v1648
      %2176 = vmatprep.subr.bf16.mxu0 %v1651
      %2177 = vmatpush1.bf16.msra.mxu0 %v1650
      %2178 = vmatprep.subr.bf16.mxu0 %v1653
      %2179 = vmatpush1.bf16.msra.mxu0 %v1652
      %2180 = vmatprep.subr.bf16.mxu0 %v1655
      %2181 = vmatpush1.bf16.msra.mxu0 %v1654
      %2182 = vmatprep.mubr.bf16.mxu0 %v781
      %2183 = vmatmul.mubr.bf16.gmra.mrb[0].mxu0 %v780
      %v2184 = vpop.f32.mrb[0].mxu0
      %v2185 = vadd.f32 %v2114, %v2184
      %v2186 = vpop.f32.mrb[0].mxu0
      %v2187 = vadd.f32 %v2116, %v2186
      %v2188 = vpop.f32.mrb[0].mxu0
      %v2189 = vadd.f32 %v2118, %v2188
      %v2190 = vpop.f32.mrb[0].mxu0
      %v2191 = vadd.f32 %v2120, %v2190
      %2192 = vmatprep.mubr.bf16.mxu0 %v795
      %2193 = vmatmul.mubr.bf16.gmra.mrb[0].mxu0 %v794
      %v2194 = vpop.f32.mrb[0].mxu0
      %v2195 = vadd.f32 %v2124, %v2194
      %v2196 = vpop.f32.mrb[0].mxu0
      %v2197 = vadd.f32 %v2126, %v2196
      %v2198 = vpop.f32.mrb[0].mxu0
      %v2199 = vadd.f32 %v2128, %v2198
      %v2200 = vpop.f32.mrb[0].mxu0
      %v2201 = vadd.f32 %v2130, %v2200
      %2202 = vmatprep.mubr.bf16.mxu0 %v809
      %2203 = vmatmul.mubr.bf16.gmra.mrb[0].mxu0 %v808
      %v2204 = vpop.f32.mrb[0].mxu0
      %v2205 = vadd.f32 %v2134, %v2204
      %v2206 = vpop.f32.mrb[0].mxu0
      %v2207 = vadd.f32 %v2136, %v2206
      %v2208 = vpop.f32.mrb[0].mxu0
      %v2209 = vadd.f32 %v2138, %v2208
      %v2210 = vpop.f32.mrb[0].mxu0
      %v2211 = vadd.f32 %v2140, %v2210
      %2212 = vmatprep.mubr.bf16.mxu0 %v823
      %2213 = vmatmul.mubr.bf16.gmra.mrb[0].mxu0 %v822
      %v2214 = vpop.f32.mrb[0].mxu0
      %v2215 = vadd.f32 %v2144, %v2214
      %v2216 = vpop.f32.mrb[0].mxu0
      %v2217 = vadd.f32 %v2146, %v2216
      %v2218 = vpop.f32.mrb[0].mxu0
      %v2219 = vpop.f32.mrb[0].mxu0
      %2220 = vdwg.mxu0
      %2221 = vmatprep.subr.bf16.mxu0 %v1657
      %2222 = vmatpush1.bf16.msra.mxu0 %v1656
      %2223 = vmatprep.subr.bf16.mxu0 %v1659
      %2224 = vmatpush1.bf16.msra.mxu0 %v1658
      %2225 = vmatprep.subr.bf16.mxu0 %v1661
      %2226 = vmatpush1.bf16.msra.mxu0 %v1660
      %2227 = vmatprep.subr.bf16.mxu0 %v1663
      %2228 = vmatpush1.bf16.msra.mxu0 %v1662
      %2229 = vmatprep.subr.bf16.mxu0 %v1665
      %2230 = vmatpush1.bf16.msra.mxu0 %v1664
      %2231 = vmatprep.subr.bf16.mxu0 %v1667
      %2232 = vmatpush1.bf16.msra.mxu0 %v1666
      %2233 = vmatprep.subr.bf16.mxu0 %v1669
      %2234 = vmatpush1.bf16.msra.mxu0 %v1668
      %2235 = vmatprep.subr.bf16.mxu0 %v1671
      %2236 = vmatpush1.bf16.msra.mxu0 %v1670
      %2237 = vmatprep.subr.bf16.mxu0 %v1673
      %2238 = vmatpush1.bf16.msra.mxu0 %v1672
      %2239 = vmatprep.subr.bf16.mxu0 %v1675
      %2240 = vmatpush1.bf16.msra.mxu0 %v1674
      %2241 = vmatprep.subr.bf16.mxu0 %v1677
      %2242 = vmatpush1.bf16.msra.mxu0 %v1676
      %2243 = vmatprep.subr.bf16.mxu0 %v1679
      %2244 = vmatpush1.bf16.msra.mxu0 %v1678
      %2245 = vmatprep.subr.bf16.mxu0 %v1681
      %2246 = vmatpush1.bf16.msra.mxu0 %v1680
      %2247 = vmatprep.subr.bf16.mxu0 %v1683
      %2248 = vmatpush1.bf16.msra.mxu0 %v1682
      %2249 = vmatprep.subr.bf16.mxu0 %v1685
      %2250 = vmatpush1.bf16.msra.mxu0 %v1684
      %2251 = vmatprep.subr.bf16.mxu0 %v1687
      %2252 = vmatpush1.bf16.msra.mxu0 %v1686
      %2253 = vmatprep.mubr.bf16.mxu0 %v783
      %2254 = vmatmul.mubr.bf16.gmra.mrb[0].mxu0 %v782
      %v2255 = vpop.f32.mrb[0].mxu0
      %v2256 = vadd.f32 %v2185, %v2255
      %v2257 = vpop.f32.mrb[0].mxu0
      %v2258 = vadd.f32 %v2187, %v2257
      %v2259 = vpop.f32.mrb[0].mxu0
      %v2260 = vadd.f32 %v2189, %v2259
      %v2261 = vpop.f32.mrb[0].mxu0
      %v2262 = vadd.f32 %v2191, %v2261
      %2263 = vmatprep.mubr.bf16.mxu0 %v797
      %2264 = vmatmul.mubr.bf16.gmra.mrb[0].mxu0 %v796
      %v2265 = vpop.f32.mrb[0].mxu0
      %v2266 = vadd.f32 %v2195, %v2265
      %v2267 = vpop.f32.mrb[0].mxu0
      %v2268 = vadd.f32 %v2197, %v2267
      %v2269 = vpop.f32.mrb[0].mxu0
      %v2270 = vadd.f32 %v2199, %v2269
      %v2271 = vpop.f32.mrb[0].mxu0
      %v2272 = vadd.f32 %v2201, %v2271
      %2273 = vmatprep.mubr.bf16.mxu0 %v811
      %2274 = vmatmul.mubr.bf16.gmra.mrb[0].mxu0 %v810
      %v2275 = vpop.f32.mrb[0].mxu0
      %v2276 = vadd.f32 %v2205, %v2275
      %v2277 = vpop.f32.mrb[0].mxu0
      %v2278 = vadd.f32 %v2207, %v2277
      %v2279 = vpop.f32.mrb[0].mxu0
      %v2280 = vadd.f32 %v2209, %v2279
      %v2281 = vpop.f32.mrb[0].mxu0
      %v2282 = vadd.f32 %v2211, %v2281
      %2283 = vmatprep.mubr.bf16.mxu0 %v825
      %2284 = vmatmul.mubr.bf16.gmra.mrb[0].mxu0 %v824
      %v2285 = vpop.f32.mrb[0].mxu0
      %v2286 = vadd.f32 %v2215, %v2285
      %v2287 = vpop.f32.mrb[0].mxu0
      %v2288 = vadd.f32 %v2217, %v2287
      %v2289 = vpop.f32.mrb[0].mxu0
      %v2290 = vpop.f32.mrb[0].mxu0
      %2291 = vdwg.mxu0
      %2292 = vmatprep.subr.bf16.mxu0 %v1689
      %2293 = vmatpush1.bf16.msra.mxu0 %v1688
      %2294 = vmatprep.subr.bf16.mxu0 %v1691
      %2295 = vmatpush1.bf16.msra.mxu0 %v1690
      %2296 = vmatprep.subr.bf16.mxu0 %v1693
      %2297 = vmatpush1.bf16.msra.mxu0 %v1692
      %2298 = vmatprep.subr.bf16.mxu0 %v1695
      %2299 = vmatpush1.bf16.msra.mxu0 %v1694
      %2300 = vmatprep.subr.bf16.mxu0 %v1697
      %2301 = vmatpush1.bf16.msra.mxu0 %v1696
      %2302 = vmatprep.subr.bf16.mxu0 %v1699
      %2303 = vmatpush1.bf16.msra.mxu0 %v1698
      %2304 = vmatprep.subr.bf16.mxu0 %v1701
      %2305 = vmatpush1.bf16.msra.mxu0 %v1700
      %2306 = vmatprep.subr.bf16.mxu0 %v1703
      %2307 = vmatpush1.bf16.msra.mxu0 %v1702
      %2308 = vmatprep.subr.bf16.mxu0 %v1705
      %2309 = vmatpush1.bf16.msra.mxu0 %v1704
      %2310 = vmatprep.subr.bf16.mxu0 %v1707
      %2311 = vmatpush1.bf16.msra.mxu0 %v1706
      %2312 = vmatprep.subr.bf16.mxu0 %v1709
      %2313 = vmatpush1.bf16.msra.mxu0 %v1708
      %2314 = vmatprep.subr.bf16.mxu0 %v1711
      %2315 = vmatpush1.bf16.msra.mxu0 %v1710
      %2316 = vmatprep.subr.bf16.mxu0 %v1713
      %2317 = vmatpush1.bf16.msra.mxu0 %v1712
      %2318 = vmatprep.subr.bf16.mxu0 %v1715
      %2319 = vmatpush1.bf16.msra.mxu0 %v1714
      %2320 = vmatprep.subr.bf16.mxu0 %v1717
      %2321 = vmatpush1.bf16.msra.mxu0 %v1716
      %2322 = vmatprep.subr.bf16.mxu0 %v1719
      %2323 = vmatpush1.bf16.msra.mxu0 %v1718
      %2324 = vmatprep.mubr.bf16.mxu0 %v785
      %2325 = vmatmul.mubr.bf16.gmra.mrb[0].mxu0 %v784
      %v2326 = vpop.f32.mrb[0].mxu0
      %v2327 = vadd.f32 %v2256, %v2326
      %v2328 = vpop.f32.mrb[0].mxu0
      %v2329 = vadd.f32 %v2258, %v2328
      %v2330 = vpop.f32.mrb[0].mxu0
      %v2331 = vadd.f32 %v2260, %v2330
      %v2332 = vpop.f32.mrb[0].mxu0
      %v2333 = vadd.f32 %v2262, %v2332
      %2334 = vmatprep.mubr.bf16.mxu0 %v799
      %2335 = vmatmul.mubr.bf16.gmra.mrb[0].mxu0 %v798
      %v2336 = vpop.f32.mrb[0].mxu0
      %v2337 = vadd.f32 %v2266, %v2336
      %v2338 = vpop.f32.mrb[0].mxu0
      %v2339 = vadd.f32 %v2268, %v2338
      %v2340 = vpop.f32.mrb[0].mxu0
      %v2341 = vadd.f32 %v2270, %v2340
      %v2342 = vpop.f32.mrb[0].mxu0
      %v2343 = vadd.f32 %v2272, %v2342
      %2344 = vmatprep.mubr.bf16.mxu0 %v813
      %2345 = vmatmul.mubr.bf16.gmra.mrb[0].mxu0 %v812
      %v2346 = vpop.f32.mrb[0].mxu0
      %v2347 = vadd.f32 %v2276, %v2346
      %v2348 = vpop.f32.mrb[0].mxu0
      %v2349 = vadd.f32 %v2278, %v2348
      %v2350 = vpop.f32.mrb[0].mxu0
      %v2351 = vadd.f32 %v2280, %v2350
      %v2352 = vpop.f32.mrb[0].mxu0
      %v2353 = vadd.f32 %v2282, %v2352
      %2354 = vmatprep.mubr.bf16.mxu0 %v827
      %2355 = vmatmul.mubr.bf16.gmra.mrb[0].mxu0 %v826
      %v2356 = vpop.f32.mrb[0].mxu0
      %v2357 = vadd.f32 %v2286, %v2356
      %v2358 = vpop.f32.mrb[0].mxu0
      %v2359 = vadd.f32 %v2288, %v2358
      %v2360 = vpop.f32.mrb[0].mxu0
      %v2361 = vpop.f32.mrb[0].mxu0
      %2362 = vdwg.mxu0
      %2363 = vmatprep.subr.bf16.mxu0 %v1721
      %2364 = vmatpush1.bf16.msra.mxu0 %v1720
      %2365 = vmatprep.subr.bf16.mxu0 %v1723
      %2366 = vmatpush1.bf16.msra.mxu0 %v1722
      %2367 = vmatprep.subr.bf16.mxu0 %v1725
      %2368 = vmatpush1.bf16.msra.mxu0 %v1724
      %2369 = vmatprep.subr.bf16.mxu0 %v1727
      %2370 = vmatpush1.bf16.msra.mxu0 %v1726
      %2371 = vmatprep.subr.bf16.mxu0 %v1729
      %2372 = vmatpush1.bf16.msra.mxu0 %v1728
      %2373 = vmatprep.subr.bf16.mxu0 %v1731
      %2374 = vmatpush1.bf16.msra.mxu0 %v1730
      %2375 = vmatprep.subr.bf16.mxu0 %v1733
      %2376 = vmatpush1.bf16.msra.mxu0 %v1732
      %2377 = vmatprep.subr.bf16.mxu0 %v1735
      %2378 = vmatpush1.bf16.msra.mxu0 %v1734
      %2379 = vmatprep.subr.bf16.mxu0 %v1737
      %2380 = vmatpush1.bf16.msra.mxu0 %v1736
      %2381 = vmatprep.subr.bf16.mxu0 %v1739
      %2382 = vmatpush1.bf16.msra.mxu0 %v1738
      %2383 = vmatprep.subr.bf16.mxu0 %v1741
      %2384 = vmatpush1.bf16.msra.mxu0 %v1740
      %2385 = vmatprep.subr.bf16.mxu0 %v1743
      %2386 = vmatpush1.bf16.msra.mxu0 %v1742
      %2387 = vmatprep.subr.bf16.mxu0 %v1745
      %2388 = vmatpush1.bf16.msra.mxu0 %v1744
      %2389 = vmatprep.subr.bf16.mxu0 %v1747
      %2390 = vmatpush1.bf16.msra.mxu0 %v1746
      %2391 = vmatprep.subr.bf16.mxu0 %v1749
      %2392 = vmatpush1.bf16.msra.mxu0 %v1748
      %2393 = vmatprep.subr.bf16.mxu0 %v1751
      %2394 = vmatpush1.bf16.msra.mxu0 %v1750
      %2395 = vmatprep.mubr.bf16.mxu0 %v787
      %2396 = vmatmul.mubr.bf16.gmra.mrb[0].mxu0 %v786
      %v2397 = vpop.f32.mrb[0].mxu0
      %v2398 = vadd.f32 %v2327, %v2397
      %v2399 = vpop.f32.mrb[0].mxu0
      %v2400 = vadd.f32 %v2329, %v2399
      %v2401 = vpop.f32.mrb[0].mxu0
      %v2402 = vadd.f32 %v2331, %v2401
      %v2403 = vpop.f32.mrb[0].mxu0
      %v2404 = vadd.f32 %v2333, %v2403
      %2405 = vmatprep.mubr.bf16.mxu0 %v801
      %2406 = vmatmul.mubr.bf16.gmra.mrb[0].mxu0 %v800
      %v2407 = vpop.f32.mrb[0].mxu0
      %v2408 = vadd.f32 %v2337, %v2407
      %v2409 = vpop.f32.mrb[0].mxu0
      %v2410 = vadd.f32 %v2339, %v2409
      %v2411 = vpop.f32.mrb[0].mxu0
      %v2412 = vadd.f32 %v2341, %v2411
      %v2413 = vpop.f32.mrb[0].mxu0
      %v2414 = vadd.f32 %v2343, %v2413
      %2415 = vmatprep.mubr.bf16.mxu0 %v815
      %2416 = vmatmul.mubr.bf16.gmra.mrb[0].mxu0 %v814
      %v2417 = vpop.f32.mrb[0].mxu0
      %v2418 = vadd.f32 %v2347, %v2417
      %v2419 = vpop.f32.mrb[0].mxu0
      %v2420 = vadd.f32 %v2349, %v2419
      %v2421 = vpop.f32.mrb[0].mxu0
      %v2422 = vadd.f32 %v2351, %v2421
      %v2423 = vpop.f32.mrb[0].mxu0
      %v2424 = vadd.f32 %v2353, %v2423
      %2425 = vmatprep.mubr.bf16.mxu0 %v829
      %2426 = vmatmul.mubr.bf16.gmra.mrb[0].mxu0 %v828
      %v2427 = vpop.f32.mrb[0].mxu0
      %v2428 = vadd.f32 %v2357, %v2427
      %v2429 = vpop.f32.mrb[0].mxu0
      %v2430 = vadd.f32 %v2359, %v2429
      %v2431 = vpop.f32.mrb[0].mxu0
      %v2432 = vpop.f32.mrb[0].mxu0
      %2433 = vdwg.mxu0
      %2434 = vmatprep.subr.bf16.mxu0 %v1753
      %2435 = vmatpush1.bf16.msra.mxu0 %v1752
      %2436 = vmatprep.subr.bf16.mxu0 %v1755
      %2437 = vmatpush1.bf16.msra.mxu0 %v1754
      %2438 = vmatprep.subr.bf16.mxu0 %v1757
      %2439 = vmatpush1.bf16.msra.mxu0 %v1756
      %2440 = vmatprep.subr.bf16.mxu0 %v1759
      %2441 = vmatpush1.bf16.msra.mxu0 %v1758
      %2442 = vmatprep.subr.bf16.mxu0 %v1761
      %2443 = vmatpush1.bf16.msra.mxu0 %v1760
      %2444 = vmatprep.subr.bf16.mxu0 %v1763
      %2445 = vmatpush1.bf16.msra.mxu0 %v1762
      %2446 = vmatprep.subr.bf16.mxu0 %v1765
      %2447 = vmatpush1.bf16.msra.mxu0 %v1764
      %2448 = vmatprep.subr.bf16.mxu0 %v1767
      %2449 = vmatpush1.bf16.msra.mxu0 %v1766
      %2450 = vmatprep.subr.bf16.mxu0 %v1769
      %2451 = vmatpush1.bf16.msra.mxu0 %v1768
      %2452 = vmatprep.subr.bf16.mxu0 %v1771
      %2453 = vmatpush1.bf16.msra.mxu0 %v1770
      %2454 = vmatprep.subr.bf16.mxu0 %v1773
      %2455 = vmatpush1.bf16.msra.mxu0 %v1772
      %2456 = vmatprep.subr.bf16.mxu0 %v1775
      %2457 = vmatpush1.bf16.msra.mxu0 %v1774
      %2458 = vmatprep.subr.bf16.mxu0 %v1777
      %2459 = vmatpush1.bf16.msra.mxu0 %v1776
      %2460 = vmatprep.subr.bf16.mxu0 %v1779
      %2461 = vmatpush1.bf16.msra.mxu0 %v1778
      %2462 = vmatprep.subr.bf16.mxu0 %v1781
      %2463 = vmatpush1.bf16.msra.mxu0 %v1780
      %2464 = vmatprep.subr.bf16.mxu0 %v1783
      %2465 = vmatpush1.bf16.msra.mxu0 %v1782
      %2466 = vmatprep.mubr.bf16.mxu0 %v789
      %2467 = vmatmul.mubr.bf16.gmra.mrb[0].mxu0 %v788
      %v2468 = vpop.f32.mrb[0].mxu0
      %v2469 = vadd.f32 %v2398, %v2468
      %v2470 = vpop.f32.mrb[0].mxu0
      %v2471 = vadd.f32 %v2400, %v2470
      %v2472 = vpop.f32.mrb[0].mxu0
      %v2473 = vadd.f32 %v2402, %v2472
      %v2474 = vpop.f32.mrb[0].mxu0
      %v2475 = vadd.f32 %v2404, %v2474
      %2476 = vmatprep.mubr.bf16.mxu0 %v803
      %2477 = vmatmul.mubr.bf16.gmra.mrb[0].mxu0 %v802
      %v2478 = vpop.f32.mrb[0].mxu0
      %v2479 = vadd.f32 %v2408, %v2478
      %v2480 = vpop.f32.mrb[0].mxu0
      %v2481 = vadd.f32 %v2410, %v2480
      %v2482 = vpop.f32.mrb[0].mxu0
      %v2483 = vadd.f32 %v2412, %v2482
      %v2484 = vpop.f32.mrb[0].mxu0
      %v2485 = vadd.f32 %v2414, %v2484
      %2486 = vmatprep.mubr.bf16.mxu0 %v817
      %2487 = vmatmul.mubr.bf16.gmra.mrb[0].mxu0 %v816
      %v2488 = vpop.f32.mrb[0].mxu0
      %v2489 = vadd.f32 %v2418, %v2488
      %v2490 = vpop.f32.mrb[0].mxu0
      %v2491 = vadd.f32 %v2420, %v2490
      %v2492 = vpop.f32.mrb[0].mxu0
      %v2493 = vadd.f32 %v2422, %v2492
      %v2494 = vpop.f32.mrb[0].mxu0
      %v2495 = vadd.f32 %v2424, %v2494
      %2496 = vmatprep.mubr.bf16.mxu0 %v831
      %2497 = vmatmul.mubr.bf16.gmra.mrb[0].mxu0 %v830
      %v2498 = vpop.f32.mrb[0].mxu0
      %v2499 = vadd.f32 %v2428, %v2498
      %v2500 = vpop.f32.mrb[0].mxu0
      %v2501 = vadd.f32 %v2430, %v2500
      %v2502 = vpop.f32.mrb[0].mxu0
      %v2503 = vpop.f32.mrb[0].mxu0
      %2504 = vdwg.mxu0
      %v2505 = vmax.f32 %v2469, 0.0
      %v2506 = vmax.f32 %v2471, 0.0
      %v2507 = vmax.f32 %v2473, 0.0
      %v2508 = vmax.f32 %v2475, 0.0
      %v2509 = vmax.f32 %v2479, 0.0
      %v2510 = vmax.f32 %v2481, 0.0
      %v2511 = vmax.f32 %v2483, 0.0
      %v2512 = vmax.f32 %v2485, 0.0
      %v2513 = vmax.f32 %v2489, 0.0
      %v2514 = vmax.f32 %v2491, 0.0
      %v2515 = vmax.f32 %v2493, 0.0
      %v2516 = vmax.f32 %v2495, 0.0
      %v2517 = vmax.f32 %v2499, 0.0
      %v2518 = vmax.f32 %v2501, 0.0
      %v2519 = vpack.c.bf16 %v2507, %v2505
      %v2520 = vpack.c.bf16 %v2508, %v2506
      %v2521 = vpack.c.bf16 %v2511, %v2509
      %v2522 = vpack.c.bf16 %v2512, %v2510
      %v2523 = vpack.c.bf16 %v2515, %v2513
      %v2524 = vpack.c.bf16 %v2516, %v2514
      %v2525 = vpack.c.bf16 %v2517, %v2517
      %v2526 = vpack.c.bf16 %v2518, %v2518
      %v2528 = vlaneseq
      %v2529 = vshrl.u32 %v2528, 7
      %v2530 = vsub.s32 0, %v2529
      %v2531 = vrot.slane %v342, %v2530
      %v2532 = vlaneseq
      %v2533 = vshrl.u32 %v2532, 7
      %v2534 = vsub.s32 1, %v2533
      %v2535 = vrot.slane %v342, %v2534
      %v2570 = vunpack.c.l.b16 %v278
      %v2571 = vunpack.c.h.b16 %v278
      %v2572 = vunpack.c.l.b16 %v279
      %v2573 = vunpack.c.h.b16 %v279
      %v2574 = vunpack.c.l.b16 %v280
      %v2575 = vunpack.c.h.b16 %v280
      %v2576 = vunpack.c.l.b16 %v281
      %v2577 = vunpack.c.h.b16 %v281
      %v2578 = vunpack.c.l.b16 %v282
      %v2579 = vunpack.c.h.b16 %v282
      %v2580 = vunpack.c.l.b16 %v283
      %v2581 = vunpack.c.h.b16 %v283
      %v2582 = vunpack.c.l.b16 %v284
      %v2583 = vunpack.c.h.b16 %v284
      %v2584 = vunpack.c.l.b16 %v285
      %v2585 = vunpack.c.h.b16 %v285
      %v2586 = vunpack.c.l.b16 %v286
      %v2587 = vunpack.c.h.b16 %v286
      %v2588 = vunpack.c.l.b16 %v287
      %v2589 = vunpack.c.h.b16 %v287
      %v2590 = vunpack.c.l.b16 %v288
      %v2591 = vunpack.c.h.b16 %v288
      %v2592 = vunpack.c.l.b16 %v289
      %v2593 = vunpack.c.h.b16 %v289
      %v2594 = vunpack.c.l.b16 %v290
      %v2595 = vunpack.c.h.b16 %v290
      %v2596 = vunpack.c.l.b16 %v291
      %v2597 = vunpack.c.h.b16 %v291
      %v2598 = vunpack.c.l.b16 %v292
      %v2599 = vunpack.c.h.b16 %v292
      %v2600 = vunpack.c.l.b16 %v293
      %v2601 = vunpack.c.h.b16 %v293
      %v2602 = vunpack.c.l.b16 %v294
      %v2603 = vunpack.c.h.b16 %v294
      %v2604 = vunpack.c.l.b16 %v295
      %v2605 = vunpack.c.h.b16 %v295
      %v2606 = vunpack.c.l.b16 %v296
      %v2607 = vunpack.c.h.b16 %v296
      %v2608 = vunpack.c.l.b16 %v297
      %v2609 = vunpack.c.h.b16 %v297
      %v2610 = vunpack.c.l.b16 %v298
      %v2611 = vunpack.c.h.b16 %v298
      %v2612 = vunpack.c.l.b16 %v299
      %v2613 = vunpack.c.h.b16 %v299
      %v2614 = vunpack.c.l.b16 %v300
      %v2615 = vunpack.c.h.b16 %v300
      %v2616 = vunpack.c.l.b16 %v301
      %v2617 = vunpack.c.h.b16 %v301
      %v2618 = vunpack.c.l.b16 %v302
      %v2619 = vunpack.c.h.b16 %v302
      %v2620 = vunpack.c.l.b16 %v303
      %v2621 = vunpack.c.h.b16 %v303
      %v2622 = vunpack.c.l.b16 %v304
      %v2623 = vunpack.c.h.b16 %v304
      %v2624 = vunpack.c.l.b16 %v305
      %v2625 = vunpack.c.h.b16 %v305
      %v2626 = vunpack.c.l.b16 %v306
      %v2627 = vunpack.c.h.b16 %v306
      %v2628 = vunpack.c.l.b16 %v307
      %v2629 = vunpack.c.h.b16 %v307
      %v2630 = vunpack.c.l.b16 %v308
      %v2631 = vunpack.c.h.b16 %v308
      %v2632 = vunpack.c.l.b16 %v309
      %v2633 = vunpack.c.h.b16 %v309
      %v2634 = vpack.c.b16 %v2572, %v2570
      %v2635 = vpack.c.b16 %v2573, %v2571
      %v2636 = vpack.c.b16 %v2576, %v2574
      %v2637 = vpack.c.b16 %v2577, %v2575
      %v2638 = vpack.c.b16 %v2580, %v2578
      %v2639 = vpack.c.b16 %v2581, %v2579
      %v2640 = vpack.c.b16 %v2584, %v2582
      %v2641 = vpack.c.b16 %v2585, %v2583
      %v2642 = vpack.c.b16 %v2588, %v2586
      %v2643 = vpack.c.b16 %v2589, %v2587
      %v2644 = vpack.c.b16 %v2592, %v2590
      %v2645 = vpack.c.b16 %v2593, %v2591
      %v2646 = vpack.c.b16 %v2596, %v2594
      %v2647 = vpack.c.b16 %v2597, %v2595
      %v2648 = vpack.c.b16 %v2600, %v2598
      %v2649 = vpack.c.b16 %v2601, %v2599
      %v2650 = vpack.c.b16 %v2604, %v2602
      %v2651 = vpack.c.b16 %v2605, %v2603
      %v2652 = vpack.c.b16 %v2608, %v2606
      %v2653 = vpack.c.b16 %v2609, %v2607
      %v2654 = vpack.c.b16 %v2612, %v2610
      %v2655 = vpack.c.b16 %v2613, %v2611
      %v2656 = vpack.c.b16 %v2616, %v2614
      %v2657 = vpack.c.b16 %v2617, %v2615
      %v2658 = vpack.c.b16 %v2620, %v2618
      %v2659 = vpack.c.b16 %v2621, %v2619
      %v2660 = vpack.c.b16 %v2624, %v2622
      %v2661 = vpack.c.b16 %v2625, %v2623
      %v2662 = vpack.c.b16 %v2628, %v2626
      %v2663 = vpack.c.b16 %v2629, %v2627
      %v2664 = vpack.c.b16 %v2632, %v2630
      %v2665 = vpack.c.b16 %v2633, %v2631
      %2698 = vmatprep.subr.bf16.mxu0 %v2635
      %2699 = vmatpush1.bf16.msra.mxu0 %v2634
      %2700 = vmatprep.subr.bf16.mxu0 %v2637
      %2701 = vmatpush1.bf16.msra.mxu0 %v2636
      %2702 = vmatprep.subr.bf16.mxu0 %v2639
      %2703 = vmatpush1.bf16.msra.mxu0 %v2638
      %2704 = vmatprep.subr.bf16.mxu0 %v2641
      %2705 = vmatpush1.bf16.msra.mxu0 %v2640
      %2706 = vmatprep.subr.bf16.mxu0 %v2643
      %2707 = vmatpush1.bf16.msra.mxu0 %v2642
      %2708 = vmatprep.subr.bf16.mxu0 %v2645
      %2709 = vmatpush1.bf16.msra.mxu0 %v2644
      %2710 = vmatprep.subr.bf16.mxu0 %v2647
      %2711 = vmatpush1.bf16.msra.mxu0 %v2646
      %2712 = vmatprep.subr.bf16.mxu0 %v2649
      %2713 = vmatpush1.bf16.msra.mxu0 %v2648
      %2714 = vmatprep.subr.bf16.mxu0 %v2651
      %2715 = vmatpush1.bf16.msra.mxu0 %v2650
      %2716 = vmatprep.subr.bf16.mxu0 %v2653
      %2717 = vmatpush1.bf16.msra.mxu0 %v2652
      %2718 = vmatprep.subr.bf16.mxu0 %v2655
      %2719 = vmatpush1.bf16.msra.mxu0 %v2654
      %2720 = vmatprep.subr.bf16.mxu0 %v2657
      %2721 = vmatpush1.bf16.msra.mxu0 %v2656
      %2722 = vmatprep.subr.bf16.mxu0 %v2659
      %2723 = vmatpush1.bf16.msra.mxu0 %v2658
      %2724 = vmatprep.subr.bf16.mxu0 %v2661
      %2725 = vmatpush1.bf16.msra.mxu0 %v2660
      %2726 = vmatprep.subr.bf16.mxu0 %v2663
      %2727 = vmatpush1.bf16.msra.mxu0 %v2662
      %2728 = vmatprep.subr.bf16.mxu0 %v2665
      %2729 = vmatpush1.bf16.msra.mxu0 %v2664
      %2730 = vmatprep.mubr.bf16.mxu0 %v2520
      %2731 = vmatmul.mubr.bf16.gmra.mrb[0].mxu0 %v2519
      %v2732 = vpop.f32.mrb[0].mxu0
      %v2733 = vadd.f32 %v2531, %v2732
      %v2734 = vpop.f32.mrb[0].mxu0
      %v2735 = vadd.f32 %v2535, %v2734
      %v2736 = vpop.f32.mrb[0].mxu0
      %v2737 = vadd.f32 %v2531, %v2736
      %v2738 = vpop.f32.mrb[0].mxu0
      %v2739 = vadd.f32 %v2535, %v2738
      %2740 = vmatprep.mubr.bf16.mxu0 %v2522
      %2741 = vmatmul.mubr.bf16.gmra.mrb[0].mxu0 %v2521
      %v2742 = vpop.f32.mrb[0].mxu0
      %v2743 = vadd.f32 %v2531, %v2742
      %v2744 = vpop.f32.mrb[0].mxu0
      %v2745 = vadd.f32 %v2535, %v2744
      %v2746 = vpop.f32.mrb[0].mxu0
      %v2747 = vadd.f32 %v2531, %v2746
      %v2748 = vpop.f32.mrb[0].mxu0
      %v2749 = vadd.f32 %v2535, %v2748
      %2750 = vmatprep.mubr.bf16.mxu0 %v2524
      %2751 = vmatmul.mubr.bf16.gmra.mrb[0].mxu0 %v2523
      %v2752 = vpop.f32.mrb[0].mxu0
      %v2753 = vadd.f32 %v2531, %v2752
      %v2754 = vpop.f32.mrb[0].mxu0
      %v2755 = vadd.f32 %v2535, %v2754
      %v2756 = vpop.f32.mrb[0].mxu0
      %v2757 = vadd.f32 %v2531, %v2756
      %v2758 = vpop.f32.mrb[0].mxu0
      %v2759 = vadd.f32 %v2535, %v2758
      %2760 = vmatprep.mubr.bf16.mxu0 %v2526
      %2761 = vmatmul.mubr.bf16.gmra.mrb[0].mxu0 %v2525
      %v2762 = vpop.f32.mrb[0].mxu0
      %v2763 = vadd.f32 %v2531, %v2762
      %v2764 = vpop.f32.mrb[0].mxu0
      %v2765 = vadd.f32 %v2535, %v2764
      %v2766 = vpop.f32.mrb[0].mxu0
      %v2767 = vpop.f32.mrb[0].mxu0
      %2768 = vdwg.mxu0
      %v2769 = vmax.f32 %v2733, 0.0
      %v2770 = vmax.f32 %v2735, 0.0
      %v2771 = vmax.f32 %v2737, 0.0
      %v2772 = vmax.f32 %v2739, 0.0
      %v2773 = vmax.f32 %v2743, 0.0
      %v2774 = vmax.f32 %v2745, 0.0
      %v2775 = vmax.f32 %v2747, 0.0
      %v2776 = vmax.f32 %v2749, 0.0
      %v2777 = vmax.f32 %v2753, 0.0
      %v2778 = vmax.f32 %v2755, 0.0
      %v2779 = vmax.f32 %v2757, 0.0
      %v2780 = vmax.f32 %v2759, 0.0
      %v2781 = vmax.f32 %v2763, 0.0
      %v2782 = vmax.f32 %v2765, 0.0
      %v2783 = vpack.c.bf16 %v2771, %v2769
      %v2784 = vpack.c.bf16 %v2772, %v2770
      %v2785 = vpack.c.bf16 %v2775, %v2773
      %v2786 = vpack.c.bf16 %v2776, %v2774
      %v2787 = vpack.c.bf16 %v2779, %v2777
      %v2788 = vpack.c.bf16 %v2780, %v2778
      %v2789 = vpack.c.bf16 %v2781, %v2781
      %v2790 = vpack.c.bf16 %v2782, %v2782
      %v2792 = vlaneseq
      %v2793 = vshrl.u32 %v2792, 7
      %v2794 = vsub.s32 0, %v2793
      %v2795 = vrot.slane %v343, %v2794
      %v2829 = vunpack.c.l.b16 %v310
      %v2830 = vunpack.c.l.b16 %v311
      %v2831 = vunpack.c.l.b16 %v312
      %v2832 = vunpack.c.l.b16 %v313
      %v2833 = vunpack.c.l.b16 %v314
      %v2834 = vunpack.c.l.b16 %v315
      %v2835 = vunpack.c.l.b16 %v316
      %v2836 = vunpack.c.l.b16 %v317
      %v2837 = vunpack.c.l.b16 %v318
      %v2838 = vunpack.c.l.b16 %v319
      %v2839 = vunpack.c.l.b16 %v320
      %v2840 = vunpack.c.l.b16 %v321
      %v2841 = vunpack.c.l.b16 %v322
      %v2842 = vunpack.c.l.b16 %v323
      %v2843 = vunpack.c.l.b16 %v324
      %v2844 = vunpack.c.l.b16 %v325
      %v2845 = vunpack.c.l.b16 %v326
      %v2846 = vunpack.c.l.b16 %v327
      %v2847 = vunpack.c.l.b16 %v328
      %v2848 = vunpack.c.l.b16 %v329
      %v2849 = vunpack.c.l.b16 %v330
      %v2850 = vunpack.c.l.b16 %v331
      %v2851 = vunpack.c.l.b16 %v332
      %v2852 = vunpack.c.l.b16 %v333
      %v2853 = vunpack.c.l.b16 %v334
      %v2854 = vunpack.c.l.b16 %v335
      %v2855 = vunpack.c.l.b16 %v336
      %v2856 = vunpack.c.l.b16 %v337
      %v2857 = vunpack.c.l.b16 %v338
      %v2858 = vunpack.c.l.b16 %v339
      %v2859 = vunpack.c.l.b16 %v340
      %v2860 = vunpack.c.l.b16 %v341
      %v2861 = vpack.c.b16 %v2830, %v2829
      %v2862 = vpack.c.b16 %v2832, %v2831
      %v2863 = vpack.c.b16 %v2834, %v2833
      %v2864 = vpack.c.b16 %v2836, %v2835
      %v2865 = vpack.c.b16 %v2838, %v2837
      %v2866 = vpack.c.b16 %v2840, %v2839
      %v2867 = vpack.c.b16 %v2842, %v2841
      %v2868 = vpack.c.b16 %v2844, %v2843
      %v2869 = vpack.c.b16 %v2846, %v2845
      %v2870 = vpack.c.b16 %v2848, %v2847
      %v2871 = vpack.c.b16 %v2850, %v2849
      %v2872 = vpack.c.b16 %v2852, %v2851
      %v2873 = vpack.c.b16 %v2854, %v2853
      %v2874 = vpack.c.b16 %v2856, %v2855
      %v2875 = vpack.c.b16 %v2858, %v2857
      %v2876 = vpack.c.b16 %v2860, %v2859
      %2893 = vmatprep.subr.bf16.mxu0 0
      %2894 = vmatpush1.bf16.msra.mxu0 %v2861
      %2895 = vmatprep.subr.bf16.mxu0 0
      %2896 = vmatpush1.bf16.msra.mxu0 %v2862
      %2897 = vmatprep.subr.bf16.mxu0 0
      %2898 = vmatpush1.bf16.msra.mxu0 %v2863
      %2899 = vmatprep.subr.bf16.mxu0 0
      %2900 = vmatpush1.bf16.msra.mxu0 %v2864
      %2901 = vmatprep.subr.bf16.mxu0 0
      %2902 = vmatpush1.bf16.msra.mxu0 %v2865
      %2903 = vmatprep.subr.bf16.mxu0 0
      %2904 = vmatpush1.bf16.msra.mxu0 %v2866
      %2905 = vmatprep.subr.bf16.mxu0 0
      %2906 = vmatpush1.bf16.msra.mxu0 %v2867
      %2907 = vmatprep.subr.bf16.mxu0 0
      %2908 = vmatpush1.bf16.msra.mxu0 %v2868
      %2909 = vmatprep.subr.bf16.mxu0 0
      %2910 = vmatpush1.bf16.msra.mxu0 %v2869
      %2911 = vmatprep.subr.bf16.mxu0 0
      %2912 = vmatpush1.bf16.msra.mxu0 %v2870
      %2913 = vmatprep.subr.bf16.mxu0 0
      %2914 = vmatpush1.bf16.msra.mxu0 %v2871
      %2915 = vmatprep.subr.bf16.mxu0 0
      %2916 = vmatpush1.bf16.msra.mxu0 %v2872
      %2917 = vmatprep.subr.bf16.mxu0 0
      %2918 = vmatpush1.bf16.msra.mxu0 %v2873
      %2919 = vmatprep.subr.bf16.mxu0 0
      %2920 = vmatpush1.bf16.msra.mxu0 %v2874
      %2921 = vmatprep.subr.bf16.mxu0 0
      %2922 = vmatpush1.bf16.msra.mxu0 %v2875
      %2923 = vmatprep.subr.bf16.mxu0 0
      %2924 = vmatpush1.bf16.msra.mxu0 %v2876
      %2925 = vmatprep.mubr.bf16.mxu0 %v2784
      %2926 = vmatmul.mubr.bf16.gmra.mrb[0].mxu0 %v2783
      %v2927 = vpop.f32.mrb[0].mxu0
      %v2928 = vadd.f32 %v2795, %v2927
      %v2929 = vpop.f32.mrb[0].mxu0
      %v2930 = vpop.f32.mrb[0].mxu0
      %v2931 = vadd.f32 %v2795, %v2930
      %v2932 = vpop.f32.mrb[0].mxu0
      %2933 = vmatprep.mubr.bf16.mxu0 %v2786
      %2934 = vmatmul.mubr.bf16.gmra.mrb[0].mxu0 %v2785
      %v2935 = vpop.f32.mrb[0].mxu0
      %v2936 = vadd.f32 %v2795, %v2935
      %v2937 = vpop.f32.mrb[0].mxu0
      %v2938 = vpop.f32.mrb[0].mxu0
      %v2939 = vadd.f32 %v2795, %v2938
      %v2940 = vpop.f32.mrb[0].mxu0
      %2941 = vmatprep.mubr.bf16.mxu0 %v2788
      %2942 = vmatmul.mubr.bf16.gmra.mrb[0].mxu0 %v2787
      %v2943 = vpop.f32.mrb[0].mxu0
      %v2944 = vadd.f32 %v2795, %v2943
      %v2945 = vpop.f32.mrb[0].mxu0
      %v2946 = vpop.f32.mrb[0].mxu0
      %v2947 = vadd.f32 %v2795, %v2946
      %v2948 = vpop.f32.mrb[0].mxu0
      %2949 = vmatprep.mubr.bf16.mxu0 %v2790
      %2950 = vmatmul.mubr.bf16.gmra.mrb[0].mxu0 %v2789
      %v2951 = vpop.f32.mrb[0].mxu0
      %v2952 = vadd.f32 %v2795, %v2951
      %v2953 = vpop.f32.mrb[0].mxu0
      %v2954 = vpop.f32.mrb[0].mxu0
      %v2955 = vpop.f32.mrb[0].mxu0
      %2956 = vdwg.mxu0
      %v2957 = vmax.f32 %v2928, 0.0
      %v2958 = vmax.f32 %v2931, 0.0
      %v2959 = vmax.f32 %v2936, 0.0
      %v2960 = vmax.f32 %v2939, 0.0
      %v2961 = vmax.f32 %v2944, 0.0
      %v2962 = vmax.f32 %v2947, 0.0
      %v2963 = vmax.f32 %v2952, 0.0
      %v2964 = vlaneseq
      %v2965 = vshrl.u32 %v2964, 7
      %v2966 = vadd.s32 %v2965, 8
      %v2967 = vadd.s32 %v2965, 16
      %v2968 = vadd.s32 %v2965, 24
      %v2969 = vadd.s32 %v2965, 32
      %v2970 = vadd.s32 %v2965, 40
      %v2971 = vadd.s32 %v2965, 48
      %vm2972 = vcmp.lt.s32.totalorder %v2965, 49
      %vm2973 = vcmp.lt.s32.totalorder %v2966, 49
      %vm2974 = vcmp.lt.s32.totalorder %v2967, 49
      %vm2975 = vcmp.lt.s32.totalorder %v2968, 49
      %vm2976 = vcmp.lt.s32.totalorder %v2969, 49
      %vm2977 = vcmp.lt.s32.totalorder %v2970, 49
      %vm2978 = vcmp.lt.s32.totalorder %v2971, 49
      %v2979 = vsel %vm2972, 1, 0
      %v2980 = vsel %vm2973, 1, 0
      %v2981 = vsel %vm2974, 1, 0
      %v2982 = vsel %vm2975, 1, 0
      %v2983 = vsel %vm2976, 1, 0
      %v2984 = vsel %vm2977, 1, 0
      %v2985 = vsel %vm2978, 1, 0
      %vm2986 = vcmp.eq.s32.totalorder %v2979, 1
      %vm2987 = vcmp.eq.s32.totalorder %v2980, 1
      %vm2988 = vcmp.eq.s32.totalorder %v2981, 1
      %vm2989 = vcmp.eq.s32.totalorder %v2982, 1
      %vm2990 = vcmp.eq.s32.totalorder %v2983, 1
      %vm2991 = vcmp.eq.s32.totalorder %v2984, 1
      %vm2992 = vcmp.eq.s32.totalorder %v2985, 1
      %v2993 = vsel %vm2986, %v2957, 0.0
      %v2994 = vsel %vm2987, %v2958, 0.0
      %v2995 = vsel %vm2988, %v2959, 0.0
      %v2996 = vsel %vm2989, %v2960, 0.0
      %v2997 = vsel %vm2990, %v2961, 0.0
      %v2998 = vsel %vm2991, %v2962, 0.0
      %v2999 = vsel %vm2992, %v2963, 0.0
      %v3000 = vadd.f32 %v2993, %v2994
      %v3001 = vadd.f32 %v3000, %v2995
      %v3002 = vadd.f32 %v3001, %v2996
      %v3003 = vadd.f32 %v3002, %v2997
      %v3004 = vadd.f32 %v3003, %v2998
      %v3005 = vadd.f32 %v3004, %v2999
      %v3006 = vrot.slane %v3005, 4
      %v3007 = vadd.f32 %v3005, %v3006
      %v3008 = vrot.slane %v3007, 2
      %v3009 = vadd.f32 %v3007, %v3008
      %v3010 = vrot.slane %v3009, 1
      %v3011 = vadd.f32 %v3009, %v3010
      %v3012 = vmax.f32 %v342, 0.0
      %v3014 = vlaneseq
      %v3015 = vshrl.u32 %v3014, 7
      %v3016 = vsub.s32 0, %v3015
      %v3017 = vrot.slane %v3012, %v3016
      %v3018 = vlaneseq
      %v3019 = vshrl.u32 %v3018, 7
      %v3020 = vsub.s32 1, %v3019
      %v3021 = vrot.slane %v3012, %v3020
      %v3024 = vpack.c.bf16 %v3017, %v3017
      %v3025 = vpack.c.bf16 %v3021, %v3021
      %3026 = vmatprep.subr.bf16.mxu0 0
      %3027 = vmatpush1.bf16.msra.mxu0 %v2861
      %3028 = vmatprep.subr.bf16.mxu0 0
      %3029 = vmatpush1.bf16.msra.mxu0 %v2862
      %3030 = vmatprep.subr.bf16.mxu0 0
      %3031 = vmatpush1.bf16.msra.mxu0 %v2863
      %3032 = vmatprep.subr.bf16.mxu0 0
      %3033 = vmatpush1.bf16.msra.mxu0 %v2864
      %3034 = vmatprep.subr.bf16.mxu0 0
      %3035 = vmatpush1.bf16.msra.mxu0 %v2865
      %3036 = vmatprep.subr.bf16.mxu0 0
      %3037 = vmatpush1.bf16.msra.mxu0 %v2866
      %3038 = vmatprep.subr.bf16.mxu0 0
      %3039 = vmatpush1.bf16.msra.mxu0 %v2867
      %3040 = vmatprep.subr.bf16.mxu0 0
      %3041 = vmatpush1.bf16.msra.mxu0 %v2868
      %3042 = vmatprep.subr.bf16.mxu0 0
      %3043 = vmatpush1.bf16.msra.mxu0 %v2869
      %3044 = vmatprep.subr.bf16.mxu0 0
      %3045 = vmatpush1.bf16.msra.mxu0 %v2870
      %3046 = vmatprep.subr.bf16.mxu0 0
      %3047 = vmatpush1.bf16.msra.mxu0 %v2871
      %3048 = vmatprep.subr.bf16.mxu0 0
      %3049 = vmatpush1.bf16.msra.mxu0 %v2872
      %3050 = vmatprep.subr.bf16.mxu0 0
      %3051 = vmatpush1.bf16.msra.mxu0 %v2873
      %3052 = vmatprep.subr.bf16.mxu0 0
      %3053 = vmatpush1.bf16.msra.mxu0 %v2874
      %3054 = vmatprep.subr.bf16.mxu0 0
      %3055 = vmatpush1.bf16.msra.mxu0 %v2875
      %3056 = vmatprep.subr.bf16.mxu0 0
      %3057 = vmatpush1.bf16.msra.mxu0 %v2876
      %3058 = vmatprep.mubr.bf16.mxu0 %v3025
      %3059 = vmatmul.mubr.bf16.gmra.mrb[0].mxu0 %v3024
      %v3060 = vpop.f32.mrb[0].mxu0
      %v3061 = vadd.f32 %v343, %v3060
      %v3062 = vpop.f32.mrb[0].mxu0
      %v3063 = vpop.f32.mrb[0].mxu0
      %v3064 = vpop.f32.mrb[0].mxu0
      %3065 = vdwg.mxu0
      %v3066 = vmax.f32 %v3061, 0.0
      %v3067 = vmax.f32 %v343, 0.0
      %v3068 = vmul.f32 %v3066, 32.0
      %v3069 = vadd.f32 %v3011, %v3068
      %v3070 = vmul.f32 %v3067, 40.0
      %v3071 = vadd.f32 %v3069, %v3070
      %v3072 = vmul.f32 %v3071, 0.008264462
      %v3073 = vlaneseq
      %v3074 = vand.u32 %v3073, 127
      %vm3075 = vcmp.lt.s32.totalorder %v3074, 10
      %v3076 = vsel %vm3075, %v3072, -1e+30
      %vm3077 = vcmask 1040384
      %v3078 = vsel %vm3077, %v3076, -inf
      %3079 = vmax.xlane.f32.xlu0 %v3078
      %v3080 = vpop.xlane.xlu0 %3079
      %v3081 = vsub.f32 %v3076, %v3080
      %v3082 = vmul.f32 %v3081, 1.442695
      %v3083 = vpow.pop %v3082
      %v3084 = vsel %vm3075, %v3083, 0.0
      %v3085 = vsel %vm3077, %v3084, 0.0
      %3086 = vadd.xlane.f32.xlu0 %v3085
      %v3087 = vpop.xlane.xlu0 %3086
      %v3088 = vrcp.pop %v3087
      %v3089 = vmul.f32 %v3084, %v3088
      %v3090 = vlaneseq
      %v3091 = vshrl.u32 %v3090, 7
      %v3092 = vsub.s32 0, %v3091
      %v3093 = vrot.slane %v3089, %v3092
      %3094 = vst [vmem:[%s276] sm:$0xff] %v3093
      %p3095 = scmp.lt.s32.totalorder %s18, 1
      %s3096 = scalar_select %p3095, %s18, 1
      %s3097 = smul.addr %s3096, 8
      %s3098 = scalar_lea.vmem %s7, %s3097
      // Predicated region
      $region49: #{model_strided_a_forward.5} parent=47 // pred_check
        %p3099 = pneg %p188
      $region50: #{model_strided_a_forward.5} parent=47 // pred_check_branch
        %3101 = sbr.rel (%p3099) target = $region52
      $region51: #{model_strided_a_forward.5} parent=47 // pred_region
        _
      $region52: #{model_strided_a_forward.5} parent=47 // pred_fallthru
        _
    $region48: #{model_strided_a_forward.5} parent=5 // pred_fallthru
      _
    %p3102 = scmp.le.s32.totalorder 2, %s13
    // Predicated region
    $region53: #{model_strided_a_forward.5} parent=5 // pred_check
      %p3103 = pneg %p3102
    $region54: #{model_strided_a_forward.5} parent=5 // pred_check_branch
      %3105 = sbr.rel (%p3103) target = $region56
    $region55: #{model_strided_a_forward.5} parent=5 // pred_region
      %s3106 = ssub.s32 %s13, 2
      // Predicated region
      $region57: #{model_strided_a_forward.5} parent=55 // pred_check
        %p3107 = pneg %p194
      $region58: #{model_strided_a_forward.5} parent=55 // pred_check_branch
        %3109 = sbr.rel (%p3107) target = $region60
      $region59: #{model_strided_a_forward.5} parent=55 // pred_region
        %p3110 = scmp.lt.s32.totalorder %s19, 1
        %s3111 = scalar_select %p3110, %s19, 1
        %s3112 = smul.addr %s3111, 8
        %s3113 = scalar_lea.vmem %s7, %s3112
      $region60: #{model_strided_a_forward.5} parent=55 // pred_fallthru
        _
    $region56: #{model_strided_a_forward.5} parent=5 // pred_fallthru
      _
  $region6: #{model_strided_a_forward.5} parent=0 // loop_footer
    %s17 = sadd.s32 1, %s13
  $region7: #{model_strided_a_forward.5} parent=0 // loop_footer_branch
    %12 = sbr.rel target = $region3
  $region8: #{model_strided_a_forward.5} parent=0 // loop_exit
    _

</llo_original>
